<compile_context>
chip_gen: v6e
topology: v6e:2x2x1
jax: 0.10.0
libtpu: 0.0.40
codegen_flags: <defaults>
</compile_context>

<pallas_src>
import functools
import math

import jax
import jax.numpy as jnp
from jax.experimental import pallas as pl
from jax.experimental.pallas import tpu as pltpu


_TILE_ELEMS = 1024 * 1024            # ~4 MiB per f32 operand tile
_SMALL_FAST_PATH_ELEMS = 128 * 1024  # below this, fused XLA wins
_MAX_LANE_WIDTH = 1024               # lane-dense slab width (multiple of 128)


def _cdiv(a: int, b: int) -> int:
    return -(-a // b)


def _round_up(x: int, m: int) -> int:
    return _cdiv(x, m) * m


def _smooth_l1_kernel(targets_ref, pred_ref, out_ref, *, alpha: float):
    """Elementwise modified smooth-L1 on one (tile_rows, lane_width) tile."""
    t = targets_ref[...].astype(jnp.float32)
    p = pred_ref[...].astype(jnp.float32)
    diff = jnp.abs(t - p)
    quad = (0.5 * alpha) * diff * diff
    lin = diff - (0.5 / alpha)
    loss = jnp.where(diff <= (1.0 / alpha), quad, lin)
    # zero out near-zero residuals (|diff| <= 0.01)
    loss = jnp.where(diff <= 0.01, jnp.zeros_like(loss), loss)
    out_ref[...] = loss.astype(out_ref.dtype)


def _loss_jax(t, p, alpha):
    """Fused pure-JAX expression (small-input fast path & reference)."""
    diff = jnp.abs(t - p)
    loss = jnp.where(diff <= 1.0 / alpha,
                     0.5 * alpha * diff * diff,
                     diff - 0.5 / alpha)
    return jnp.where(diff <= 0.01, jnp.zeros_like(loss), loss)


def _run_slab(t2: jax.Array, p2: jax.Array, alpha: float,
              total_elems: int) -> jax.Array:
    """Run the Pallas kernel over a lane-dense 2D slab (rows, lane_width)."""
    rows, lane_width = t2.shape
    dtype = t2.dtype

    base_tile_rows = max(8, _TILE_ELEMS // lane_width)
    # Keep >= 2 grid steps where possible so ("parallel",) can use both TCs
    # on v7x; stay sublane (8) aligned.
    half_rows = _round_up(_cdiv(rows, 2), 8)
    tile_rows = max(8, min(base_tile_rows, half_rows))
    grid = (_cdiv(rows, tile_rows),)   # grid overshoot masks the partial block

    spec = pl.BlockSpec((tile_rows, lane_width), lambda i: (i, 0))
    kernel = functools.partial(_smooth_l1_kernel, alpha=float(alpha))

    itemsize = jnp.dtype(dtype).itemsize
    cost = pl.CostEstimate(
        flops=9 * total_elems,
        transcendentals=0,
        bytes_accessed=3 * total_elems * itemsize,
    )

    return pl.pallas_call(
        kernel,
        out_shape=jax.ShapeDtypeStruct((rows, lane_width), dtype),
        grid_spec=pltpu.PrefetchScalarGridSpec(
            num_scalar_prefetch=0,
            grid=grid,
            in_specs=[spec, spec],
            out_specs=spec,
        ),
        compiler_params=pltpu.CompilerParams(
            dimension_semantics=("parallel",),
            vmem_limit_bytes=48 * 1024 * 1024,
        ),
        cost_estimate=cost,
    )(t2, p2)


def modified_smooth_l1_loss(normed_targets: jax.Array,
                            pos_reg: jax.Array,
                            alpha: float) -> jax.Array:
    """Pallas TPU implementation of ModifiedSmoothL1Loss.forward.

    Accepts arrays of any (matching) shape/dtype; returns the per-element
    loss with the same shape/dtype (no reduction), matching the PyTorch
    module exactly.
    """
    assert normed_targets.shape == pos_reg.shape
    assert normed_targets.dtype == pos_reg.dtype
    orig_shape = normed_targets.shape
    dtype = normed_targets.dtype

    total = math.prod(orig_shape) if len(orig_shape) > 0 else 1
    if total == 0:
        return jnp.zeros(orig_shape, dtype)

    # Small-input fast path: launch/DMA overhead dwarfs the work.
    if total < _SMALL_FAST_PATH_ELEMS:
        return _loss_jax(normed_targets, pos_reg, alpha).astype(dtype)

    # Zero-copy lane-dense path: pick the widest lane width that divides
    # total exactly, so reshape is a free bitcast (no pad, no output slice).
    for w in range(_MAX_LANE_WIDTH, 127, -128):
        if total % w == 0:
            rows = total // w
            t2 = normed_targets.reshape(rows, w)
            p2 = pos_reg.reshape(rows, w)
            out2 = _run_slab(t2, p2, alpha, total)
            return out2.reshape(orig_shape)

    # Rare fallback (large input, total not a multiple of 128): pad the flat
    # view to a whole number of lanes, run, slice the tail off.  Zero padding
    # is correct (diff=0 -> zeroed by the |diff|<=0.01 rule) and discarded.
    lane_width = _MAX_LANE_WIDTH
    padded_total = _round_up(total, lane_width)
    pad = padded_total - total
    rows = padded_total // lane_width
    t2 = jnp.pad(normed_targets.reshape(-1), (0, pad)).reshape(rows, lane_width)
    p2 = jnp.pad(pos_reg.reshape(-1), (0, pad)).reshape(rows, lane_width)
    out2 = _run_slab(t2, p2, alpha, padded_total)
    return out2.reshape(-1)[:total].reshape(orig_shape)


if __name__ == "__main__":
    # No learnable weights in this module: only the L1_regression_alpha param.
    ALPHA = 9.0

    key = jax.random.PRNGKey(0)
    keys = jax.random.split(key, 10)

    def make_case(kt, kr, shape):
        t = jax.random.normal(kt, shape, dtype=jnp.float32)
        r = t + 0.2 * jax.random.normal(kr, shape, dtype=jnp.float32)
        return t, r

    cases = [
        make_case(keys[0], keys[1], (256, 7)),      # tiny detection-head -> fast path
        make_case(keys[2], keys[3], (1000, 12)),    # small, non-divisible -> fast path
        make_case(keys[4], keys[5], (512, 1024)),   # Pallas, w=1024, grid=2, zero-copy
        make_case(keys[6], keys[7], (777, 384)),    # Pallas, w=128, partial last block
        make_case(keys[8], keys[9], (700, 333)),    # Pallas pad fallback (total % 128 != 0)
    ]

    for t, r in cases:
        out = jax.block_until_ready(modified_smooth_l1_loss(t, r, ALPHA))
        ref = _loss_jax(t, r, ALPHA)
        assert out.shape == ref.shape and out.dtype == ref.dtype, (
            f"shape/dtype mismatch for {t.shape}")
        assert jnp.allclose(out, ref, atol=1e-6, rtol=1e-6), (
            f"value mismatch for {t.shape}")

    print("KERNEL_OK")
</pallas_src>

<mosaic_0001>
module attributes {stable_mosaic.version = 11 : i64} {
  func.func @_smooth_l1_kernel(%arg0: i32, %arg1: memref<256x1024xf32, #tpu.memory_space<vmem>>, %arg2: memref<256x1024xf32, #tpu.memory_space<vmem>>, %arg3: memref<256x1024xf32, #tpu.memory_space<vmem>>) attributes {dimension_semantics = [#tpu.dimension_semantics<parallel>], iteration_bounds = array<i64: 2>, scalar_prefetch = 0 : i64, scratch_operands = 0 : i64, tpu.core_type = #tpu.core_type<tc>, window_params = [{transform_indices = @transform_0, window_bounds = array<i64: 256, 1024>}, {transform_indices = @transform_1, window_bounds = array<i64: 256, 1024>}, {transform_indices = @transform_2, window_bounds = array<i64: 256, 1024>}]} {
    %c0 = arith.constant 0 : index
    %c0_0 = arith.constant 0 : index
    %0 = vector.load %arg1[%c0, %c0_0] : memref<256x1024xf32, #tpu.memory_space<vmem>>, vector<256x1024xf32>
    %c0_1 = arith.constant 0 : index
    %c0_2 = arith.constant 0 : index
    %1 = vector.load %arg2[%c0_1, %c0_2] : memref<256x1024xf32, #tpu.memory_space<vmem>>, vector<256x1024xf32>
    %2 = arith.subf %0, %1 : vector<256x1024xf32>
    %3 = math.absf %2 : vector<256x1024xf32>
    %cst = arith.constant 4.500000e+00 : f32
    %4 = vector.broadcast %cst : f32 to vector<256x1024xf32>
    %5 = arith.mulf %4, %3 : vector<256x1024xf32>
    %6 = arith.mulf %5, %3 : vector<256x1024xf32>
    %cst_3 = arith.constant 0.055555556 : f32
    %7 = vector.broadcast %cst_3 : f32 to vector<256x1024xf32>
    %8 = arith.subf %3, %7 : vector<256x1024xf32>
    %cst_4 = arith.constant 0.111111112 : f32
    %9 = vector.broadcast %cst_4 : f32 to vector<256x1024xf32>
    %10 = arith.cmpf ole, %3, %9 : vector<256x1024xf32>
    %11 = arith.select %10, %6, %8 : vector<256x1024xi1>, vector<256x1024xf32>
    %cst_5 = arith.constant 0.00999999977 : f32
    %12 = vector.broadcast %cst_5 : f32 to vector<256x1024xf32>
    %13 = arith.cmpf ole, %3, %12 : vector<256x1024xf32>
    %cst_6 = arith.constant 0.000000e+00 : f32
    %14 = vector.broadcast %cst_6 : f32 to vector<256x1024xf32>
    %15 = arith.select %13, %14, %11 : vector<256x1024xi1>, vector<256x1024xf32>
    %c0_7 = arith.constant 0 : index
    %c0_8 = arith.constant 0 : index
    %16 = vector.load %arg3[%c0_7, %c0_8] : memref<256x1024xf32, #tpu.memory_space<vmem>>, vector<256x1024xf32>
    tpu.vector_store %arg3[%c0_7, %c0_8], %15 {strides = array<i32>} : memref<256x1024xf32, #tpu.memory_space<vmem>>, vector<256x1024xf32>,
    return
  }
  func.func @transform_0(%arg0: i32) -> (i32, i32) {
    %c0_i32 = arith.constant 0 : i32
    %c0_i32_0 = arith.constant 0 : i32
    return %arg0, %c0_i32 : i32, i32
  }
  func.func @transform_1(%arg0: i32) -> (i32, i32) {
    %c0_i32 = arith.constant 0 : i32
    %c0_i32_0 = arith.constant 0 : i32
    return %arg0, %c0_i32 : i32, i32
  }
  func.func @transform_2(%arg0: i32) -> (i32, i32) {
    %c0_i32 = arith.constant 0 : i32
    %c0_i32_0 = arith.constant 0 : i32
    return %arg0, %c0_i32 : i32, i32
  }
}

</mosaic_0001>

<llo_original>
// kernel: tpu_custom_call.1
$region0: #{tpu_custom_call.1}
  #allocation0 [shape = 'u32[]', space=smem, size = 0x4, offset = 0x4, fixed_abs, tag = 'smem constant byte address 0x4 - core index']
  #allocation1 [shape = 'u32[144,128]{1,0:T(1,128)}', space=vmem, size = 0x12000, scoped, tag = 'internal scratch']
  %s0 = inlined_call_operand.hbm [shape: f32[512,1024], index: 0, kind: input, shape index: {}]
  %s1 = inlined_call_operand.hbm [shape: f32[512,1024], index: 1, kind: input, shape index: {}]
  %s2 = inlined_call_operand.hbm [shape: f32[512,1024], index: 2, kind: output, shape index: {}]
  %s3 = sld [smem:[#allocation0]]
  $region49: #{tpu_custom_call.1} parent=0
    _
  %s5 = ssub.s32 1, %s3
  %s6 = scalar_select 0, %s5, %s3
  $region1: #{tpu_custom_call.1} parent=0
    #allocation2 [shape = 'u8[2097152]{0}', space=vmem, size = 0x200000, scoped, tag = 'input window, operand 0']
    #allocation3 [shape = 's32[2]{0}', space=sflag, size = 0x8, scoped, tag = 'scoped memory for tpu_custom_call.1']
    #allocation4 [shape = 's32[2]{0}', space=sflag, size = 0x8, scoped, tag = 'scoped memory for tpu_custom_call.1']
    #allocation5 [shape = 'u8[2097152]{0}', space=vmem, size = 0x200000, scoped, tag = 'input window, operand 1']
    #allocation6 [shape = 's32[2]{0}', space=sflag, size = 0x8, scoped, tag = 'scoped memory for tpu_custom_call.1']
    #allocation7 [shape = 'u8[2097152]{0}', space=vmem, size = 0x200000, scoped, tag = 'output window, operand 0']
    %7 = vsyncpa [#allocation3], 0
    %s8 = scalar_lea.sflag [#allocation3], 1
    %9 = vsyncpa %s8, 0
    %10 = vsyncpa [#allocation6], 0
    %s11 = scalar_lea.sflag [#allocation6], 1
    %12 = vsyncpa %s11, 0
    %13 = vsyncpa [#allocation4], 0
    %s14 = scalar_lea.sflag [#allocation4], 1
    %15 = vsyncpa %s14, 0
    loop: start=0, step=1, limit=4
    $region2: #{tpu_custom_call.1} parent=1 // loop_pre_header
      _
    $region3: #{tpu_custom_call.1} parent=1 // loop_header
      %s17 = sphi 0, %s21
      %p18 = scmp.ge.s32.totalorder %s17, 4
      %s27 = sphi 0, %s29
      %s30 = sphi 0, %s27
      %s31 = sphi 0, %s30
      %s47 = sphi 0, %s31
      %s53 = sphi 0, %s55
      %s56 = sphi 0, %s53
      %s57 = sphi 0, %s56
      %s73 = sphi 0, %s57
      %s79 = sphi 0, %s81
      %s82 = sphi 0, %s79
      %s83 = sphi 0, %s82
      %s99 = sphi 0, %s83
    $region4: #{tpu_custom_call.1} parent=1 // loop_header_branch
      %20 = sbr.rel (%p18) target = $region8
    $region5: #{tpu_custom_call.1} parent=1 // loop_body
      %s22 = ssub.s32 %s17, 1
      %s23 = ssub.s32 %s17, 2
      %s24 = sadd.s32 %s17, 1
      %s25 = ssub.s32 %s17, %s24
      %p26 = scmp.eq.s32.totalorder %s25, 0
      %s28 = sadd.s32 %s27, 1
      %s29 = scalar_select %p26, %s27, %s28
      %p32 = pneg %p26
      %p33 = scmp.eq.s32.totalorder %s17, 1
      %p34 = por %p32, %p33
      %p35 = scmp.ne.s32.totalorder %s27, %s30
      %p36 = scmp.eq.s32.totalorder %s17, 0
      %p37 = por %p35, %p36
      %p38 = scmp.ne.s32.totalorder %s27, %s30
      %p39 = scmp.eq.s32.totalorder %s22, 1
      %p40 = por %p38, %p39
      %p41 = scmp.ne.s32.totalorder %s30, %s31
      %p42 = scmp.eq.s32.totalorder %s22, 0
      %p43 = por %p41, %p42
      %p44 = scmp.ne.s32.totalorder %s30, %s31
      %p45 = scmp.eq.s32.totalorder %s23, 1
      %p46 = por %p44, %p45
      %p48 = scmp.ne.s32.totalorder %s31, %s47
      %p49 = scmp.eq.s32.totalorder %s23, 0
      %p50 = por %p48, %p49
      %s51 = ssub.s32 %s17, %s24
      %p52 = scmp.eq.s32.totalorder %s51, 0
      %s54 = sadd.s32 %s53, 1
      %s55 = scalar_select %p52, %s53, %s54
      %p58 = pneg %p52
      %p59 = scmp.eq.s32.totalorder %s17, 1
      %p60 = por %p58, %p59
      %p61 = scmp.ne.s32.totalorder %s53, %s56
      %p62 = scmp.eq.s32.totalorder %s17, 0
      %p63 = por %p61, %p62
      %p64 = scmp.ne.s32.totalorder %s53, %s56
      %p65 = scmp.eq.s32.totalorder %s22, 1
      %p66 = por %p64, %p65
      %p67 = scmp.ne.s32.totalorder %s56, %s57
      %p68 = scmp.eq.s32.totalorder %s22, 0
      %p69 = por %p67, %p68
      %p70 = scmp.ne.s32.totalorder %s56, %s57
      %p71 = scmp.eq.s32.totalorder %s23, 1
      %p72 = por %p70, %p71
      %p74 = scmp.ne.s32.totalorder %s57, %s73
      %p75 = scmp.eq.s32.totalorder %s23, 0
      %p76 = por %p74, %p75
      %s77 = ssub.s32 %s17, %s24
      %p78 = scmp.eq.s32.totalorder %s77, 0
      %s80 = sadd.s32 %s79, 1
      %s81 = scalar_select %p78, %s79, %s80
      %p84 = pneg %p78
      %p85 = scmp.eq.s32.totalorder %s17, 1
      %p86 = por %p84, %p85
      %p87 = scmp.ne.s32.totalorder %s79, %s82
      %p88 = scmp.eq.s32.totalorder %s17, 0
      %p89 = por %p87, %p88
      %p90 = scmp.ne.s32.totalorder %s79, %s82
      %p91 = scmp.eq.s32.totalorder %s22, 1
      %p92 = por %p90, %p91
      %p93 = scmp.ne.s32.totalorder %s82, %s83
      %p94 = scmp.eq.s32.totalorder %s22, 0
      %p95 = por %p93, %p94
      %p96 = scmp.ne.s32.totalorder %s82, %s83
      %p97 = scmp.eq.s32.totalorder %s23, 1
      %p98 = por %p96, %p97
      %p100 = scmp.ne.s32.totalorder %s83, %s99
      %p101 = scmp.eq.s32.totalorder %s23, 0
      %p102 = por %p100, %p101
      %p103 = scmp.le.s32.totalorder 1, %s17
      %p104 = scmp.lt.s32.totalorder %s17, 3
      %p105 = pnand %p103, %p104
      %p106 = pneg %p105
      // Predicated region
      $region9: #{tpu_custom_call.1} parent=5 // pred_check
        _
      $region10: #{tpu_custom_call.1} parent=5 // pred_check_branch
        %108 = sbr.rel (%p105) target = $region12
      $region11: #{tpu_custom_call.1} parent=5 // pred_region
        %s109 = ssub.s32 %s17, 1
      $region12: #{tpu_custom_call.1} parent=5 // pred_fallthru
        _
      %p110 = scmp.lt.s32.totalorder %s17, 2
      // Predicated region
      $region13: #{tpu_custom_call.1} parent=5 // pred_check
        %p111 = pneg %p110
      $region14: #{tpu_custom_call.1} parent=5 // pred_check_branch
        %113 = sbr.rel (%p111) target = $region16
      $region15: #{tpu_custom_call.1} parent=5 // pred_region
        // Predicated region
        $region17: #{tpu_custom_call.1} parent=15 // pred_check
          %p114 = pneg %p37
        $region18: #{tpu_custom_call.1} parent=15 // pred_check_branch
          %116 = sbr.rel (%p114) target = $region20
        $region19: #{tpu_custom_call.1} parent=15 // pred_region
          %s117 = sand.u32 %s27, 1
          %s118 = scalar_lea.sflag [#allocation3], %s117
          %s119 = sand.u32 %s27, 1
          %s120 = smul.addr %s119, 2048
          %s121 = scalar_lea.vmem [#allocation2], %s120
          %s122 = smul.u32 32, %s17
          %s124 = ssub.s32 32768, 32768
          %125 = vsyncadd %s118, %s124
          %s126 = smul.addr %s122, 8
          %s127 = smul.addr %s126, 128
          %s128 = scalar_lea.hbm %s0, %s127
          %s129 = sshll.u32 %s121, 4
          %s130 = int_to_ptr.vmem [resolvable:$true] %s129
          %135 = dma.hbm_to_vmem [thread:$0]  %s128, 32768, %s130, %s118, 1024, 1024, 64
        $region20: #{tpu_custom_call.1} parent=15 // pred_fallthru
          _
        // Predicated region
        $region21: #{tpu_custom_call.1} parent=15 // pred_check
          %p136 = pneg %p63
        $region22: #{tpu_custom_call.1} parent=15 // pred_check_branch
          %138 = sbr.rel (%p136) target = $region24
        $region23: #{tpu_custom_call.1} parent=15 // pred_region
          %s139 = sand.u32 %s53, 1
          %s140 = scalar_lea.sflag [#allocation6], %s139
          %s141 = sand.u32 %s53, 1
          %s142 = smul.addr %s141, 2048
          %s143 = scalar_lea.vmem [#allocation5], %s142
          %s144 = smul.u32 32, %s17
          %s146 = ssub.s32 32768, 32768
          %147 = vsyncadd %s140, %s146
          %s148 = smul.addr %s144, 8
          %s149 = smul.addr %s148, 128
          %s150 = scalar_lea.hbm %s1, %s149
          %s151 = sshll.u32 %s143, 4
          %s152 = int_to_ptr.vmem [resolvable:$true] %s151
          %157 = dma.hbm_to_vmem [thread:$0]  %s150, 32768, %s152, %s140, 1024, 1024, 64
        $region24: #{tpu_custom_call.1} parent=15 // pred_fallthru
          _
      $region16: #{tpu_custom_call.1} parent=5 // pred_fallthru
        _
      %p158 = scmp.le.s32.totalorder 1, %s17
      %p159 = scmp.lt.s32.totalorder %s17, 3
      %p160 = pnand %p158, %p159
      %p161 = pneg %p160
      // Predicated region
      $region25: #{tpu_custom_call.1} parent=5 // pred_check
        _
      $region26: #{tpu_custom_call.1} parent=5 // pred_check_branch
        %163 = sbr.rel (%p160) target = $region28
      $region27: #{tpu_custom_call.1} parent=5 // pred_region
        %s164 = ssub.s32 %s17, 1
        %s165 = sand.u32 %s30, 1
        %s166 = scalar_lea.sflag [#allocation3], %s165
        %s167 = sand.u32 %s30, 1
        %s168 = smul.addr %s167, 2048
        %s169 = scalar_lea.vmem [#allocation2], %s168
        // Predicated region
        $region29: #{tpu_custom_call.1} parent=27 // pred_check
          %p170 = pneg %p43
        $region30: #{tpu_custom_call.1} parent=27 // pred_check_branch
          %172 = sbr.rel (%p170) target = $region32
        $region31: #{tpu_custom_call.1} parent=27 // pred_region
          %173 = dma.done %s166, 32768
        $region32: #{tpu_custom_call.1} parent=27 // pred_fallthru
          _
        %s174 = sand.u32 %s56, 1
        %s175 = scalar_lea.sflag [#allocation6], %s174
        %s176 = sand.u32 %s56, 1
        %s177 = smul.addr %s176, 2048
        %s178 = scalar_lea.vmem [#allocation5], %s177
        // Predicated region
        $region33: #{tpu_custom_call.1} parent=27 // pred_check
          %p179 = pneg %p69
        $region34: #{tpu_custom_call.1} parent=27 // pred_check_branch
          %181 = sbr.rel (%p179) target = $region36
        $region35: #{tpu_custom_call.1} parent=27 // pred_region
          %182 = dma.done %s175, 32768
        $region36: #{tpu_custom_call.1} parent=27 // pred_fallthru
          _
        %s183 = sand.u32 %s30, 1
        %s184 = scalar_lea.sflag [#allocation3], %s183
        %s185 = sand.u32 %s30, 1
        %s186 = smul.addr %s185, 2048
        %s187 = scalar_lea.vmem [#allocation2], %s186
        %p188 = pneg %p43
        %p189 = pneg %p40
        %s190 = sand.u32 %s56, 1
        %s191 = scalar_lea.sflag [#allocation6], %s190
        %s192 = sand.u32 %s56, 1
        %s193 = smul.addr %s192, 2048
        %s194 = scalar_lea.vmem [#allocation5], %s193
        %p195 = pneg %p69
        %p196 = pneg %p66
        %p197 = pneg %p95
        %p198 = pneg %p92
        %s199 = sand.u32 %s82, 1
        %s200 = scalar_lea.sflag [#allocation4], %s199
        %s201 = sand.u32 %s82, 1
        %s202 = smul.addr %s201, 2048
        %s203 = scalar_lea.vmem [#allocation7], %s202
        %s204 = smul.u32 32, %s22
        %s205 = smul.u32 32, %s22
        %s206 = smul.u32 32, %s22
        %v207 = vld [vmem:[%s169] sm:$0xff]
        %v208 = vld [vmem:[%s169 + $0x8] sm:$0xff]
        %v209 = vld [vmem:[%s169 + $0x10] sm:$0xff]
        %v210 = vld [vmem:[%s169 + $0x18] sm:$0xff]
        %v211 = vld [vmem:[%s169 + $0x20] sm:$0xff]
        %v212 = vld [vmem:[%s169 + $0x28] sm:$0xff]
        %v213 = vld [vmem:[%s169 + $0x30] sm:$0xff]
        %v214 = vld [vmem:[%s169 + $0x38] sm:$0xff]
        %v215 = vld [vmem:[%s169 + $0x40] sm:$0xff]
        %v216 = vld [vmem:[%s169 + $0x48] sm:$0xff]
        %v217 = vld [vmem:[%s169 + $0x50] sm:$0xff]
        %v218 = vld [vmem:[%s169 + $0x58] sm:$0xff]
        %v219 = vld [vmem:[%s169 + $0x60] sm:$0xff]
        %v220 = vld [vmem:[%s169 + $0x68] sm:$0xff]
        %v221 = vld [vmem:[%s169 + $0x70] sm:$0xff]
        %v222 = vld [vmem:[%s169 + $0x78] sm:$0xff]
        %v223 = vld [vmem:[%s169 + $0x80] sm:$0xff]
        %v224 = vld [vmem:[%s169 + $0x88] sm:$0xff]
        %v225 = vld [vmem:[%s169 + $0x90] sm:$0xff]
        %v226 = vld [vmem:[%s169 + $0x98] sm:$0xff]
        %v227 = vld [vmem:[%s169 + $0xa0] sm:$0xff]
        %v228 = vld [vmem:[%s169 + $0xa8] sm:$0xff]
        %v229 = vld [vmem:[%s169 + $0xb0] sm:$0xff]
        %v230 = vld [vmem:[%s169 + $0xb8] sm:$0xff]
        %v231 = vld [vmem:[%s169 + $0xc0] sm:$0xff]
        %v232 = vld [vmem:[%s169 + $0xc8] sm:$0xff]
        %v233 = vld [vmem:[%s169 + $0xd0] sm:$0xff]
        %v234 = vld [vmem:[%s169 + $0xd8] sm:$0xff]
        %v235 = vld [vmem:[%s169 + $0xe0] sm:$0xff]
        %v236 = vld [vmem:[%s169 + $0xe8] sm:$0xff]
        %v237 = vld [vmem:[%s169 + $0xf0] sm:$0xff]
        %v238 = vld [vmem:[%s169 + $0xf8] sm:$0xff]
        %v239 = vld [vmem:[%s169 + $0x100] sm:$0xff]
        %v240 = vld [vmem:[%s169 + $0x108] sm:$0xff]
        %v241 = vld [vmem:[%s169 + $0x110] sm:$0xff]
        %v242 = vld [vmem:[%s169 + $0x118] sm:$0xff]
        %v243 = vld [vmem:[%s169 + $0x120] sm:$0xff]
        %v244 = vld [vmem:[%s169 + $0x128] sm:$0xff]
        %v245 = vld [vmem:[%s169 + $0x130] sm:$0xff]
        %v246 = vld [vmem:[%s169 + $0x138] sm:$0xff]
        %v247 = vld [vmem:[%s169 + $0x140] sm:$0xff]
        %v248 = vld [vmem:[%s169 + $0x148] sm:$0xff]
        %v249 = vld [vmem:[%s169 + $0x150] sm:$0xff]
        %v250 = vld [vmem:[%s169 + $0x158] sm:$0xff]
        %v251 = vld [vmem:[%s169 + $0x160] sm:$0xff]
        %v252 = vld [vmem:[%s169 + $0x168] sm:$0xff]
        %v253 = vld [vmem:[%s169 + $0x170] sm:$0xff]
        %v254 = vld [vmem:[%s169 + $0x178] sm:$0xff]
        %v255 = vld [vmem:[%s169 + $0x180] sm:$0xff]
        %v256 = vld [vmem:[%s169 + $0x188] sm:$0xff]
        %v257 = vld [vmem:[%s169 + $0x190] sm:$0xff]
        %v258 = vld [vmem:[%s169 + $0x198] sm:$0xff]
        %v259 = vld [vmem:[%s169 + $0x1a0] sm:$0xff]
        %v260 = vld [vmem:[%s169 + $0x1a8] sm:$0xff]
        %v261 = vld [vmem:[%s169 + $0x1b0] sm:$0xff]
        %v262 = vld [vmem:[%s169 + $0x1b8] sm:$0xff]
        %v263 = vld [vmem:[%s169 + $0x1c0] sm:$0xff]
        %v264 = vld [vmem:[%s169 + $0x1c8] sm:$0xff]
        %v265 = vld [vmem:[%s169 + $0x1d0] sm:$0xff]
        %v266 = vld [vmem:[%s169 + $0x1d8] sm:$0xff]
        %v267 = vld [vmem:[%s169 + $0x1e0] sm:$0xff]
        %v268 = vld [vmem:[%s169 + $0x1e8] sm:$0xff]
        %v269 = vld [vmem:[%s169 + $0x1f0] sm:$0xff]
        %v270 = vld [vmem:[%s169 + $0x1f8] sm:$0xff]
        %v271 = vld [vmem:[%s169 + $0x200] sm:$0xff]
        %v272 = vld [vmem:[%s169 + $0x208] sm:$0xff]
        %v273 = vld [vmem:[%s169 + $0x210] sm:$0xff]
        %v274 = vld [vmem:[%s169 + $0x218] sm:$0xff]
        %v275 = vld [vmem:[%s169 + $0x220] sm:$0xff]
        %v276 = vld [vmem:[%s169 + $0x228] sm:$0xff]
        %v277 = vld [vmem:[%s169 + $0x230] sm:$0xff]
        %v278 = vld [vmem:[%s169 + $0x238] sm:$0xff]
        %v279 = vld [vmem:[%s169 + $0x240] sm:$0xff]
        %v280 = vld [vmem:[%s169 + $0x248] sm:$0xff]
        %v281 = vld [vmem:[%s169 + $0x250] sm:$0xff]
        %v282 = vld [vmem:[%s169 + $0x258] sm:$0xff]
        %v283 = vld [vmem:[%s169 + $0x260] sm:$0xff]
        %v284 = vld [vmem:[%s169 + $0x268] sm:$0xff]
        %v285 = vld [vmem:[%s169 + $0x270] sm:$0xff]
        %v286 = vld [vmem:[%s169 + $0x278] sm:$0xff]
        %v287 = vld [vmem:[%s169 + $0x280] sm:$0xff]
        %v288 = vld [vmem:[%s169 + $0x288] sm:$0xff]
        %v289 = vld [vmem:[%s169 + $0x290] sm:$0xff]
        %v290 = vld [vmem:[%s169 + $0x298] sm:$0xff]
        %v291 = vld [vmem:[%s169 + $0x2a0] sm:$0xff]
        %v292 = vld [vmem:[%s169 + $0x2a8] sm:$0xff]
        %v293 = vld [vmem:[%s169 + $0x2b0] sm:$0xff]
        %v294 = vld [vmem:[%s169 + $0x2b8] sm:$0xff]
        %v295 = vld [vmem:[%s169 + $0x2c0] sm:$0xff]
        %v296 = vld [vmem:[%s169 + $0x2c8] sm:$0xff]
        %v297 = vld [vmem:[%s169 + $0x2d0] sm:$0xff]
        %v298 = vld [vmem:[%s169 + $0x2d8] sm:$0xff]
        %v299 = vld [vmem:[%s169 + $0x2e0] sm:$0xff]
        %v300 = vld [vmem:[%s169 + $0x2e8] sm:$0xff]
        %v301 = vld [vmem:[%s169 + $0x2f0] sm:$0xff]
        %v302 = vld [vmem:[%s169 + $0x2f8] sm:$0xff]
        %v303 = vld [vmem:[%s169 + $0x300] sm:$0xff]
        %v304 = vld [vmem:[%s169 + $0x308] sm:$0xff]
        %v305 = vld [vmem:[%s169 + $0x310] sm:$0xff]
        %v306 = vld [vmem:[%s169 + $0x318] sm:$0xff]
        %v307 = vld [vmem:[%s169 + $0x320] sm:$0xff]
        %v308 = vld [vmem:[%s169 + $0x328] sm:$0xff]
        %v309 = vld [vmem:[%s169 + $0x330] sm:$0xff]
        %v310 = vld [vmem:[%s169 + $0x338] sm:$0xff]
        %v311 = vld [vmem:[%s169 + $0x340] sm:$0xff]
        %v312 = vld [vmem:[%s169 + $0x348] sm:$0xff]
        %v313 = vld [vmem:[%s169 + $0x350] sm:$0xff]
        %v314 = vld [vmem:[%s169 + $0x358] sm:$0xff]
        %v315 = vld [vmem:[%s169 + $0x360] sm:$0xff]
        %v316 = vld [vmem:[%s169 + $0x368] sm:$0xff]
        %v317 = vld [vmem:[%s169 + $0x370] sm:$0xff]
        %v318 = vld [vmem:[%s169 + $0x378] sm:$0xff]
        %v319 = vld [vmem:[%s169 + $0x380] sm:$0xff]
        %v320 = vld [vmem:[%s169 + $0x388] sm:$0xff]
        %v321 = vld [vmem:[%s169 + $0x390] sm:$0xff]
        %v322 = vld [vmem:[%s169 + $0x398] sm:$0xff]
        %v323 = vld [vmem:[%s169 + $0x3a0] sm:$0xff]
        %v324 = vld [vmem:[%s169 + $0x3a8] sm:$0xff]
        %v325 = vld [vmem:[%s169 + $0x3b0] sm:$0xff]
        %v326 = vld [vmem:[%s169 + $0x3b8] sm:$0xff]
        %v327 = vld [vmem:[%s169 + $0x3c0] sm:$0xff]
        %v328 = vld [vmem:[%s169 + $0x3c8] sm:$0xff]
        %v329 = vld [vmem:[%s169 + $0x3d0] sm:$0xff]
        %v330 = vld [vmem:[%s169 + $0x3d8] sm:$0xff]
        %v331 = vld [vmem:[%s169 + $0x3e0] sm:$0xff]
        %v332 = vld [vmem:[%s169 + $0x3e8] sm:$0xff]
        %v333 = vld [vmem:[%s169 + $0x3f0] sm:$0xff]
        %v334 = vld [vmem:[%s169 + $0x3f8] sm:$0xff]
        %v335 = vld [vmem:[%s169 + $0x400] sm:$0xff]
        %v336 = vld [vmem:[%s169 + $0x408] sm:$0xff]
        %v337 = vld [vmem:[%s169 + $0x410] sm:$0xff]
        %v338 = vld [vmem:[%s169 + $0x418] sm:$0xff]
        %v339 = vld [vmem:[%s169 + $0x420] sm:$0xff]
        %v340 = vld [vmem:[%s169 + $0x428] sm:$0xff]
        %v341 = vld [vmem:[%s169 + $0x430] sm:$0xff]
        %v342 = vld [vmem:[%s169 + $0x438] sm:$0xff]
        %v343 = vld [vmem:[%s169 + $0x440] sm:$0xff]
        %v344 = vld [vmem:[%s169 + $0x448] sm:$0xff]
        %v345 = vld [vmem:[%s169 + $0x450] sm:$0xff]
        %v346 = vld [vmem:[%s169 + $0x458] sm:$0xff]
        %v347 = vld [vmem:[%s169 + $0x460] sm:$0xff]
        %v348 = vld [vmem:[%s169 + $0x468] sm:$0xff]
        %v349 = vld [vmem:[%s169 + $0x470] sm:$0xff]
        %v350 = vld [vmem:[%s169 + $0x478] sm:$0xff]
        %v351 = vld [vmem:[%s169 + $0x480] sm:$0xff]
        %v352 = vld [vmem:[%s169 + $0x488] sm:$0xff]
        %v353 = vld [vmem:[%s169 + $0x490] sm:$0xff]
        %v354 = vld [vmem:[%s169 + $0x498] sm:$0xff]
        %v355 = vld [vmem:[%s169 + $0x4a0] sm:$0xff]
        %v356 = vld [vmem:[%s169 + $0x4a8] sm:$0xff]
        %v357 = vld [vmem:[%s169 + $0x4b0] sm:$0xff]
        %v358 = vld [vmem:[%s169 + $0x4b8] sm:$0xff]
        %v359 = vld [vmem:[%s169 + $0x4c0] sm:$0xff]
        %v360 = vld [vmem:[%s169 + $0x4c8] sm:$0xff]
        %v361 = vld [vmem:[%s169 + $0x4d0] sm:$0xff]
        %v362 = vld [vmem:[%s169 + $0x4d8] sm:$0xff]
        %v363 = vld [vmem:[%s169 + $0x4e0] sm:$0xff]
        %v364 = vld [vmem:[%s169 + $0x4e8] sm:$0xff]
        %v365 = vld [vmem:[%s169 + $0x4f0] sm:$0xff]
        %v366 = vld [vmem:[%s169 + $0x4f8] sm:$0xff]
        %v367 = vld [vmem:[%s169 + $0x500] sm:$0xff]
        %v368 = vld [vmem:[%s169 + $0x508] sm:$0xff]
        %v369 = vld [vmem:[%s169 + $0x510] sm:$0xff]
        %v370 = vld [vmem:[%s169 + $0x518] sm:$0xff]
        %v371 = vld [vmem:[%s169 + $0x520] sm:$0xff]
        %v372 = vld [vmem:[%s169 + $0x528] sm:$0xff]
        %v373 = vld [vmem:[%s169 + $0x530] sm:$0xff]
        %v374 = vld [vmem:[%s169 + $0x538] sm:$0xff]
        %v375 = vld [vmem:[%s169 + $0x540] sm:$0xff]
        %v376 = vld [vmem:[%s169 + $0x548] sm:$0xff]
        %v377 = vld [vmem:[%s169 + $0x550] sm:$0xff]
        %v378 = vld [vmem:[%s169 + $0x558] sm:$0xff]
        %v379 = vld [vmem:[%s169 + $0x560] sm:$0xff]
        %v380 = vld [vmem:[%s169 + $0x568] sm:$0xff]
        %v381 = vld [vmem:[%s169 + $0x570] sm:$0xff]
        %v382 = vld [vmem:[%s169 + $0x578] sm:$0xff]
        %v383 = vld [vmem:[%s169 + $0x580] sm:$0xff]
        %v384 = vld [vmem:[%s169 + $0x588] sm:$0xff]
        %v385 = vld [vmem:[%s169 + $0x590] sm:$0xff]
        %v386 = vld [vmem:[%s169 + $0x598] sm:$0xff]
        %v387 = vld [vmem:[%s169 + $0x5a0] sm:$0xff]
        %v388 = vld [vmem:[%s169 + $0x5a8] sm:$0xff]
        %v389 = vld [vmem:[%s169 + $0x5b0] sm:$0xff]
        %v390 = vld [vmem:[%s169 + $0x5b8] sm:$0xff]
        %v391 = vld [vmem:[%s169 + $0x5c0] sm:$0xff]
        %v392 = vld [vmem:[%s169 + $0x5c8] sm:$0xff]
        %v393 = vld [vmem:[%s169 + $0x5d0] sm:$0xff]
        %v394 = vld [vmem:[%s169 + $0x5d8] sm:$0xff]
        %v395 = vld [vmem:[%s169 + $0x5e0] sm:$0xff]
        %v396 = vld [vmem:[%s169 + $0x5e8] sm:$0xff]
        %v397 = vld [vmem:[%s169 + $0x5f0] sm:$0xff]
        %v398 = vld [vmem:[%s169 + $0x5f8] sm:$0xff]
        %v399 = vld [vmem:[%s169 + $0x600] sm:$0xff]
        %v400 = vld [vmem:[%s169 + $0x608] sm:$0xff]
        %v401 = vld [vmem:[%s169 + $0x610] sm:$0xff]
        %v402 = vld [vmem:[%s169 + $0x618] sm:$0xff]
        %v403 = vld [vmem:[%s169 + $0x620] sm:$0xff]
        %v404 = vld [vmem:[%s169 + $0x628] sm:$0xff]
        %v405 = vld [vmem:[%s169 + $0x630] sm:$0xff]
        %v406 = vld [vmem:[%s169 + $0x638] sm:$0xff]
        %v407 = vld [vmem:[%s169 + $0x640] sm:$0xff]
        %v408 = vld [vmem:[%s169 + $0x648] sm:$0xff]
        %v409 = vld [vmem:[%s169 + $0x650] sm:$0xff]
        %v410 = vld [vmem:[%s169 + $0x658] sm:$0xff]
        %v411 = vld [vmem:[%s169 + $0x660] sm:$0xff]
        %v412 = vld [vmem:[%s169 + $0x668] sm:$0xff]
        %v413 = vld [vmem:[%s169 + $0x670] sm:$0xff]
        %v414 = vld [vmem:[%s169 + $0x678] sm:$0xff]
        %v415 = vld [vmem:[%s169 + $0x680] sm:$0xff]
        %v416 = vld [vmem:[%s169 + $0x688] sm:$0xff]
        %v417 = vld [vmem:[%s169 + $0x690] sm:$0xff]
        %v418 = vld [vmem:[%s169 + $0x698] sm:$0xff]
        %v419 = vld [vmem:[%s169 + $0x6a0] sm:$0xff]
        %v420 = vld [vmem:[%s169 + $0x6a8] sm:$0xff]
        %v421 = vld [vmem:[%s169 + $0x6b0] sm:$0xff]
        %v422 = vld [vmem:[%s169 + $0x6b8] sm:$0xff]
        %v423 = vld [vmem:[%s169 + $0x6c0] sm:$0xff]
        %v424 = vld [vmem:[%s169 + $0x6c8] sm:$0xff]
        %v425 = vld [vmem:[%s169 + $0x6d0] sm:$0xff]
        %v426 = vld [vmem:[%s169 + $0x6d8] sm:$0xff]
        %v427 = vld [vmem:[%s169 + $0x6e0] sm:$0xff]
        %v428 = vld [vmem:[%s169 + $0x6e8] sm:$0xff]
        %v429 = vld [vmem:[%s169 + $0x6f0] sm:$0xff]
        %v430 = vld [vmem:[%s169 + $0x6f8] sm:$0xff]
        %v431 = vld [vmem:[%s169 + $0x700] sm:$0xff]
        %v432 = vld [vmem:[%s169 + $0x708] sm:$0xff]
        %v433 = vld [vmem:[%s169 + $0x710] sm:$0xff]
        %v434 = vld [vmem:[%s169 + $0x718] sm:$0xff]
        %v435 = vld [vmem:[%s169 + $0x720] sm:$0xff]
        %v436 = vld [vmem:[%s169 + $0x728] sm:$0xff]
        %v437 = vld [vmem:[%s169 + $0x730] sm:$0xff]
        %v438 = vld [vmem:[%s169 + $0x738] sm:$0xff]
        %v439 = vld [vmem:[%s169 + $0x740] sm:$0xff]
        %v440 = vld [vmem:[%s169 + $0x748] sm:$0xff]
        %v441 = vld [vmem:[%s169 + $0x750] sm:$0xff]
        %v442 = vld [vmem:[%s169 + $0x758] sm:$0xff]
        %v443 = vld [vmem:[%s169 + $0x760] sm:$0xff]
        %v444 = vld [vmem:[%s169 + $0x768] sm:$0xff]
        %v445 = vld [vmem:[%s169 + $0x770] sm:$0xff]
        %v446 = vld [vmem:[%s169 + $0x778] sm:$0xff]
        %v447 = vld [vmem:[%s169 + $0x780] sm:$0xff]
        %v448 = vld [vmem:[%s169 + $0x788] sm:$0xff]
        %v449 = vld [vmem:[%s169 + $0x790] sm:$0xff]
        %v450 = vld [vmem:[%s169 + $0x798] sm:$0xff]
        %v451 = vld [vmem:[%s169 + $0x7a0] sm:$0xff]
        %v452 = vld [vmem:[%s169 + $0x7a8] sm:$0xff]
        %v453 = vld [vmem:[%s169 + $0x7b0] sm:$0xff]
        %v454 = vld [vmem:[%s169 + $0x7b8] sm:$0xff]
        %v455 = vld [vmem:[%s169 + $0x7c0] sm:$0xff]
        %v456 = vld [vmem:[%s169 + $0x7c8] sm:$0xff]
        %v457 = vld [vmem:[%s169 + $0x7d0] sm:$0xff]
        %v458 = vld [vmem:[%s169 + $0x7d8] sm:$0xff]
        %v459 = vld [vmem:[%s169 + $0x7e0] sm:$0xff]
        %v460 = vld [vmem:[%s169 + $0x7e8] sm:$0xff]
        %v461 = vld [vmem:[%s169 + $0x7f0] sm:$0xff]
        %v462 = vld [vmem:[%s169 + $0x7f8] sm:$0xff]
        %v463 = vld [vmem:[%s178] sm:$0xff]
        %v464 = vld [vmem:[%s178 + $0x8] sm:$0xff]
        %v465 = vld [vmem:[%s178 + $0x10] sm:$0xff]
        %v466 = vld [vmem:[%s178 + $0x18] sm:$0xff]
        %v467 = vld [vmem:[%s178 + $0x20] sm:$0xff]
        %v468 = vld [vmem:[%s178 + $0x28] sm:$0xff]
        %v469 = vld [vmem:[%s178 + $0x30] sm:$0xff]
        %v470 = vld [vmem:[%s178 + $0x38] sm:$0xff]
        %v471 = vld [vmem:[%s178 + $0x40] sm:$0xff]
        %v472 = vld [vmem:[%s178 + $0x48] sm:$0xff]
        %v473 = vld [vmem:[%s178 + $0x50] sm:$0xff]
        %v474 = vld [vmem:[%s178 + $0x58] sm:$0xff]
        %v475 = vld [vmem:[%s178 + $0x60] sm:$0xff]
        %v476 = vld [vmem:[%s178 + $0x68] sm:$0xff]
        %v477 = vld [vmem:[%s178 + $0x70] sm:$0xff]
        %v478 = vld [vmem:[%s178 + $0x78] sm:$0xff]
        %v479 = vld [vmem:[%s178 + $0x80] sm:$0xff]
        %v480 = vld [vmem:[%s178 + $0x88] sm:$0xff]
        %v481 = vld [vmem:[%s178 + $0x90] sm:$0xff]
        %v482 = vld [vmem:[%s178 + $0x98] sm:$0xff]
        %v483 = vld [vmem:[%s178 + $0xa0] sm:$0xff]
        %v484 = vld [vmem:[%s178 + $0xa8] sm:$0xff]
        %v485 = vld [vmem:[%s178 + $0xb0] sm:$0xff]
        %v486 = vld [vmem:[%s178 + $0xb8] sm:$0xff]
        %v487 = vld [vmem:[%s178 + $0xc0] sm:$0xff]
        %v488 = vld [vmem:[%s178 + $0xc8] sm:$0xff]
        %v489 = vld [vmem:[%s178 + $0xd0] sm:$0xff]
        %v490 = vld [vmem:[%s178 + $0xd8] sm:$0xff]
        %v491 = vld [vmem:[%s178 + $0xe0] sm:$0xff]
        %v492 = vld [vmem:[%s178 + $0xe8] sm:$0xff]
        %v493 = vld [vmem:[%s178 + $0xf0] sm:$0xff]
        %v494 = vld [vmem:[%s178 + $0xf8] sm:$0xff]
        %v495 = vld [vmem:[%s178 + $0x100] sm:$0xff]
        %v496 = vld [vmem:[%s178 + $0x108] sm:$0xff]
        %v497 = vld [vmem:[%s178 + $0x110] sm:$0xff]
        %v498 = vld [vmem:[%s178 + $0x118] sm:$0xff]
        %v499 = vld [vmem:[%s178 + $0x120] sm:$0xff]
        %v500 = vld [vmem:[%s178 + $0x128] sm:$0xff]
        %v501 = vld [vmem:[%s178 + $0x130] sm:$0xff]
        %v502 = vld [vmem:[%s178 + $0x138] sm:$0xff]
        %v503 = vld [vmem:[%s178 + $0x140] sm:$0xff]
        %v504 = vld [vmem:[%s178 + $0x148] sm:$0xff]
        %v505 = vld [vmem:[%s178 + $0x150] sm:$0xff]
        %v506 = vld [vmem:[%s178 + $0x158] sm:$0xff]
        %v507 = vld [vmem:[%s178 + $0x160] sm:$0xff]
        %v508 = vld [vmem:[%s178 + $0x168] sm:$0xff]
        %v509 = vld [vmem:[%s178 + $0x170] sm:$0xff]
        %v510 = vld [vmem:[%s178 + $0x178] sm:$0xff]
        %v511 = vld [vmem:[%s178 + $0x180] sm:$0xff]
        %v512 = vld [vmem:[%s178 + $0x188] sm:$0xff]
        %v513 = vld [vmem:[%s178 + $0x190] sm:$0xff]
        %v514 = vld [vmem:[%s178 + $0x198] sm:$0xff]
        %v515 = vld [vmem:[%s178 + $0x1a0] sm:$0xff]
        %v516 = vld [vmem:[%s178 + $0x1a8] sm:$0xff]
        %v517 = vld [vmem:[%s178 + $0x1b0] sm:$0xff]
        %v518 = vld [vmem:[%s178 + $0x1b8] sm:$0xff]
        %v519 = vld [vmem:[%s178 + $0x1c0] sm:$0xff]
        %v520 = vld [vmem:[%s178 + $0x1c8] sm:$0xff]
        %v521 = vld [vmem:[%s178 + $0x1d0] sm:$0xff]
        %v522 = vld [vmem:[%s178 + $0x1d8] sm:$0xff]
        %v523 = vld [vmem:[%s178 + $0x1e0] sm:$0xff]
        %v524 = vld [vmem:[%s178 + $0x1e8] sm:$0xff]
        %v525 = vld [vmem:[%s178 + $0x1f0] sm:$0xff]
        %v526 = vld [vmem:[%s178 + $0x1f8] sm:$0xff]
        %v527 = vld [vmem:[%s178 + $0x200] sm:$0xff]
        %v528 = vld [vmem:[%s178 + $0x208] sm:$0xff]
        %v529 = vld [vmem:[%s178 + $0x210] sm:$0xff]
        %v530 = vld [vmem:[%s178 + $0x218] sm:$0xff]
        %v531 = vld [vmem:[%s178 + $0x220] sm:$0xff]
        %v532 = vld [vmem:[%s178 + $0x228] sm:$0xff]
        %v533 = vld [vmem:[%s178 + $0x230] sm:$0xff]
        %v534 = vld [vmem:[%s178 + $0x238] sm:$0xff]
        %v535 = vld [vmem:[%s178 + $0x240] sm:$0xff]
        %v536 = vld [vmem:[%s178 + $0x248] sm:$0xff]
        %v537 = vld [vmem:[%s178 + $0x250] sm:$0xff]
        %v538 = vld [vmem:[%s178 + $0x258] sm:$0xff]
        %v539 = vld [vmem:[%s178 + $0x260] sm:$0xff]
        %v540 = vld [vmem:[%s178 + $0x268] sm:$0xff]
        %v541 = vld [vmem:[%s178 + $0x270] sm:$0xff]
        %v542 = vld [vmem:[%s178 + $0x278] sm:$0xff]
        %v543 = vld [vmem:[%s178 + $0x280] sm:$0xff]
        %v544 = vld [vmem:[%s178 + $0x288] sm:$0xff]
        %v545 = vld [vmem:[%s178 + $0x290] sm:$0xff]
        %v546 = vld [vmem:[%s178 + $0x298] sm:$0xff]
        %v547 = vld [vmem:[%s178 + $0x2a0] sm:$0xff]
        %v548 = vld [vmem:[%s178 + $0x2a8] sm:$0xff]
        %v549 = vld [vmem:[%s178 + $0x2b0] sm:$0xff]
        %v550 = vld [vmem:[%s178 + $0x2b8] sm:$0xff]
        %v551 = vld [vmem:[%s178 + $0x2c0] sm:$0xff]
        %v552 = vld [vmem:[%s178 + $0x2c8] sm:$0xff]
        %v553 = vld [vmem:[%s178 + $0x2d0] sm:$0xff]
        %v554 = vld [vmem:[%s178 + $0x2d8] sm:$0xff]
        %v555 = vld [vmem:[%s178 + $0x2e0] sm:$0xff]
        %v556 = vld [vmem:[%s178 + $0x2e8] sm:$0xff]
        %v557 = vld [vmem:[%s178 + $0x2f0] sm:$0xff]
        %v558 = vld [vmem:[%s178 + $0x2f8] sm:$0xff]
        %v559 = vld [vmem:[%s178 + $0x300] sm:$0xff]
        %v560 = vld [vmem:[%s178 + $0x308] sm:$0xff]
        %v561 = vld [vmem:[%s178 + $0x310] sm:$0xff]
        %v562 = vld [vmem:[%s178 + $0x318] sm:$0xff]
        %v563 = vld [vmem:[%s178 + $0x320] sm:$0xff]
        %v564 = vld [vmem:[%s178 + $0x328] sm:$0xff]
        %v565 = vld [vmem:[%s178 + $0x330] sm:$0xff]
        %v566 = vld [vmem:[%s178 + $0x338] sm:$0xff]
        %v567 = vld [vmem:[%s178 + $0x340] sm:$0xff]
        %v568 = vld [vmem:[%s178 + $0x348] sm:$0xff]
        %v569 = vld [vmem:[%s178 + $0x350] sm:$0xff]
        %v570 = vld [vmem:[%s178 + $0x358] sm:$0xff]
        %v571 = vld [vmem:[%s178 + $0x360] sm:$0xff]
        %v572 = vld [vmem:[%s178 + $0x368] sm:$0xff]
        %v573 = vld [vmem:[%s178 + $0x370] sm:$0xff]
        %v574 = vld [vmem:[%s178 + $0x378] sm:$0xff]
        %v575 = vld [vmem:[%s178 + $0x380] sm:$0xff]
        %v576 = vld [vmem:[%s178 + $0x388] sm:$0xff]
        %v577 = vld [vmem:[%s178 + $0x390] sm:$0xff]
        %v578 = vld [vmem:[%s178 + $0x398] sm:$0xff]
        %v579 = vld [vmem:[%s178 + $0x3a0] sm:$0xff]
        %v580 = vld [vmem:[%s178 + $0x3a8] sm:$0xff]
        %v581 = vld [vmem:[%s178 + $0x3b0] sm:$0xff]
        %v582 = vld [vmem:[%s178 + $0x3b8] sm:$0xff]
        %v583 = vld [vmem:[%s178 + $0x3c0] sm:$0xff]
        %v584 = vld [vmem:[%s178 + $0x3c8] sm:$0xff]
        %v585 = vld [vmem:[%s178 + $0x3d0] sm:$0xff]
        %v586 = vld [vmem:[%s178 + $0x3d8] sm:$0xff]
        %v587 = vld [vmem:[%s178 + $0x3e0] sm:$0xff]
        %v588 = vld [vmem:[%s178 + $0x3e8] sm:$0xff]
        %v589 = vld [vmem:[%s178 + $0x3f0] sm:$0xff]
        %v590 = vld [vmem:[%s178 + $0x3f8] sm:$0xff]
        %v591 = vld [vmem:[%s178 + $0x400] sm:$0xff]
        %v592 = vld [vmem:[%s178 + $0x408] sm:$0xff]
        %v593 = vld [vmem:[%s178 + $0x410] sm:$0xff]
        %v594 = vld [vmem:[%s178 + $0x418] sm:$0xff]
        %v595 = vld [vmem:[%s178 + $0x420] sm:$0xff]
        %v596 = vld [vmem:[%s178 + $0x428] sm:$0xff]
        %v597 = vld [vmem:[%s178 + $0x430] sm:$0xff]
        %v598 = vld [vmem:[%s178 + $0x438] sm:$0xff]
        %v599 = vld [vmem:[%s178 + $0x440] sm:$0xff]
        %v600 = vld [vmem:[%s178 + $0x448] sm:$0xff]
        %v601 = vld [vmem:[%s178 + $0x450] sm:$0xff]
        %v602 = vld [vmem:[%s178 + $0x458] sm:$0xff]
        %v603 = vld [vmem:[%s178 + $0x460] sm:$0xff]
        %v604 = vld [vmem:[%s178 + $0x468] sm:$0xff]
        %v605 = vld [vmem:[%s178 + $0x470] sm:$0xff]
        %v606 = vld [vmem:[%s178 + $0x478] sm:$0xff]
        %v607 = vld [vmem:[%s178 + $0x480] sm:$0xff]
        %v608 = vld [vmem:[%s178 + $0x488] sm:$0xff]
        %v609 = vld [vmem:[%s178 + $0x490] sm:$0xff]
        %v610 = vld [vmem:[%s178 + $0x498] sm:$0xff]
        %v611 = vld [vmem:[%s178 + $0x4a0] sm:$0xff]
        %v612 = vld [vmem:[%s178 + $0x4a8] sm:$0xff]
        %v613 = vld [vmem:[%s178 + $0x4b0] sm:$0xff]
        %v614 = vld [vmem:[%s178 + $0x4b8] sm:$0xff]
        %v615 = vld [vmem:[%s178 + $0x4c0] sm:$0xff]
        %v616 = vld [vmem:[%s178 + $0x4c8] sm:$0xff]
        %v617 = vld [vmem:[%s178 + $0x4d0] sm:$0xff]
        %v618 = vld [vmem:[%s178 + $0x4d8] sm:$0xff]
        %v619 = vld [vmem:[%s178 + $0x4e0] sm:$0xff]
        %v620 = vld [vmem:[%s178 + $0x4e8] sm:$0xff]
        %v621 = vld [vmem:[%s178 + $0x4f0] sm:$0xff]
        %v622 = vld [vmem:[%s178 + $0x4f8] sm:$0xff]
        %v623 = vld [vmem:[%s178 + $0x500] sm:$0xff]
        %v624 = vld [vmem:[%s178 + $0x508] sm:$0xff]
        %v625 = vld [vmem:[%s178 + $0x510] sm:$0xff]
        %v626 = vld [vmem:[%s178 + $0x518] sm:$0xff]
        %v627 = vld [vmem:[%s178 + $0x520] sm:$0xff]
        %v628 = vld [vmem:[%s178 + $0x528] sm:$0xff]
        %v629 = vld [vmem:[%s178 + $0x530] sm:$0xff]
        %v630 = vld [vmem:[%s178 + $0x538] sm:$0xff]
        %v631 = vld [vmem:[%s178 + $0x540] sm:$0xff]
        %v632 = vld [vmem:[%s178 + $0x548] sm:$0xff]
        %v633 = vld [vmem:[%s178 + $0x550] sm:$0xff]
        %v634 = vld [vmem:[%s178 + $0x558] sm:$0xff]
        %v635 = vld [vmem:[%s178 + $0x560] sm:$0xff]
        %v636 = vld [vmem:[%s178 + $0x568] sm:$0xff]
        %v637 = vld [vmem:[%s178 + $0x570] sm:$0xff]
        %v638 = vld [vmem:[%s178 + $0x578] sm:$0xff]
        %v639 = vld [vmem:[%s178 + $0x580] sm:$0xff]
        %v640 = vld [vmem:[%s178 + $0x588] sm:$0xff]
        %v641 = vld [vmem:[%s178 + $0x590] sm:$0xff]
        %v642 = vld [vmem:[%s178 + $0x598] sm:$0xff]
        %v643 = vld [vmem:[%s178 + $0x5a0] sm:$0xff]
        %v644 = vld [vmem:[%s178 + $0x5a8] sm:$0xff]
        %v645 = vld [vmem:[%s178 + $0x5b0] sm:$0xff]
        %v646 = vld [vmem:[%s178 + $0x5b8] sm:$0xff]
        %v647 = vld [vmem:[%s178 + $0x5c0] sm:$0xff]
        %v648 = vld [vmem:[%s178 + $0x5c8] sm:$0xff]
        %v649 = vld [vmem:[%s178 + $0x5d0] sm:$0xff]
        %v650 = vld [vmem:[%s178 + $0x5d8] sm:$0xff]
        %v651 = vld [vmem:[%s178 + $0x5e0] sm:$0xff]
        %v652 = vld [vmem:[%s178 + $0x5e8] sm:$0xff]
        %v653 = vld [vmem:[%s178 + $0x5f0] sm:$0xff]
        %v654 = vld [vmem:[%s178 + $0x5f8] sm:$0xff]
        %v655 = vld [vmem:[%s178 + $0x600] sm:$0xff]
        %v656 = vld [vmem:[%s178 + $0x608] sm:$0xff]
        %v657 = vld [vmem:[%s178 + $0x610] sm:$0xff]
        %v658 = vld [vmem:[%s178 + $0x618] sm:$0xff]
        %v659 = vld [vmem:[%s178 + $0x620] sm:$0xff]
        %v660 = vld [vmem:[%s178 + $0x628] sm:$0xff]
        %v661 = vld [vmem:[%s178 + $0x630] sm:$0xff]
        %v662 = vld [vmem:[%s178 + $0x638] sm:$0xff]
        %v663 = vld [vmem:[%s178 + $0x640] sm:$0xff]
        %v664 = vld [vmem:[%s178 + $0x648] sm:$0xff]
        %v665 = vld [vmem:[%s178 + $0x650] sm:$0xff]
        %v666 = vld [vmem:[%s178 + $0x658] sm:$0xff]
        %v667 = vld [vmem:[%s178 + $0x660] sm:$0xff]
        %v668 = vld [vmem:[%s178 + $0x668] sm:$0xff]
        %v669 = vld [vmem:[%s178 + $0x670] sm:$0xff]
        %v670 = vld [vmem:[%s178 + $0x678] sm:$0xff]
        %v671 = vld [vmem:[%s178 + $0x680] sm:$0xff]
        %v672 = vld [vmem:[%s178 + $0x688] sm:$0xff]
        %v673 = vld [vmem:[%s178 + $0x690] sm:$0xff]
        %v674 = vld [vmem:[%s178 + $0x698] sm:$0xff]
        %v675 = vld [vmem:[%s178 + $0x6a0] sm:$0xff]
        %v676 = vld [vmem:[%s178 + $0x6a8] sm:$0xff]
        %v677 = vld [vmem:[%s178 + $0x6b0] sm:$0xff]
        %v678 = vld [vmem:[%s178 + $0x6b8] sm:$0xff]
        %v679 = vld [vmem:[%s178 + $0x6c0] sm:$0xff]
        %v680 = vld [vmem:[%s178 + $0x6c8] sm:$0xff]
        %v681 = vld [vmem:[%s178 + $0x6d0] sm:$0xff]
        %v682 = vld [vmem:[%s178 + $0x6d8] sm:$0xff]
        %v683 = vld [vmem:[%s178 + $0x6e0] sm:$0xff]
        %v684 = vld [vmem:[%s178 + $0x6e8] sm:$0xff]
        %v685 = vld [vmem:[%s178 + $0x6f0] sm:$0xff]
        %v686 = vld [vmem:[%s178 + $0x6f8] sm:$0xff]
        %v687 = vld [vmem:[%s178 + $0x700] sm:$0xff]
        %v688 = vld [vmem:[%s178 + $0x708] sm:$0xff]
        %v689 = vld [vmem:[%s178 + $0x710] sm:$0xff]
        %v690 = vld [vmem:[%s178 + $0x718] sm:$0xff]
        %v691 = vld [vmem:[%s178 + $0x720] sm:$0xff]
        %v692 = vld [vmem:[%s178 + $0x728] sm:$0xff]
        %v693 = vld [vmem:[%s178 + $0x730] sm:$0xff]
        %v694 = vld [vmem:[%s178 + $0x738] sm:$0xff]
        %v695 = vld [vmem:[%s178 + $0x740] sm:$0xff]
        %v696 = vld [vmem:[%s178 + $0x748] sm:$0xff]
        %v697 = vld [vmem:[%s178 + $0x750] sm:$0xff]
        %v698 = vld [vmem:[%s178 + $0x758] sm:$0xff]
        %v699 = vld [vmem:[%s178 + $0x760] sm:$0xff]
        %v700 = vld [vmem:[%s178 + $0x768] sm:$0xff]
        %v701 = vld [vmem:[%s178 + $0x770] sm:$0xff]
        %v702 = vld [vmem:[%s178 + $0x778] sm:$0xff]
        %v703 = vld [vmem:[%s178 + $0x780] sm:$0xff]
        %v704 = vld [vmem:[%s178 + $0x788] sm:$0xff]
        %v705 = vld [vmem:[%s178 + $0x790] sm:$0xff]
        %v706 = vld [vmem:[%s178 + $0x798] sm:$0xff]
        %v707 = vld [vmem:[%s178 + $0x7a0] sm:$0xff]
        %v708 = vld [vmem:[%s178 + $0x7a8] sm:$0xff]
        %v709 = vld [vmem:[%s178 + $0x7b0] sm:$0xff]
        %v710 = vld [vmem:[%s178 + $0x7b8] sm:$0xff]
        %v711 = vld [vmem:[%s178 + $0x7c0] sm:$0xff]
        %v712 = vld [vmem:[%s178 + $0x7c8] sm:$0xff]
        %v713 = vld [vmem:[%s178 + $0x7d0] sm:$0xff]
        %v714 = vld [vmem:[%s178 + $0x7d8] sm:$0xff]
        %v715 = vld [vmem:[%s178 + $0x7e0] sm:$0xff]
        %v716 = vld [vmem:[%s178 + $0x7e8] sm:$0xff]
        %v717 = vld [vmem:[%s178 + $0x7f0] sm:$0xff]
        %v718 = vld [vmem:[%s178 + $0x7f8] sm:$0xff]
        %v719 = vsub.f32 %v207, %v463
        %v720 = vsub.f32 %v208, %v464
        %v721 = vsub.f32 %v209, %v465
        %v722 = vsub.f32 %v210, %v466
        %v723 = vsub.f32 %v211, %v467
        %v724 = vsub.f32 %v212, %v468
        %v725 = vsub.f32 %v213, %v469
        %v726 = vsub.f32 %v214, %v470
        %v727 = vsub.f32 %v215, %v471
        %v728 = vsub.f32 %v216, %v472
        %v729 = vsub.f32 %v217, %v473
        %v730 = vsub.f32 %v218, %v474
        %v731 = vsub.f32 %v219, %v475
        %v732 = vsub.f32 %v220, %v476
        %v733 = vsub.f32 %v221, %v477
        %v734 = vsub.f32 %v222, %v478
        %v735 = vsub.f32 %v223, %v479
        %v736 = vsub.f32 %v224, %v480
        %v737 = vsub.f32 %v225, %v481
        %v738 = vsub.f32 %v226, %v482
        %v739 = vsub.f32 %v227, %v483
        %v740 = vsub.f32 %v228, %v484
        %v741 = vsub.f32 %v229, %v485
        %v742 = vsub.f32 %v230, %v486
        %v743 = vsub.f32 %v231, %v487
        %v744 = vsub.f32 %v232, %v488
        %v745 = vsub.f32 %v233, %v489
        %v746 = vsub.f32 %v234, %v490
        %v747 = vsub.f32 %v235, %v491
        %v748 = vsub.f32 %v236, %v492
        %v749 = vsub.f32 %v237, %v493
        %v750 = vsub.f32 %v238, %v494
        %v751 = vsub.f32 %v239, %v495
        %v752 = vsub.f32 %v240, %v496
        %v753 = vsub.f32 %v241, %v497
        %v754 = vsub.f32 %v242, %v498
        %v755 = vsub.f32 %v243, %v499
        %v756 = vsub.f32 %v244, %v500
        %v757 = vsub.f32 %v245, %v501
        %v758 = vsub.f32 %v246, %v502
        %v759 = vsub.f32 %v247, %v503
        %v760 = vsub.f32 %v248, %v504
        %v761 = vsub.f32 %v249, %v505
        %v762 = vsub.f32 %v250, %v506
        %v763 = vsub.f32 %v251, %v507
        %v764 = vsub.f32 %v252, %v508
        %v765 = vsub.f32 %v253, %v509
        %v766 = vsub.f32 %v254, %v510
        %v767 = vsub.f32 %v255, %v511
        %v768 = vsub.f32 %v256, %v512
        %v769 = vsub.f32 %v257, %v513
        %v770 = vsub.f32 %v258, %v514
        %v771 = vsub.f32 %v259, %v515
        %v772 = vsub.f32 %v260, %v516
        %v773 = vsub.f32 %v261, %v517
        %v774 = vsub.f32 %v262, %v518
        %v775 = vsub.f32 %v263, %v519
        %v776 = vsub.f32 %v264, %v520
        %v777 = vsub.f32 %v265, %v521
        %v778 = vsub.f32 %v266, %v522
        %v779 = vsub.f32 %v267, %v523
        %v780 = vsub.f32 %v268, %v524
        %v781 = vsub.f32 %v269, %v525
        %v782 = vsub.f32 %v270, %v526
        %v783 = vsub.f32 %v271, %v527
        %v784 = vsub.f32 %v272, %v528
        %v785 = vsub.f32 %v273, %v529
        %v786 = vsub.f32 %v274, %v530
        %v787 = vsub.f32 %v275, %v531
        %v788 = vsub.f32 %v276, %v532
        %v789 = vsub.f32 %v277, %v533
        %v790 = vsub.f32 %v278, %v534
        %v791 = vsub.f32 %v279, %v535
        %v792 = vsub.f32 %v280, %v536
        %v793 = vsub.f32 %v281, %v537
        %v794 = vsub.f32 %v282, %v538
        %v795 = vsub.f32 %v283, %v539
        %v796 = vsub.f32 %v284, %v540
        %v797 = vsub.f32 %v285, %v541
        %v798 = vsub.f32 %v286, %v542
        %v799 = vsub.f32 %v287, %v543
        %v800 = vsub.f32 %v288, %v544
        %v801 = vsub.f32 %v289, %v545
        %v802 = vsub.f32 %v290, %v546
        %v803 = vsub.f32 %v291, %v547
        %v804 = vsub.f32 %v292, %v548
        %v805 = vsub.f32 %v293, %v549
        %v806 = vsub.f32 %v294, %v550
        %v807 = vsub.f32 %v295, %v551
        %v808 = vsub.f32 %v296, %v552
        %v809 = vsub.f32 %v297, %v553
        %v810 = vsub.f32 %v298, %v554
        %v811 = vsub.f32 %v299, %v555
        %v812 = vsub.f32 %v300, %v556
        %v813 = vsub.f32 %v301, %v557
        %v814 = vsub.f32 %v302, %v558
        %v815 = vsub.f32 %v303, %v559
        %v816 = vsub.f32 %v304, %v560
        %v817 = vsub.f32 %v305, %v561
        %v818 = vsub.f32 %v306, %v562
        %v819 = vsub.f32 %v307, %v563
        %v820 = vsub.f32 %v308, %v564
        %v821 = vsub.f32 %v309, %v565
        %v822 = vsub.f32 %v310, %v566
        %v823 = vsub.f32 %v311, %v567
        %v824 = vsub.f32 %v312, %v568
        %v825 = vsub.f32 %v313, %v569
        %v826 = vsub.f32 %v314, %v570
        %v827 = vsub.f32 %v315, %v571
        %v828 = vsub.f32 %v316, %v572
        %v829 = vsub.f32 %v317, %v573
        %v830 = vsub.f32 %v318, %v574
        %v831 = vsub.f32 %v319, %v575
        %v832 = vsub.f32 %v320, %v576
        %v833 = vsub.f32 %v321, %v577
        %v834 = vsub.f32 %v322, %v578
        %v835 = vsub.f32 %v323, %v579
        %v836 = vsub.f32 %v324, %v580
        %v837 = vsub.f32 %v325, %v581
        %v838 = vsub.f32 %v326, %v582
        %v839 = vsub.f32 %v327, %v583
        %v840 = vsub.f32 %v328, %v584
        %v841 = vsub.f32 %v329, %v585
        %v842 = vsub.f32 %v330, %v586
        %v843 = vsub.f32 %v331, %v587
        %v844 = vsub.f32 %v332, %v588
        %v845 = vsub.f32 %v333, %v589
        %v846 = vsub.f32 %v334, %v590
        %v847 = vsub.f32 %v335, %v591
        %v848 = vsub.f32 %v336, %v592
        %v849 = vsub.f32 %v337, %v593
        %v850 = vsub.f32 %v338, %v594
        %v851 = vsub.f32 %v339, %v595
        %v852 = vsub.f32 %v340, %v596
        %v853 = vsub.f32 %v341, %v597
        %v854 = vsub.f32 %v342, %v598
        %v855 = vsub.f32 %v343, %v599
        %v856 = vsub.f32 %v344, %v600
        %v857 = vsub.f32 %v345, %v601
        %v858 = vsub.f32 %v346, %v602
        %v859 = vsub.f32 %v347, %v603
        %v860 = vsub.f32 %v348, %v604
        %v861 = vsub.f32 %v349, %v605
        %v862 = vsub.f32 %v350, %v606
        %v863 = vsub.f32 %v351, %v607
        %v864 = vsub.f32 %v352, %v608
        %v865 = vsub.f32 %v353, %v609
        %v866 = vsub.f32 %v354, %v610
        %v867 = vsub.f32 %v355, %v611
        %v868 = vsub.f32 %v356, %v612
        %v869 = vsub.f32 %v357, %v613
        %v870 = vsub.f32 %v358, %v614
        %v871 = vsub.f32 %v359, %v615
        %v872 = vsub.f32 %v360, %v616
        %v873 = vsub.f32 %v361, %v617
        %v874 = vsub.f32 %v362, %v618
        %v875 = vsub.f32 %v363, %v619
        %v876 = vsub.f32 %v364, %v620
        %v877 = vsub.f32 %v365, %v621
        %v878 = vsub.f32 %v366, %v622
        %v879 = vsub.f32 %v367, %v623
        %v880 = vsub.f32 %v368, %v624
        %v881 = vsub.f32 %v369, %v625
        %v882 = vsub.f32 %v370, %v626
        %v883 = vsub.f32 %v371, %v627
        %v884 = vsub.f32 %v372, %v628
        %v885 = vsub.f32 %v373, %v629
        %v886 = vsub.f32 %v374, %v630
        %v887 = vsub.f32 %v375, %v631
        %v888 = vsub.f32 %v376, %v632
        %v889 = vsub.f32 %v377, %v633
        %v890 = vsub.f32 %v378, %v634
        %v891 = vsub.f32 %v379, %v635
        %v892 = vsub.f32 %v380, %v636
        %v893 = vsub.f32 %v381, %v637
        %v894 = vsub.f32 %v382, %v638
        %v895 = vsub.f32 %v383, %v639
        %v896 = vsub.f32 %v384, %v640
        %v897 = vsub.f32 %v385, %v641
        %v898 = vsub.f32 %v386, %v642
        %v899 = vsub.f32 %v387, %v643
        %v900 = vsub.f32 %v388, %v644
        %v901 = vsub.f32 %v389, %v645
        %v902 = vsub.f32 %v390, %v646
        %v903 = vsub.f32 %v391, %v647
        %v904 = vsub.f32 %v392, %v648
        %v905 = vsub.f32 %v393, %v649
        %v906 = vsub.f32 %v394, %v650
        %v907 = vsub.f32 %v395, %v651
        %v908 = vsub.f32 %v396, %v652
        %v909 = vsub.f32 %v397, %v653
        %v910 = vsub.f32 %v398, %v654
        %v911 = vsub.f32 %v399, %v655
        %v912 = vsub.f32 %v400, %v656
        %v913 = vsub.f32 %v401, %v657
        %v914 = vsub.f32 %v402, %v658
        %v915 = vsub.f32 %v403, %v659
        %v916 = vsub.f32 %v404, %v660
        %v917 = vsub.f32 %v405, %v661
        %v918 = vsub.f32 %v406, %v662
        %v919 = vsub.f32 %v407, %v663
        %v920 = vsub.f32 %v408, %v664
        %v921 = vsub.f32 %v409, %v665
        %v922 = vsub.f32 %v410, %v666
        %v923 = vsub.f32 %v411, %v667
        %v924 = vsub.f32 %v412, %v668
        %v925 = vsub.f32 %v413, %v669
        %v926 = vsub.f32 %v414, %v670
        %v927 = vsub.f32 %v415, %v671
        %v928 = vsub.f32 %v416, %v672
        %v929 = vsub.f32 %v417, %v673
        %v930 = vsub.f32 %v418, %v674
        %v931 = vsub.f32 %v419, %v675
        %v932 = vsub.f32 %v420, %v676
        %v933 = vsub.f32 %v421, %v677
        %v934 = vsub.f32 %v422, %v678
        %v935 = vsub.f32 %v423, %v679
        %v936 = vsub.f32 %v424, %v680
        %v937 = vsub.f32 %v425, %v681
        %v938 = vsub.f32 %v426, %v682
        %v939 = vsub.f32 %v427, %v683
        %v940 = vsub.f32 %v428, %v684
        %v941 = vsub.f32 %v429, %v685
        %v942 = vsub.f32 %v430, %v686
        %v943 = vsub.f32 %v431, %v687
        %v944 = vsub.f32 %v432, %v688
        %v945 = vsub.f32 %v433, %v689
        %v946 = vsub.f32 %v434, %v690
        %v947 = vsub.f32 %v435, %v691
        %v948 = vsub.f32 %v436, %v692
        %v949 = vsub.f32 %v437, %v693
        %v950 = vsub.f32 %v438, %v694
        %v951 = vsub.f32 %v439, %v695
        %v952 = vsub.f32 %v440, %v696
        %v953 = vsub.f32 %v441, %v697
        %v954 = vsub.f32 %v442, %v698
        %v955 = vsub.f32 %v443, %v699
        %v956 = vsub.f32 %v444, %v700
        %v957 = vsub.f32 %v445, %v701
        %v958 = vsub.f32 %v446, %v702
        %v959 = vsub.f32 %v447, %v703
        %v960 = vsub.f32 %v448, %v704
        %v961 = vsub.f32 %v449, %v705
        %v962 = vsub.f32 %v450, %v706
        %v963 = vsub.f32 %v451, %v707
        %v964 = vsub.f32 %v452, %v708
        %v965 = vsub.f32 %v453, %v709
        %v966 = vsub.f32 %v454, %v710
        %v967 = vsub.f32 %v455, %v711
        %v968 = vsub.f32 %v456, %v712
        %v969 = vsub.f32 %v457, %v713
        %v970 = vsub.f32 %v458, %v714
        %v971 = vsub.f32 %v459, %v715
        %v972 = vsub.f32 %v460, %v716
        %v973 = vsub.f32 %v461, %v717
        %v974 = vsub.f32 %v462, %v718
        %v975 = vand.u32 2147483647, %v719
        %v976 = vand.u32 2147483647, %v720
        %v977 = vand.u32 2147483647, %v721
        %v978 = vand.u32 2147483647, %v722
        %v979 = vand.u32 2147483647, %v723
        %v980 = vand.u32 2147483647, %v724
        %v981 = vand.u32 2147483647, %v725
        %v982 = vand.u32 2147483647, %v726
        %v983 = vand.u32 2147483647, %v727
        %v984 = vand.u32 2147483647, %v728
        %v985 = vand.u32 2147483647, %v729
        %v986 = vand.u32 2147483647, %v730
        %v987 = vand.u32 2147483647, %v731
        %v988 = vand.u32 2147483647, %v732
        %v989 = vand.u32 2147483647, %v733
        %v990 = vand.u32 2147483647, %v734
        %v991 = vand.u32 2147483647, %v735
        %v992 = vand.u32 2147483647, %v736
        %v993 = vand.u32 2147483647, %v737
        %v994 = vand.u32 2147483647, %v738
        %v995 = vand.u32 2147483647, %v739
        %v996 = vand.u32 2147483647, %v740
        %v997 = vand.u32 2147483647, %v741
        %v998 = vand.u32 2147483647, %v742
        %v999 = vand.u32 2147483647, %v743
        %v1000 = vand.u32 2147483647, %v744
        %v1001 = vand.u32 2147483647, %v745
        %v1002 = vand.u32 2147483647, %v746
        %v1003 = vand.u32 2147483647, %v747
        %v1004 = vand.u32 2147483647, %v748
        %v1005 = vand.u32 2147483647, %v749
        %v1006 = vand.u32 2147483647, %v750
        %v1007 = vand.u32 2147483647, %v751
        %v1008 = vand.u32 2147483647, %v752
        %v1009 = vand.u32 2147483647, %v753
        %v1010 = vand.u32 2147483647, %v754
        %v1011 = vand.u32 2147483647, %v755
        %v1012 = vand.u32 2147483647, %v756
        %v1013 = vand.u32 2147483647, %v757
        %v1014 = vand.u32 2147483647, %v758
        %v1015 = vand.u32 2147483647, %v759
        %v1016 = vand.u32 2147483647, %v760
        %v1017 = vand.u32 2147483647, %v761
        %v1018 = vand.u32 2147483647, %v762
        %v1019 = vand.u32 2147483647, %v763
        %v1020 = vand.u32 2147483647, %v764
        %v1021 = vand.u32 2147483647, %v765
        %v1022 = vand.u32 2147483647, %v766
        %v1023 = vand.u32 2147483647, %v767
        %v1024 = vand.u32 2147483647, %v768
        %v1025 = vand.u32 2147483647, %v769
        %v1026 = vand.u32 2147483647, %v770
        %v1027 = vand.u32 2147483647, %v771
        %v1028 = vand.u32 2147483647, %v772
        %v1029 = vand.u32 2147483647, %v773
        %v1030 = vand.u32 2147483647, %v774
        %v1031 = vand.u32 2147483647, %v775
        %v1032 = vand.u32 2147483647, %v776
        %v1033 = vand.u32 2147483647, %v777
        %v1034 = vand.u32 2147483647, %v778
        %v1035 = vand.u32 2147483647, %v779
        %v1036 = vand.u32 2147483647, %v780
        %v1037 = vand.u32 2147483647, %v781
        %v1038 = vand.u32 2147483647, %v782
        %v1039 = vand.u32 2147483647, %v783
        %v1040 = vand.u32 2147483647, %v784
        %v1041 = vand.u32 2147483647, %v785
        %v1042 = vand.u32 2147483647, %v786
        %v1043 = vand.u32 2147483647, %v787
        %v1044 = vand.u32 2147483647, %v788
        %v1045 = vand.u32 2147483647, %v789
        %v1046 = vand.u32 2147483647, %v790
        %v1047 = vand.u32 2147483647, %v791
        %v1048 = vand.u32 2147483647, %v792
        %v1049 = vand.u32 2147483647, %v793
        %v1050 = vand.u32 2147483647, %v794
        %v1051 = vand.u32 2147483647, %v795
        %v1052 = vand.u32 2147483647, %v796
        %v1053 = vand.u32 2147483647, %v797
        %v1054 = vand.u32 2147483647, %v798
        %v1055 = vand.u32 2147483647, %v799
        %v1056 = vand.u32 2147483647, %v800
        %v1057 = vand.u32 2147483647, %v801
        %v1058 = vand.u32 2147483647, %v802
        %v1059 = vand.u32 2147483647, %v803
        %v1060 = vand.u32 2147483647, %v804
        %v1061 = vand.u32 2147483647, %v805
        %v1062 = vand.u32 2147483647, %v806
        %v1063 = vand.u32 2147483647, %v807
        %v1064 = vand.u32 2147483647, %v808
        %v1065 = vand.u32 2147483647, %v809
        %v1066 = vand.u32 2147483647, %v810
        %v1067 = vand.u32 2147483647, %v811
        %v1068 = vand.u32 2147483647, %v812
        %v1069 = vand.u32 2147483647, %v813
        %v1070 = vand.u32 2147483647, %v814
        %v1071 = vand.u32 2147483647, %v815
        %v1072 = vand.u32 2147483647, %v816
        %v1073 = vand.u32 2147483647, %v817
        %v1074 = vand.u32 2147483647, %v818
        %v1075 = vand.u32 2147483647, %v819
        %v1076 = vand.u32 2147483647, %v820
        %v1077 = vand.u32 2147483647, %v821
        %v1078 = vand.u32 2147483647, %v822
        %v1079 = vand.u32 2147483647, %v823
        %v1080 = vand.u32 2147483647, %v824
        %v1081 = vand.u32 2147483647, %v825
        %v1082 = vand.u32 2147483647, %v826
        %v1083 = vand.u32 2147483647, %v827
        %v1084 = vand.u32 2147483647, %v828
        %v1085 = vand.u32 2147483647, %v829
        %v1086 = vand.u32 2147483647, %v830
        %v1087 = vand.u32 2147483647, %v831
        %v1088 = vand.u32 2147483647, %v832
        %v1089 = vand.u32 2147483647, %v833
        %v1090 = vand.u32 2147483647, %v834
        %v1091 = vand.u32 2147483647, %v835
        %v1092 = vand.u32 2147483647, %v836
        %v1093 = vand.u32 2147483647, %v837
        %v1094 = vand.u32 2147483647, %v838
        %v1095 = vand.u32 2147483647, %v839
        %v1096 = vand.u32 2147483647, %v840
        %v1097 = vand.u32 2147483647, %v841
        %v1098 = vand.u32 2147483647, %v842
        %v1099 = vand.u32 2147483647, %v843
        %v1100 = vand.u32 2147483647, %v844
        %v1101 = vand.u32 2147483647, %v845
        %v1102 = vand.u32 2147483647, %v846
        %v1103 = vand.u32 2147483647, %v847
        %v1104 = vand.u32 2147483647, %v848
        %v1105 = vand.u32 2147483647, %v849
        %v1106 = vand.u32 2147483647, %v850
        %v1107 = vand.u32 2147483647, %v851
        %v1108 = vand.u32 2147483647, %v852
        %v1109 = vand.u32 2147483647, %v853
        %v1110 = vand.u32 2147483647, %v854
        %v1111 = vand.u32 2147483647, %v855
        %v1112 = vand.u32 2147483647, %v856
        %v1113 = vand.u32 2147483647, %v857
        %v1114 = vand.u32 2147483647, %v858
        %v1115 = vand.u32 2147483647, %v859
        %v1116 = vand.u32 2147483647, %v860
        %v1117 = vand.u32 2147483647, %v861
        %v1118 = vand.u32 2147483647, %v862
        %v1119 = vand.u32 2147483647, %v863
        %v1120 = vand.u32 2147483647, %v864
        %v1121 = vand.u32 2147483647, %v865
        %v1122 = vand.u32 2147483647, %v866
        %v1123 = vand.u32 2147483647, %v867
        %v1124 = vand.u32 2147483647, %v868
        %v1125 = vand.u32 2147483647, %v869
        %v1126 = vand.u32 2147483647, %v870
        %v1127 = vand.u32 2147483647, %v871
        %v1128 = vand.u32 2147483647, %v872
        %v1129 = vand.u32 2147483647, %v873
        %v1130 = vand.u32 2147483647, %v874
        %v1131 = vand.u32 2147483647, %v875
        %v1132 = vand.u32 2147483647, %v876
        %v1133 = vand.u32 2147483647, %v877
        %v1134 = vand.u32 2147483647, %v878
        %v1135 = vand.u32 2147483647, %v879
        %v1136 = vand.u32 2147483647, %v880
        %v1137 = vand.u32 2147483647, %v881
        %v1138 = vand.u32 2147483647, %v882
        %v1139 = vand.u32 2147483647, %v883
        %v1140 = vand.u32 2147483647, %v884
        %v1141 = vand.u32 2147483647, %v885
        %v1142 = vand.u32 2147483647, %v886
        %v1143 = vand.u32 2147483647, %v887
        %v1144 = vand.u32 2147483647, %v888
        %v1145 = vand.u32 2147483647, %v889
        %v1146 = vand.u32 2147483647, %v890
        %v1147 = vand.u32 2147483647, %v891
        %v1148 = vand.u32 2147483647, %v892
        %v1149 = vand.u32 2147483647, %v893
        %v1150 = vand.u32 2147483647, %v894
        %v1151 = vand.u32 2147483647, %v895
        %v1152 = vand.u32 2147483647, %v896
        %v1153 = vand.u32 2147483647, %v897
        %v1154 = vand.u32 2147483647, %v898
        %v1155 = vand.u32 2147483647, %v899
        %v1156 = vand.u32 2147483647, %v900
        %v1157 = vand.u32 2147483647, %v901
        %v1158 = vand.u32 2147483647, %v902
        %v1159 = vand.u32 2147483647, %v903
        %v1160 = vand.u32 2147483647, %v904
        %v1161 = vand.u32 2147483647, %v905
        %v1162 = vand.u32 2147483647, %v906
        %v1163 = vand.u32 2147483647, %v907
        %v1164 = vand.u32 2147483647, %v908
        %v1165 = vand.u32 2147483647, %v909
        %v1166 = vand.u32 2147483647, %v910
        %v1167 = vand.u32 2147483647, %v911
        %v1168 = vand.u32 2147483647, %v912
        %v1169 = vand.u32 2147483647, %v913
        %v1170 = vand.u32 2147483647, %v914
        %v1171 = vand.u32 2147483647, %v915
        %v1172 = vand.u32 2147483647, %v916
        %v1173 = vand.u32 2147483647, %v917
        %v1174 = vand.u32 2147483647, %v918
        %v1175 = vand.u32 2147483647, %v919
        %v1176 = vand.u32 2147483647, %v920
        %v1177 = vand.u32 2147483647, %v921
        %v1178 = vand.u32 2147483647, %v922
        %v1179 = vand.u32 2147483647, %v923
        %v1180 = vand.u32 2147483647, %v924
        %v1181 = vand.u32 2147483647, %v925
        %v1182 = vand.u32 2147483647, %v926
        %v1183 = vand.u32 2147483647, %v927
        %v1184 = vand.u32 2147483647, %v928
        %v1185 = vand.u32 2147483647, %v929
        %v1186 = vand.u32 2147483647, %v930
        %v1187 = vand.u32 2147483647, %v931
        %v1188 = vand.u32 2147483647, %v932
        %v1189 = vand.u32 2147483647, %v933
        %v1190 = vand.u32 2147483647, %v934
        %v1191 = vand.u32 2147483647, %v935
        %v1192 = vand.u32 2147483647, %v936
        %v1193 = vand.u32 2147483647, %v937
        %v1194 = vand.u32 2147483647, %v938
        %v1195 = vand.u32 2147483647, %v939
        %v1196 = vand.u32 2147483647, %v940
        %v1197 = vand.u32 2147483647, %v941
        %v1198 = vand.u32 2147483647, %v942
        %v1199 = vand.u32 2147483647, %v943
        %v1200 = vand.u32 2147483647, %v944
        %v1201 = vand.u32 2147483647, %v945
        %v1202 = vand.u32 2147483647, %v946
        %v1203 = vand.u32 2147483647, %v947
        %v1204 = vand.u32 2147483647, %v948
        %v1205 = vand.u32 2147483647, %v949
        %v1206 = vand.u32 2147483647, %v950
        %v1207 = vand.u32 2147483647, %v951
        %v1208 = vand.u32 2147483647, %v952
        %v1209 = vand.u32 2147483647, %v953
        %v1210 = vand.u32 2147483647, %v954
        %v1211 = vand.u32 2147483647, %v955
        %v1212 = vand.u32 2147483647, %v956
        %v1213 = vand.u32 2147483647, %v957
        %v1214 = vand.u32 2147483647, %v958
        %v1215 = vand.u32 2147483647, %v959
        %v1216 = vand.u32 2147483647, %v960
        %v1217 = vand.u32 2147483647, %v961
        %v1218 = vand.u32 2147483647, %v962
        %v1219 = vand.u32 2147483647, %v963
        %v1220 = vand.u32 2147483647, %v964
        %v1221 = vand.u32 2147483647, %v965
        %v1222 = vand.u32 2147483647, %v966
        %v1223 = vand.u32 2147483647, %v967
        %v1224 = vand.u32 2147483647, %v968
        %v1225 = vand.u32 2147483647, %v969
        %v1226 = vand.u32 2147483647, %v970
        %v1227 = vand.u32 2147483647, %v971
        %v1228 = vand.u32 2147483647, %v972
        %v1229 = vand.u32 2147483647, %v973
        %v1230 = vand.u32 2147483647, %v974
        %v1231 = vmul.f32 %v975, 4.5
        %v1232 = vmul.f32 %v976, 4.5
        %v1233 = vmul.f32 %v977, 4.5
        %v1234 = vmul.f32 %v978, 4.5
        %v1235 = vmul.f32 %v979, 4.5
        %v1236 = vmul.f32 %v980, 4.5
        %v1237 = vmul.f32 %v981, 4.5
        %v1238 = vmul.f32 %v982, 4.5
        %v1239 = vmul.f32 %v983, 4.5
        %v1240 = vmul.f32 %v984, 4.5
        %v1241 = vmul.f32 %v985, 4.5
        %v1242 = vmul.f32 %v986, 4.5
        %v1243 = vmul.f32 %v987, 4.5
        %v1244 = vmul.f32 %v988, 4.5
        %v1245 = vmul.f32 %v989, 4.5
        %v1246 = vmul.f32 %v990, 4.5
        %v1247 = vmul.f32 %v991, 4.5
        %v1248 = vmul.f32 %v992, 4.5
        %v1249 = vmul.f32 %v993, 4.5
        %v1250 = vmul.f32 %v994, 4.5
        %v1251 = vmul.f32 %v995, 4.5
        %v1252 = vmul.f32 %v996, 4.5
        %v1253 = vmul.f32 %v997, 4.5
        %v1254 = vmul.f32 %v998, 4.5
        %v1255 = vmul.f32 %v999, 4.5
        %v1256 = vmul.f32 %v1000, 4.5
        %v1257 = vmul.f32 %v1001, 4.5
        %v1258 = vmul.f32 %v1002, 4.5
        %v1259 = vmul.f32 %v1003, 4.5
        %v1260 = vmul.f32 %v1004, 4.5
        %v1261 = vmul.f32 %v1005, 4.5
        %v1262 = vmul.f32 %v1006, 4.5
        %v1263 = vmul.f32 %v1007, 4.5
        %v1264 = vmul.f32 %v1008, 4.5
        %v1265 = vmul.f32 %v1009, 4.5
        %v1266 = vmul.f32 %v1010, 4.5
        %v1267 = vmul.f32 %v1011, 4.5
        %v1268 = vmul.f32 %v1012, 4.5
        %v1269 = vmul.f32 %v1013, 4.5
        %v1270 = vmul.f32 %v1014, 4.5
        %v1271 = vmul.f32 %v1015, 4.5
        %v1272 = vmul.f32 %v1016, 4.5
        %v1273 = vmul.f32 %v1017, 4.5
        %v1274 = vmul.f32 %v1018, 4.5
        %v1275 = vmul.f32 %v1019, 4.5
        %v1276 = vmul.f32 %v1020, 4.5
        %v1277 = vmul.f32 %v1021, 4.5
        %v1278 = vmul.f32 %v1022, 4.5
        %v1279 = vmul.f32 %v1023, 4.5
        %v1280 = vmul.f32 %v1024, 4.5
        %v1281 = vmul.f32 %v1025, 4.5
        %v1282 = vmul.f32 %v1026, 4.5
        %v1283 = vmul.f32 %v1027, 4.5
        %v1284 = vmul.f32 %v1028, 4.5
        %v1285 = vmul.f32 %v1029, 4.5
        %v1286 = vmul.f32 %v1030, 4.5
        %v1287 = vmul.f32 %v1031, 4.5
        %v1288 = vmul.f32 %v1032, 4.5
        %v1289 = vmul.f32 %v1033, 4.5
        %v1290 = vmul.f32 %v1034, 4.5
        %v1291 = vmul.f32 %v1035, 4.5
        %v1292 = vmul.f32 %v1036, 4.5
        %v1293 = vmul.f32 %v1037, 4.5
        %v1294 = vmul.f32 %v1038, 4.5
        %v1295 = vmul.f32 %v1039, 4.5
        %v1296 = vmul.f32 %v1040, 4.5
        %v1297 = vmul.f32 %v1041, 4.5
        %v1298 = vmul.f32 %v1042, 4.5
        %v1299 = vmul.f32 %v1043, 4.5
        %v1300 = vmul.f32 %v1044, 4.5
        %v1301 = vmul.f32 %v1045, 4.5
        %v1302 = vmul.f32 %v1046, 4.5
        %v1303 = vmul.f32 %v1047, 4.5
        %v1304 = vmul.f32 %v1048, 4.5
        %v1305 = vmul.f32 %v1049, 4.5
        %v1306 = vmul.f32 %v1050, 4.5
        %v1307 = vmul.f32 %v1051, 4.5
        %v1308 = vmul.f32 %v1052, 4.5
        %v1309 = vmul.f32 %v1053, 4.5
        %v1310 = vmul.f32 %v1054, 4.5
        %v1311 = vmul.f32 %v1055, 4.5
        %v1312 = vmul.f32 %v1056, 4.5
        %v1313 = vmul.f32 %v1057, 4.5
        %v1314 = vmul.f32 %v1058, 4.5
        %v1315 = vmul.f32 %v1059, 4.5
        %v1316 = vmul.f32 %v1060, 4.5
        %v1317 = vmul.f32 %v1061, 4.5
        %v1318 = vmul.f32 %v1062, 4.5
        %v1319 = vmul.f32 %v1063, 4.5
        %v1320 = vmul.f32 %v1064, 4.5
        %v1321 = vmul.f32 %v1065, 4.5
        %v1322 = vmul.f32 %v1066, 4.5
        %v1323 = vmul.f32 %v1067, 4.5
        %v1324 = vmul.f32 %v1068, 4.5
        %v1325 = vmul.f32 %v1069, 4.5
        %v1326 = vmul.f32 %v1070, 4.5
        %v1327 = vmul.f32 %v1071, 4.5
        %v1328 = vmul.f32 %v1072, 4.5
        %v1329 = vmul.f32 %v1073, 4.5
        %v1330 = vmul.f32 %v1074, 4.5
        %v1331 = vmul.f32 %v1075, 4.5
        %v1332 = vmul.f32 %v1076, 4.5
        %v1333 = vmul.f32 %v1077, 4.5
        %v1334 = vmul.f32 %v1078, 4.5
        %v1335 = vmul.f32 %v1079, 4.5
        %v1336 = vmul.f32 %v1080, 4.5
        %v1337 = vmul.f32 %v1081, 4.5
        %v1338 = vmul.f32 %v1082, 4.5
        %v1339 = vmul.f32 %v1083, 4.5
        %v1340 = vmul.f32 %v1084, 4.5
        %v1341 = vmul.f32 %v1085, 4.5
        %v1342 = vmul.f32 %v1086, 4.5
        %v1343 = vmul.f32 %v1087, 4.5
        %v1344 = vmul.f32 %v1088, 4.5
        %v1345 = vmul.f32 %v1089, 4.5
        %v1346 = vmul.f32 %v1090, 4.5
        %v1347 = vmul.f32 %v1091, 4.5
        %v1348 = vmul.f32 %v1092, 4.5
        %v1349 = vmul.f32 %v1093, 4.5
        %v1350 = vmul.f32 %v1094, 4.5
        %v1351 = vmul.f32 %v1095, 4.5
        %v1352 = vmul.f32 %v1096, 4.5
        %v1353 = vmul.f32 %v1097, 4.5
        %v1354 = vmul.f32 %v1098, 4.5
        %v1355 = vmul.f32 %v1099, 4.5
        %v1356 = vmul.f32 %v1100, 4.5
        %v1357 = vmul.f32 %v1101, 4.5
        %v1358 = vmul.f32 %v1102, 4.5
        %v1359 = vmul.f32 %v1103, 4.5
        %v1360 = vmul.f32 %v1104, 4.5
        %v1361 = vmul.f32 %v1105, 4.5
        %v1362 = vmul.f32 %v1106, 4.5
        %v1363 = vmul.f32 %v1107, 4.5
        %v1364 = vmul.f32 %v1108, 4.5
        %v1365 = vmul.f32 %v1109, 4.5
        %v1366 = vmul.f32 %v1110, 4.5
        %v1367 = vmul.f32 %v1111, 4.5
        %v1368 = vmul.f32 %v1112, 4.5
        %v1369 = vmul.f32 %v1113, 4.5
        %v1370 = vmul.f32 %v1114, 4.5
        %v1371 = vmul.f32 %v1115, 4.5
        %v1372 = vmul.f32 %v1116, 4.5
        %v1373 = vmul.f32 %v1117, 4.5
        %v1374 = vmul.f32 %v1118, 4.5
        %v1375 = vmul.f32 %v1119, 4.5
        %v1376 = vmul.f32 %v1120, 4.5
        %v1377 = vmul.f32 %v1121, 4.5
        %v1378 = vmul.f32 %v1122, 4.5
        %v1379 = vmul.f32 %v1123, 4.5
        %v1380 = vmul.f32 %v1124, 4.5
        %v1381 = vmul.f32 %v1125, 4.5
        %v1382 = vmul.f32 %v1126, 4.5
        %v1383 = vmul.f32 %v1127, 4.5
        %v1384 = vmul.f32 %v1128, 4.5
        %v1385 = vmul.f32 %v1129, 4.5
        %v1386 = vmul.f32 %v1130, 4.5
        %v1387 = vmul.f32 %v1131, 4.5
        %v1388 = vmul.f32 %v1132, 4.5
        %v1389 = vmul.f32 %v1133, 4.5
        %v1390 = vmul.f32 %v1134, 4.5
        %v1391 = vmul.f32 %v1135, 4.5
        %v1392 = vmul.f32 %v1136, 4.5
        %v1393 = vmul.f32 %v1137, 4.5
        %v1394 = vmul.f32 %v1138, 4.5
        %v1395 = vmul.f32 %v1139, 4.5
        %v1396 = vmul.f32 %v1140, 4.5
        %v1397 = vmul.f32 %v1141, 4.5
        %v1398 = vmul.f32 %v1142, 4.5
        %v1399 = vmul.f32 %v1143, 4.5
        %v1400 = vmul.f32 %v1144, 4.5
        %v1401 = vmul.f32 %v1145, 4.5
        %v1402 = vmul.f32 %v1146, 4.5
        %v1403 = vmul.f32 %v1147, 4.5
        %v1404 = vmul.f32 %v1148, 4.5
        %v1405 = vmul.f32 %v1149, 4.5
        %v1406 = vmul.f32 %v1150, 4.5
        %v1407 = vmul.f32 %v1151, 4.5
        %v1408 = vmul.f32 %v1152, 4.5
        %v1409 = vmul.f32 %v1153, 4.5
        %v1410 = vmul.f32 %v1154, 4.5
        %v1411 = vmul.f32 %v1155, 4.5
        %v1412 = vmul.f32 %v1156, 4.5
        %v1413 = vmul.f32 %v1157, 4.5
        %v1414 = vmul.f32 %v1158, 4.5
        %v1415 = vmul.f32 %v1159, 4.5
        %v1416 = vmul.f32 %v1160, 4.5
        %v1417 = vmul.f32 %v1161, 4.5
        %v1418 = vmul.f32 %v1162, 4.5
        %v1419 = vmul.f32 %v1163, 4.5
        %v1420 = vmul.f32 %v1164, 4.5
        %v1421 = vmul.f32 %v1165, 4.5
        %v1422 = vmul.f32 %v1166, 4.5
        %v1423 = vmul.f32 %v1167, 4.5
        %v1424 = vmul.f32 %v1168, 4.5
        %v1425 = vmul.f32 %v1169, 4.5
        %v1426 = vmul.f32 %v1170, 4.5
        %v1427 = vmul.f32 %v1171, 4.5
        %v1428 = vmul.f32 %v1172, 4.5
        %v1429 = vmul.f32 %v1173, 4.5
        %v1430 = vmul.f32 %v1174, 4.5
        %v1431 = vmul.f32 %v1175, 4.5
        %v1432 = vmul.f32 %v1176, 4.5
        %v1433 = vmul.f32 %v1177, 4.5
        %v1434 = vmul.f32 %v1178, 4.5
        %v1435 = vmul.f32 %v1179, 4.5
        %v1436 = vmul.f32 %v1180, 4.5
        %v1437 = vmul.f32 %v1181, 4.5
        %v1438 = vmul.f32 %v1182, 4.5
        %v1439 = vmul.f32 %v1183, 4.5
        %v1440 = vmul.f32 %v1184, 4.5
        %v1441 = vmul.f32 %v1185, 4.5
        %v1442 = vmul.f32 %v1186, 4.5
        %v1443 = vmul.f32 %v1187, 4.5
        %v1444 = vmul.f32 %v1188, 4.5
        %v1445 = vmul.f32 %v1189, 4.5
        %v1446 = vmul.f32 %v1190, 4.5
        %v1447 = vmul.f32 %v1191, 4.5
        %v1448 = vmul.f32 %v1192, 4.5
        %v1449 = vmul.f32 %v1193, 4.5
        %v1450 = vmul.f32 %v1194, 4.5
        %v1451 = vmul.f32 %v1195, 4.5
        %v1452 = vmul.f32 %v1196, 4.5
        %v1453 = vmul.f32 %v1197, 4.5
        %v1454 = vmul.f32 %v1198, 4.5
        %v1455 = vmul.f32 %v1199, 4.5
        %v1456 = vmul.f32 %v1200, 4.5
        %v1457 = vmul.f32 %v1201, 4.5
        %v1458 = vmul.f32 %v1202, 4.5
        %v1459 = vmul.f32 %v1203, 4.5
        %v1460 = vmul.f32 %v1204, 4.5
        %v1461 = vmul.f32 %v1205, 4.5
        %v1462 = vmul.f32 %v1206, 4.5
        %v1463 = vmul.f32 %v1207, 4.5
        %v1464 = vmul.f32 %v1208, 4.5
        %v1465 = vmul.f32 %v1209, 4.5
        %v1466 = vmul.f32 %v1210, 4.5
        %v1467 = vmul.f32 %v1211, 4.5
        %v1468 = vmul.f32 %v1212, 4.5
        %v1469 = vmul.f32 %v1213, 4.5
        %v1470 = vmul.f32 %v1214, 4.5
        %v1471 = vmul.f32 %v1215, 4.5
        %v1472 = vmul.f32 %v1216, 4.5
        %v1473 = vmul.f32 %v1217, 4.5
        %v1474 = vmul.f32 %v1218, 4.5
        %v1475 = vmul.f32 %v1219, 4.5
        %v1476 = vmul.f32 %v1220, 4.5
        %v1477 = vmul.f32 %v1221, 4.5
        %v1478 = vmul.f32 %v1222, 4.5
        %v1479 = vmul.f32 %v1223, 4.5
        %v1480 = vmul.f32 %v1224, 4.5
        %v1481 = vmul.f32 %v1225, 4.5
        %v1482 = vmul.f32 %v1226, 4.5
        %v1483 = vmul.f32 %v1227, 4.5
        %v1484 = vmul.f32 %v1228, 4.5
        %v1485 = vmul.f32 %v1229, 4.5
        %v1486 = vmul.f32 %v1230, 4.5
        %v1487 = vmul.f32 %v1231, %v975
        %v1488 = vmul.f32 %v1232, %v976
        %v1489 = vmul.f32 %v1233, %v977
        %v1490 = vmul.f32 %v1234, %v978
        %v1491 = vmul.f32 %v1235, %v979
        %v1492 = vmul.f32 %v1236, %v980
        %v1493 = vmul.f32 %v1237, %v981
        %v1494 = vmul.f32 %v1238, %v982
        %v1495 = vmul.f32 %v1239, %v983
        %v1496 = vmul.f32 %v1240, %v984
        %v1497 = vmul.f32 %v1241, %v985
        %v1498 = vmul.f32 %v1242, %v986
        %v1499 = vmul.f32 %v1243, %v987
        %v1500 = vmul.f32 %v1244, %v988
        %v1501 = vmul.f32 %v1245, %v989
        %v1502 = vmul.f32 %v1246, %v990
        %v1503 = vmul.f32 %v1247, %v991
        %v1504 = vmul.f32 %v1248, %v992
        %v1505 = vmul.f32 %v1249, %v993
        %v1506 = vmul.f32 %v1250, %v994
        %v1507 = vmul.f32 %v1251, %v995
        %v1508 = vmul.f32 %v1252, %v996
        %v1509 = vmul.f32 %v1253, %v997
        %v1510 = vmul.f32 %v1254, %v998
        %v1511 = vmul.f32 %v1255, %v999
        %v1512 = vmul.f32 %v1256, %v1000
        %v1513 = vmul.f32 %v1257, %v1001
        %v1514 = vmul.f32 %v1258, %v1002
        %v1515 = vmul.f32 %v1259, %v1003
        %v1516 = vmul.f32 %v1260, %v1004
        %v1517 = vmul.f32 %v1261, %v1005
        %v1518 = vmul.f32 %v1262, %v1006
        %v1519 = vmul.f32 %v1263, %v1007
        %v1520 = vmul.f32 %v1264, %v1008
        %v1521 = vmul.f32 %v1265, %v1009
        %v1522 = vmul.f32 %v1266, %v1010
        %v1523 = vmul.f32 %v1267, %v1011
        %v1524 = vmul.f32 %v1268, %v1012
        %v1525 = vmul.f32 %v1269, %v1013
        %v1526 = vmul.f32 %v1270, %v1014
        %v1527 = vmul.f32 %v1271, %v1015
        %v1528 = vmul.f32 %v1272, %v1016
        %v1529 = vmul.f32 %v1273, %v1017
        %v1530 = vmul.f32 %v1274, %v1018
        %v1531 = vmul.f32 %v1275, %v1019
        %v1532 = vmul.f32 %v1276, %v1020
        %v1533 = vmul.f32 %v1277, %v1021
        %v1534 = vmul.f32 %v1278, %v1022
        %v1535 = vmul.f32 %v1279, %v1023
        %v1536 = vmul.f32 %v1280, %v1024
        %v1537 = vmul.f32 %v1281, %v1025
        %v1538 = vmul.f32 %v1282, %v1026
        %v1539 = vmul.f32 %v1283, %v1027
        %v1540 = vmul.f32 %v1284, %v1028
        %v1541 = vmul.f32 %v1285, %v1029
        %v1542 = vmul.f32 %v1286, %v1030
        %v1543 = vmul.f32 %v1287, %v1031
        %v1544 = vmul.f32 %v1288, %v1032
        %v1545 = vmul.f32 %v1289, %v1033
        %v1546 = vmul.f32 %v1290, %v1034
        %v1547 = vmul.f32 %v1291, %v1035
        %v1548 = vmul.f32 %v1292, %v1036
        %v1549 = vmul.f32 %v1293, %v1037
        %v1550 = vmul.f32 %v1294, %v1038
        %v1551 = vmul.f32 %v1295, %v1039
        %v1552 = vmul.f32 %v1296, %v1040
        %v1553 = vmul.f32 %v1297, %v1041
        %v1554 = vmul.f32 %v1298, %v1042
        %v1555 = vmul.f32 %v1299, %v1043
        %v1556 = vmul.f32 %v1300, %v1044
        %v1557 = vmul.f32 %v1301, %v1045
        %v1558 = vmul.f32 %v1302, %v1046
        %v1559 = vmul.f32 %v1303, %v1047
        %v1560 = vmul.f32 %v1304, %v1048
        %v1561 = vmul.f32 %v1305, %v1049
        %v1562 = vmul.f32 %v1306, %v1050
        %v1563 = vmul.f32 %v1307, %v1051
        %v1564 = vmul.f32 %v1308, %v1052
        %v1565 = vmul.f32 %v1309, %v1053
        %v1566 = vmul.f32 %v1310, %v1054
        %v1567 = vmul.f32 %v1311, %v1055
        %v1568 = vmul.f32 %v1312, %v1056
        %v1569 = vmul.f32 %v1313, %v1057
        %v1570 = vmul.f32 %v1314, %v1058
        %v1571 = vmul.f32 %v1315, %v1059
        %v1572 = vmul.f32 %v1316, %v1060
        %v1573 = vmul.f32 %v1317, %v1061
        %v1574 = vmul.f32 %v1318, %v1062
        %v1575 = vmul.f32 %v1319, %v1063
        %v1576 = vmul.f32 %v1320, %v1064
        %v1577 = vmul.f32 %v1321, %v1065
        %v1578 = vmul.f32 %v1322, %v1066
        %v1579 = vmul.f32 %v1323, %v1067
        %v1580 = vmul.f32 %v1324, %v1068
        %v1581 = vmul.f32 %v1325, %v1069
        %v1582 = vmul.f32 %v1326, %v1070
        %v1583 = vmul.f32 %v1327, %v1071
        %v1584 = vmul.f32 %v1328, %v1072
        %v1585 = vmul.f32 %v1329, %v1073
        %v1586 = vmul.f32 %v1330, %v1074
        %v1587 = vmul.f32 %v1331, %v1075
        %v1588 = vmul.f32 %v1332, %v1076
        %v1589 = vmul.f32 %v1333, %v1077
        %v1590 = vmul.f32 %v1334, %v1078
        %v1591 = vmul.f32 %v1335, %v1079
        %v1592 = vmul.f32 %v1336, %v1080
        %v1593 = vmul.f32 %v1337, %v1081
        %v1594 = vmul.f32 %v1338, %v1082
        %v1595 = vmul.f32 %v1339, %v1083
        %v1596 = vmul.f32 %v1340, %v1084
        %v1597 = vmul.f32 %v1341, %v1085
        %v1598 = vmul.f32 %v1342, %v1086
        %v1599 = vmul.f32 %v1343, %v1087
        %v1600 = vmul.f32 %v1344, %v1088
        %v1601 = vmul.f32 %v1345, %v1089
        %v1602 = vmul.f32 %v1346, %v1090
        %v1603 = vmul.f32 %v1347, %v1091
        %v1604 = vmul.f32 %v1348, %v1092
        %v1605 = vmul.f32 %v1349, %v1093
        %v1606 = vmul.f32 %v1350, %v1094
        %v1607 = vmul.f32 %v1351, %v1095
        %v1608 = vmul.f32 %v1352, %v1096
        %v1609 = vmul.f32 %v1353, %v1097
        %v1610 = vmul.f32 %v1354, %v1098
        %v1611 = vmul.f32 %v1355, %v1099
        %v1612 = vmul.f32 %v1356, %v1100
        %v1613 = vmul.f32 %v1357, %v1101
        %v1614 = vmul.f32 %v1358, %v1102
        %v1615 = vmul.f32 %v1359, %v1103
        %v1616 = vmul.f32 %v1360, %v1104
        %v1617 = vmul.f32 %v1361, %v1105
        %v1618 = vmul.f32 %v1362, %v1106
        %v1619 = vmul.f32 %v1363, %v1107
        %v1620 = vmul.f32 %v1364, %v1108
        %v1621 = vmul.f32 %v1365, %v1109
        %v1622 = vmul.f32 %v1366, %v1110
        %v1623 = vmul.f32 %v1367, %v1111
        %v1624 = vmul.f32 %v1368, %v1112
        %v1625 = vmul.f32 %v1369, %v1113
        %v1626 = vmul.f32 %v1370, %v1114
        %v1627 = vmul.f32 %v1371, %v1115
        %v1628 = vmul.f32 %v1372, %v1116
        %v1629 = vmul.f32 %v1373, %v1117
        %v1630 = vmul.f32 %v1374, %v1118
        %v1631 = vmul.f32 %v1375, %v1119
        %v1632 = vmul.f32 %v1376, %v1120
        %v1633 = vmul.f32 %v1377, %v1121
        %v1634 = vmul.f32 %v1378, %v1122
        %v1635 = vmul.f32 %v1379, %v1123
        %v1636 = vmul.f32 %v1380, %v1124
        %v1637 = vmul.f32 %v1381, %v1125
        %v1638 = vmul.f32 %v1382, %v1126
        %v1639 = vmul.f32 %v1383, %v1127
        %v1640 = vmul.f32 %v1384, %v1128
        %v1641 = vmul.f32 %v1385, %v1129
        %v1642 = vmul.f32 %v1386, %v1130
        %v1643 = vmul.f32 %v1387, %v1131
        %v1644 = vmul.f32 %v1388, %v1132
        %v1645 = vmul.f32 %v1389, %v1133
        %v1646 = vmul.f32 %v1390, %v1134
        %v1647 = vmul.f32 %v1391, %v1135
        %v1648 = vmul.f32 %v1392, %v1136
        %v1649 = vmul.f32 %v1393, %v1137
        %v1650 = vmul.f32 %v1394, %v1138
        %v1651 = vmul.f32 %v1395, %v1139
        %v1652 = vmul.f32 %v1396, %v1140
        %v1653 = vmul.f32 %v1397, %v1141
        %v1654 = vmul.f32 %v1398, %v1142
        %v1655 = vmul.f32 %v1399, %v1143
        %v1656 = vmul.f32 %v1400, %v1144
        %v1657 = vmul.f32 %v1401, %v1145
        %v1658 = vmul.f32 %v1402, %v1146
        %v1659 = vmul.f32 %v1403, %v1147
        %v1660 = vmul.f32 %v1404, %v1148
        %v1661 = vmul.f32 %v1405, %v1149
        %v1662 = vmul.f32 %v1406, %v1150
        %v1663 = vmul.f32 %v1407, %v1151
        %v1664 = vmul.f32 %v1408, %v1152
        %v1665 = vmul.f32 %v1409, %v1153
        %v1666 = vmul.f32 %v1410, %v1154
        %v1667 = vmul.f32 %v1411, %v1155
        %v1668 = vmul.f32 %v1412, %v1156
        %v1669 = vmul.f32 %v1413, %v1157
        %v1670 = vmul.f32 %v1414, %v1158
        %v1671 = vmul.f32 %v1415, %v1159
        %v1672 = vmul.f32 %v1416, %v1160
        %v1673 = vmul.f32 %v1417, %v1161
        %v1674 = vmul.f32 %v1418, %v1162
        %v1675 = vmul.f32 %v1419, %v1163
        %v1676 = vmul.f32 %v1420, %v1164
        %v1677 = vmul.f32 %v1421, %v1165
        %v1678 = vmul.f32 %v1422, %v1166
        %v1679 = vmul.f32 %v1423, %v1167
        %v1680 = vmul.f32 %v1424, %v1168
        %v1681 = vmul.f32 %v1425, %v1169
        %v1682 = vmul.f32 %v1426, %v1170
        %v1683 = vmul.f32 %v1427, %v1171
        %v1684 = vmul.f32 %v1428, %v1172
        %v1685 = vmul.f32 %v1429, %v1173
        %v1686 = vmul.f32 %v1430, %v1174
        %v1687 = vmul.f32 %v1431, %v1175
        %v1688 = vmul.f32 %v1432, %v1176
        %v1689 = vmul.f32 %v1433, %v1177
        %v1690 = vmul.f32 %v1434, %v1178
        %v1691 = vmul.f32 %v1435, %v1179
        %v1692 = vmul.f32 %v1436, %v1180
        %v1693 = vmul.f32 %v1437, %v1181
        %v1694 = vmul.f32 %v1438, %v1182
        %v1695 = vmul.f32 %v1439, %v1183
        %v1696 = vmul.f32 %v1440, %v1184
        %v1697 = vmul.f32 %v1441, %v1185
        %v1698 = vmul.f32 %v1442, %v1186
        %v1699 = vmul.f32 %v1443, %v1187
        %v1700 = vmul.f32 %v1444, %v1188
        %v1701 = vmul.f32 %v1445, %v1189
        %v1702 = vmul.f32 %v1446, %v1190
        %v1703 = vmul.f32 %v1447, %v1191
        %v1704 = vmul.f32 %v1448, %v1192
        %v1705 = vmul.f32 %v1449, %v1193
        %v1706 = vmul.f32 %v1450, %v1194
        %v1707 = vmul.f32 %v1451, %v1195
        %v1708 = vmul.f32 %v1452, %v1196
        %v1709 = vmul.f32 %v1453, %v1197
        %v1710 = vmul.f32 %v1454, %v1198
        %v1711 = vmul.f32 %v1455, %v1199
        %v1712 = vmul.f32 %v1456, %v1200
        %v1713 = vmul.f32 %v1457, %v1201
        %v1714 = vmul.f32 %v1458, %v1202
        %v1715 = vmul.f32 %v1459, %v1203
        %v1716 = vmul.f32 %v1460, %v1204
        %v1717 = vmul.f32 %v1461, %v1205
        %v1718 = vmul.f32 %v1462, %v1206
        %v1719 = vmul.f32 %v1463, %v1207
        %v1720 = vmul.f32 %v1464, %v1208
        %v1721 = vmul.f32 %v1465, %v1209
        %v1722 = vmul.f32 %v1466, %v1210
        %v1723 = vmul.f32 %v1467, %v1211
        %v1724 = vmul.f32 %v1468, %v1212
        %v1725 = vmul.f32 %v1469, %v1213
        %v1726 = vmul.f32 %v1470, %v1214
        %v1727 = vmul.f32 %v1471, %v1215
        %v1728 = vmul.f32 %v1472, %v1216
        %v1729 = vmul.f32 %v1473, %v1217
        %v1730 = vmul.f32 %v1474, %v1218
        %v1731 = vmul.f32 %v1475, %v1219
        %v1732 = vmul.f32 %v1476, %v1220
        %v1733 = vmul.f32 %v1477, %v1221
        %v1734 = vmul.f32 %v1478, %v1222
        %v1735 = vmul.f32 %v1479, %v1223
        %v1736 = vmul.f32 %v1480, %v1224
        %v1737 = vmul.f32 %v1481, %v1225
        %v1738 = vmul.f32 %v1482, %v1226
        %v1739 = vmul.f32 %v1483, %v1227
        %v1740 = vmul.f32 %v1484, %v1228
        %v1741 = vmul.f32 %v1485, %v1229
        %v1742 = vmul.f32 %v1486, %v1230
        %v1743 = vsub.f32 %v975, 0.055555556
        %v1744 = vsub.f32 %v976, 0.055555556
        %v1745 = vsub.f32 %v977, 0.055555556
        %v1746 = vsub.f32 %v978, 0.055555556
        %v1747 = vsub.f32 %v979, 0.055555556
        %v1748 = vsub.f32 %v980, 0.055555556
        %v1749 = vsub.f32 %v981, 0.055555556
        %v1750 = vsub.f32 %v982, 0.055555556
        %v1751 = vsub.f32 %v983, 0.055555556
        %v1752 = vsub.f32 %v984, 0.055555556
        %v1753 = vsub.f32 %v985, 0.055555556
        %v1754 = vsub.f32 %v986, 0.055555556
        %v1755 = vsub.f32 %v987, 0.055555556
        %v1756 = vsub.f32 %v988, 0.055555556
        %v1757 = vsub.f32 %v989, 0.055555556
        %v1758 = vsub.f32 %v990, 0.055555556
        %v1759 = vsub.f32 %v991, 0.055555556
        %v1760 = vsub.f32 %v992, 0.055555556
        %v1761 = vsub.f32 %v993, 0.055555556
        %v1762 = vsub.f32 %v994, 0.055555556
        %v1763 = vsub.f32 %v995, 0.055555556
        %v1764 = vsub.f32 %v996, 0.055555556
        %v1765 = vsub.f32 %v997, 0.055555556
        %v1766 = vsub.f32 %v998, 0.055555556
        %v1767 = vsub.f32 %v999, 0.055555556
        %v1768 = vsub.f32 %v1000, 0.055555556
        %v1769 = vsub.f32 %v1001, 0.055555556
        %v1770 = vsub.f32 %v1002, 0.055555556
        %v1771 = vsub.f32 %v1003, 0.055555556
        %v1772 = vsub.f32 %v1004, 0.055555556
        %v1773 = vsub.f32 %v1005, 0.055555556
        %v1774 = vsub.f32 %v1006, 0.055555556
        %v1775 = vsub.f32 %v1007, 0.055555556
        %v1776 = vsub.f32 %v1008, 0.055555556
        %v1777 = vsub.f32 %v1009, 0.055555556
        %v1778 = vsub.f32 %v1010, 0.055555556
        %v1779 = vsub.f32 %v1011, 0.055555556
        %v1780 = vsub.f32 %v1012, 0.055555556
        %v1781 = vsub.f32 %v1013, 0.055555556
        %v1782 = vsub.f32 %v1014, 0.055555556
        %v1783 = vsub.f32 %v1015, 0.055555556
        %v1784 = vsub.f32 %v1016, 0.055555556
        %v1785 = vsub.f32 %v1017, 0.055555556
        %v1786 = vsub.f32 %v1018, 0.055555556
        %v1787 = vsub.f32 %v1019, 0.055555556
        %v1788 = vsub.f32 %v1020, 0.055555556
        %v1789 = vsub.f32 %v1021, 0.055555556
        %v1790 = vsub.f32 %v1022, 0.055555556
        %v1791 = vsub.f32 %v1023, 0.055555556
        %v1792 = vsub.f32 %v1024, 0.055555556
        %v1793 = vsub.f32 %v1025, 0.055555556
        %v1794 = vsub.f32 %v1026, 0.055555556
        %v1795 = vsub.f32 %v1027, 0.055555556
        %v1796 = vsub.f32 %v1028, 0.055555556
        %v1797 = vsub.f32 %v1029, 0.055555556
        %v1798 = vsub.f32 %v1030, 0.055555556
        %v1799 = vsub.f32 %v1031, 0.055555556
        %v1800 = vsub.f32 %v1032, 0.055555556
        %v1801 = vsub.f32 %v1033, 0.055555556
        %v1802 = vsub.f32 %v1034, 0.055555556
        %v1803 = vsub.f32 %v1035, 0.055555556
        %v1804 = vsub.f32 %v1036, 0.055555556
        %v1805 = vsub.f32 %v1037, 0.055555556
        %v1806 = vsub.f32 %v1038, 0.055555556
        %v1807 = vsub.f32 %v1039, 0.055555556
        %v1808 = vsub.f32 %v1040, 0.055555556
        %v1809 = vsub.f32 %v1041, 0.055555556
        %v1810 = vsub.f32 %v1042, 0.055555556
        %v1811 = vsub.f32 %v1043, 0.055555556
        %v1812 = vsub.f32 %v1044, 0.055555556
        %v1813 = vsub.f32 %v1045, 0.055555556
        %v1814 = vsub.f32 %v1046, 0.055555556
        %v1815 = vsub.f32 %v1047, 0.055555556
        %v1816 = vsub.f32 %v1048, 0.055555556
        %v1817 = vsub.f32 %v1049, 0.055555556
        %v1818 = vsub.f32 %v1050, 0.055555556
        %v1819 = vsub.f32 %v1051, 0.055555556
        %v1820 = vsub.f32 %v1052, 0.055555556
        %v1821 = vsub.f32 %v1053, 0.055555556
        %v1822 = vsub.f32 %v1054, 0.055555556
        %v1823 = vsub.f32 %v1055, 0.055555556
        %v1824 = vsub.f32 %v1056, 0.055555556
        %v1825 = vsub.f32 %v1057, 0.055555556
        %v1826 = vsub.f32 %v1058, 0.055555556
        %v1827 = vsub.f32 %v1059, 0.055555556
        %v1828 = vsub.f32 %v1060, 0.055555556
        %v1829 = vsub.f32 %v1061, 0.055555556
        %v1830 = vsub.f32 %v1062, 0.055555556
        %v1831 = vsub.f32 %v1063, 0.055555556
        %v1832 = vsub.f32 %v1064, 0.055555556
        %v1833 = vsub.f32 %v1065, 0.055555556
        %v1834 = vsub.f32 %v1066, 0.055555556
        %v1835 = vsub.f32 %v1067, 0.055555556
        %v1836 = vsub.f32 %v1068, 0.055555556
        %v1837 = vsub.f32 %v1069, 0.055555556
        %v1838 = vsub.f32 %v1070, 0.055555556
        %v1839 = vsub.f32 %v1071, 0.055555556
        %v1840 = vsub.f32 %v1072, 0.055555556
        %v1841 = vsub.f32 %v1073, 0.055555556
        %v1842 = vsub.f32 %v1074, 0.055555556
        %v1843 = vsub.f32 %v1075, 0.055555556
        %v1844 = vsub.f32 %v1076, 0.055555556
        %v1845 = vsub.f32 %v1077, 0.055555556
        %v1846 = vsub.f32 %v1078, 0.055555556
        %v1847 = vsub.f32 %v1079, 0.055555556
        %v1848 = vsub.f32 %v1080, 0.055555556
        %v1849 = vsub.f32 %v1081, 0.055555556
        %v1850 = vsub.f32 %v1082, 0.055555556
        %v1851 = vsub.f32 %v1083, 0.055555556
        %v1852 = vsub.f32 %v1084, 0.055555556
        %v1853 = vsub.f32 %v1085, 0.055555556
        %v1854 = vsub.f32 %v1086, 0.055555556
        %v1855 = vsub.f32 %v1087, 0.055555556
        %v1856 = vsub.f32 %v1088, 0.055555556
        %v1857 = vsub.f32 %v1089, 0.055555556
        %v1858 = vsub.f32 %v1090, 0.055555556
        %v1859 = vsub.f32 %v1091, 0.055555556
        %v1860 = vsub.f32 %v1092, 0.055555556
        %v1861 = vsub.f32 %v1093, 0.055555556
        %v1862 = vsub.f32 %v1094, 0.055555556
        %v1863 = vsub.f32 %v1095, 0.055555556
        %v1864 = vsub.f32 %v1096, 0.055555556
        %v1865 = vsub.f32 %v1097, 0.055555556
        %v1866 = vsub.f32 %v1098, 0.055555556
        %v1867 = vsub.f32 %v1099, 0.055555556
        %v1868 = vsub.f32 %v1100, 0.055555556
        %v1869 = vsub.f32 %v1101, 0.055555556
        %v1870 = vsub.f32 %v1102, 0.055555556
        %v1871 = vsub.f32 %v1103, 0.055555556
        %v1872 = vsub.f32 %v1104, 0.055555556
        %v1873 = vsub.f32 %v1105, 0.055555556
        %v1874 = vsub.f32 %v1106, 0.055555556
        %v1875 = vsub.f32 %v1107, 0.055555556
        %v1876 = vsub.f32 %v1108, 0.055555556
        %v1877 = vsub.f32 %v1109, 0.055555556
        %v1878 = vsub.f32 %v1110, 0.055555556
        %v1879 = vsub.f32 %v1111, 0.055555556
        %v1880 = vsub.f32 %v1112, 0.055555556
        %v1881 = vsub.f32 %v1113, 0.055555556
        %v1882 = vsub.f32 %v1114, 0.055555556
        %v1883 = vsub.f32 %v1115, 0.055555556
        %v1884 = vsub.f32 %v1116, 0.055555556
        %v1885 = vsub.f32 %v1117, 0.055555556
        %v1886 = vsub.f32 %v1118, 0.055555556
        %v1887 = vsub.f32 %v1119, 0.055555556
        %v1888 = vsub.f32 %v1120, 0.055555556
        %v1889 = vsub.f32 %v1121, 0.055555556
        %v1890 = vsub.f32 %v1122, 0.055555556
        %v1891 = vsub.f32 %v1123, 0.055555556
        %v1892 = vsub.f32 %v1124, 0.055555556
        %v1893 = vsub.f32 %v1125, 0.055555556
        %v1894 = vsub.f32 %v1126, 0.055555556
        %v1895 = vsub.f32 %v1127, 0.055555556
        %v1896 = vsub.f32 %v1128, 0.055555556
        %v1897 = vsub.f32 %v1129, 0.055555556
        %v1898 = vsub.f32 %v1130, 0.055555556
        %v1899 = vsub.f32 %v1131, 0.055555556
        %v1900 = vsub.f32 %v1132, 0.055555556
        %v1901 = vsub.f32 %v1133, 0.055555556
        %v1902 = vsub.f32 %v1134, 0.055555556
        %v1903 = vsub.f32 %v1135, 0.055555556
        %v1904 = vsub.f32 %v1136, 0.055555556
        %v1905 = vsub.f32 %v1137, 0.055555556
        %v1906 = vsub.f32 %v1138, 0.055555556
        %v1907 = vsub.f32 %v1139, 0.055555556
        %v1908 = vsub.f32 %v1140, 0.055555556
        %v1909 = vsub.f32 %v1141, 0.055555556
        %v1910 = vsub.f32 %v1142, 0.055555556
        %v1911 = vsub.f32 %v1143, 0.055555556
        %v1912 = vsub.f32 %v1144, 0.055555556
        %v1913 = vsub.f32 %v1145, 0.055555556
        %v1914 = vsub.f32 %v1146, 0.055555556
        %v1915 = vsub.f32 %v1147, 0.055555556
        %v1916 = vsub.f32 %v1148, 0.055555556
        %v1917 = vsub.f32 %v1149, 0.055555556
        %v1918 = vsub.f32 %v1150, 0.055555556
        %v1919 = vsub.f32 %v1151, 0.055555556
        %v1920 = vsub.f32 %v1152, 0.055555556
        %v1921 = vsub.f32 %v1153, 0.055555556
        %v1922 = vsub.f32 %v1154, 0.055555556
        %v1923 = vsub.f32 %v1155, 0.055555556
        %v1924 = vsub.f32 %v1156, 0.055555556
        %v1925 = vsub.f32 %v1157, 0.055555556
        %v1926 = vsub.f32 %v1158, 0.055555556
        %v1927 = vsub.f32 %v1159, 0.055555556
        %v1928 = vsub.f32 %v1160, 0.055555556
        %v1929 = vsub.f32 %v1161, 0.055555556
        %v1930 = vsub.f32 %v1162, 0.055555556
        %v1931 = vsub.f32 %v1163, 0.055555556
        %v1932 = vsub.f32 %v1164, 0.055555556
        %v1933 = vsub.f32 %v1165, 0.055555556
        %v1934 = vsub.f32 %v1166, 0.055555556
        %v1935 = vsub.f32 %v1167, 0.055555556
        %v1936 = vsub.f32 %v1168, 0.055555556
        %v1937 = vsub.f32 %v1169, 0.055555556
        %v1938 = vsub.f32 %v1170, 0.055555556
        %v1939 = vsub.f32 %v1171, 0.055555556
        %v1940 = vsub.f32 %v1172, 0.055555556
        %v1941 = vsub.f32 %v1173, 0.055555556
        %v1942 = vsub.f32 %v1174, 0.055555556
        %v1943 = vsub.f32 %v1175, 0.055555556
        %v1944 = vsub.f32 %v1176, 0.055555556
        %v1945 = vsub.f32 %v1177, 0.055555556
        %v1946 = vsub.f32 %v1178, 0.055555556
        %v1947 = vsub.f32 %v1179, 0.055555556
        %v1948 = vsub.f32 %v1180, 0.055555556
        %v1949 = vsub.f32 %v1181, 0.055555556
        %v1950 = vsub.f32 %v1182, 0.055555556
        %v1951 = vsub.f32 %v1183, 0.055555556
        %v1952 = vsub.f32 %v1184, 0.055555556
        %v1953 = vsub.f32 %v1185, 0.055555556
        %v1954 = vsub.f32 %v1186, 0.055555556
        %v1955 = vsub.f32 %v1187, 0.055555556
        %v1956 = vsub.f32 %v1188, 0.055555556
        %v1957 = vsub.f32 %v1189, 0.055555556
        %v1958 = vsub.f32 %v1190, 0.055555556
        %v1959 = vsub.f32 %v1191, 0.055555556
        %v1960 = vsub.f32 %v1192, 0.055555556
        %v1961 = vsub.f32 %v1193, 0.055555556
        %v1962 = vsub.f32 %v1194, 0.055555556
        %v1963 = vsub.f32 %v1195, 0.055555556
        %v1964 = vsub.f32 %v1196, 0.055555556
        %v1965 = vsub.f32 %v1197, 0.055555556
        %v1966 = vsub.f32 %v1198, 0.055555556
        %v1967 = vsub.f32 %v1199, 0.055555556
        %v1968 = vsub.f32 %v1200, 0.055555556
        %v1969 = vsub.f32 %v1201, 0.055555556
        %v1970 = vsub.f32 %v1202, 0.055555556
        %v1971 = vsub.f32 %v1203, 0.055555556
        %v1972 = vsub.f32 %v1204, 0.055555556
        %v1973 = vsub.f32 %v1205, 0.055555556
        %v1974 = vsub.f32 %v1206, 0.055555556
        %v1975 = vsub.f32 %v1207, 0.055555556
        %v1976 = vsub.f32 %v1208, 0.055555556
        %v1977 = vsub.f32 %v1209, 0.055555556
        %v1978 = vsub.f32 %v1210, 0.055555556
        %v1979 = vsub.f32 %v1211, 0.055555556
        %v1980 = vsub.f32 %v1212, 0.055555556
        %v1981 = vsub.f32 %v1213, 0.055555556
        %v1982 = vsub.f32 %v1214, 0.055555556
        %v1983 = vsub.f32 %v1215, 0.055555556
        %v1984 = vsub.f32 %v1216, 0.055555556
        %v1985 = vsub.f32 %v1217, 0.055555556
        %v1986 = vsub.f32 %v1218, 0.055555556
        %v1987 = vsub.f32 %v1219, 0.055555556
        %v1988 = vsub.f32 %v1220, 0.055555556
        %v1989 = vsub.f32 %v1221, 0.055555556
        %v1990 = vsub.f32 %v1222, 0.055555556
        %v1991 = vsub.f32 %v1223, 0.055555556
        %v1992 = vsub.f32 %v1224, 0.055555556
        %v1993 = vsub.f32 %v1225, 0.055555556
        %v1994 = vsub.f32 %v1226, 0.055555556
        %v1995 = vsub.f32 %v1227, 0.055555556
        %v1996 = vsub.f32 %v1228, 0.055555556
        %v1997 = vsub.f32 %v1229, 0.055555556
        %v1998 = vsub.f32 %v1230, 0.055555556
        %vm1999 = vcmp.le.f32.partialorder %v975, 0.11111111
        %vm2000 = vcmp.le.f32.partialorder %v976, 0.11111111
        %vm2001 = vcmp.le.f32.partialorder %v977, 0.11111111
        %vm2002 = vcmp.le.f32.partialorder %v978, 0.11111111
        %vm2003 = vcmp.le.f32.partialorder %v979, 0.11111111
        %vm2004 = vcmp.le.f32.partialorder %v980, 0.11111111
        %vm2005 = vcmp.le.f32.partialorder %v981, 0.11111111
        %vm2006 = vcmp.le.f32.partialorder %v982, 0.11111111
        %vm2007 = vcmp.le.f32.partialorder %v983, 0.11111111
        %vm2008 = vcmp.le.f32.partialorder %v984, 0.11111111
        %vm2009 = vcmp.le.f32.partialorder %v985, 0.11111111
        %vm2010 = vcmp.le.f32.partialorder %v986, 0.11111111
        %vm2011 = vcmp.le.f32.partialorder %v987, 0.11111111
        %vm2012 = vcmp.le.f32.partialorder %v988, 0.11111111
        %vm2013 = vcmp.le.f32.partialorder %v989, 0.11111111
        %vm2014 = vcmp.le.f32.partialorder %v990, 0.11111111
        %vm2015 = vcmp.le.f32.partialorder %v991, 0.11111111
        %vm2016 = vcmp.le.f32.partialorder %v992, 0.11111111
        %vm2017 = vcmp.le.f32.partialorder %v993, 0.11111111
        %vm2018 = vcmp.le.f32.partialorder %v994, 0.11111111
        %vm2019 = vcmp.le.f32.partialorder %v995, 0.11111111
        %vm2020 = vcmp.le.f32.partialorder %v996, 0.11111111
        %vm2021 = vcmp.le.f32.partialorder %v997, 0.11111111
        %vm2022 = vcmp.le.f32.partialorder %v998, 0.11111111
        %vm2023 = vcmp.le.f32.partialorder %v999, 0.11111111
        %vm2024 = vcmp.le.f32.partialorder %v1000, 0.11111111
        %vm2025 = vcmp.le.f32.partialorder %v1001, 0.11111111
        %vm2026 = vcmp.le.f32.partialorder %v1002, 0.11111111
        %vm2027 = vcmp.le.f32.partialorder %v1003, 0.11111111
        %vm2028 = vcmp.le.f32.partialorder %v1004, 0.11111111
        %vm2029 = vcmp.le.f32.partialorder %v1005, 0.11111111
        %vm2030 = vcmp.le.f32.partialorder %v1006, 0.11111111
        %vm2031 = vcmp.le.f32.partialorder %v1007, 0.11111111
        %vm2032 = vcmp.le.f32.partialorder %v1008, 0.11111111
        %vm2033 = vcmp.le.f32.partialorder %v1009, 0.11111111
        %vm2034 = vcmp.le.f32.partialorder %v1010, 0.11111111
        %vm2035 = vcmp.le.f32.partialorder %v1011, 0.11111111
        %vm2036 = vcmp.le.f32.partialorder %v1012, 0.11111111
        %vm2037 = vcmp.le.f32.partialorder %v1013, 0.11111111
        %vm2038 = vcmp.le.f32.partialorder %v1014, 0.11111111
        %vm2039 = vcmp.le.f32.partialorder %v1015, 0.11111111
        %vm2040 = vcmp.le.f32.partialorder %v1016, 0.11111111
        %vm2041 = vcmp.le.f32.partialorder %v1017, 0.11111111
        %vm2042 = vcmp.le.f32.partialorder %v1018, 0.11111111
        %vm2043 = vcmp.le.f32.partialorder %v1019, 0.11111111
        %vm2044 = vcmp.le.f32.partialorder %v1020, 0.11111111
        %vm2045 = vcmp.le.f32.partialorder %v1021, 0.11111111
        %vm2046 = vcmp.le.f32.partialorder %v1022, 0.11111111
        %vm2047 = vcmp.le.f32.partialorder %v1023, 0.11111111
        %vm2048 = vcmp.le.f32.partialorder %v1024, 0.11111111
        %vm2049 = vcmp.le.f32.partialorder %v1025, 0.11111111
        %vm2050 = vcmp.le.f32.partialorder %v1026, 0.11111111
        %vm2051 = vcmp.le.f32.partialorder %v1027, 0.11111111
        %vm2052 = vcmp.le.f32.partialorder %v1028, 0.11111111
        %vm2053 = vcmp.le.f32.partialorder %v1029, 0.11111111
        %vm2054 = vcmp.le.f32.partialorder %v1030, 0.11111111
        %vm2055 = vcmp.le.f32.partialorder %v1031, 0.11111111
        %vm2056 = vcmp.le.f32.partialorder %v1032, 0.11111111
        %vm2057 = vcmp.le.f32.partialorder %v1033, 0.11111111
        %vm2058 = vcmp.le.f32.partialorder %v1034, 0.11111111
        %vm2059 = vcmp.le.f32.partialorder %v1035, 0.11111111
        %vm2060 = vcmp.le.f32.partialorder %v1036, 0.11111111
        %vm2061 = vcmp.le.f32.partialorder %v1037, 0.11111111
        %vm2062 = vcmp.le.f32.partialorder %v1038, 0.11111111
        %vm2063 = vcmp.le.f32.partialorder %v1039, 0.11111111
        %vm2064 = vcmp.le.f32.partialorder %v1040, 0.11111111
        %vm2065 = vcmp.le.f32.partialorder %v1041, 0.11111111
        %vm2066 = vcmp.le.f32.partialorder %v1042, 0.11111111
        %vm2067 = vcmp.le.f32.partialorder %v1043, 0.11111111
        %vm2068 = vcmp.le.f32.partialorder %v1044, 0.11111111
        %vm2069 = vcmp.le.f32.partialorder %v1045, 0.11111111
        %vm2070 = vcmp.le.f32.partialorder %v1046, 0.11111111
        %vm2071 = vcmp.le.f32.partialorder %v1047, 0.11111111
        %vm2072 = vcmp.le.f32.partialorder %v1048, 0.11111111
        %vm2073 = vcmp.le.f32.partialorder %v1049, 0.11111111
        %vm2074 = vcmp.le.f32.partialorder %v1050, 0.11111111
        %vm2075 = vcmp.le.f32.partialorder %v1051, 0.11111111
        %vm2076 = vcmp.le.f32.partialorder %v1052, 0.11111111
        %vm2077 = vcmp.le.f32.partialorder %v1053, 0.11111111
        %vm2078 = vcmp.le.f32.partialorder %v1054, 0.11111111
        %vm2079 = vcmp.le.f32.partialorder %v1055, 0.11111111
        %vm2080 = vcmp.le.f32.partialorder %v1056, 0.11111111
        %vm2081 = vcmp.le.f32.partialorder %v1057, 0.11111111
        %vm2082 = vcmp.le.f32.partialorder %v1058, 0.11111111
        %vm2083 = vcmp.le.f32.partialorder %v1059, 0.11111111
        %vm2084 = vcmp.le.f32.partialorder %v1060, 0.11111111
        %vm2085 = vcmp.le.f32.partialorder %v1061, 0.11111111
        %vm2086 = vcmp.le.f32.partialorder %v1062, 0.11111111
        %vm2087 = vcmp.le.f32.partialorder %v1063, 0.11111111
        %vm2088 = vcmp.le.f32.partialorder %v1064, 0.11111111
        %vm2089 = vcmp.le.f32.partialorder %v1065, 0.11111111
        %vm2090 = vcmp.le.f32.partialorder %v1066, 0.11111111
        %vm2091 = vcmp.le.f32.partialorder %v1067, 0.11111111
        %vm2092 = vcmp.le.f32.partialorder %v1068, 0.11111111
        %vm2093 = vcmp.le.f32.partialorder %v1069, 0.11111111
        %vm2094 = vcmp.le.f32.partialorder %v1070, 0.11111111
        %vm2095 = vcmp.le.f32.partialorder %v1071, 0.11111111
        %vm2096 = vcmp.le.f32.partialorder %v1072, 0.11111111
        %vm2097 = vcmp.le.f32.partialorder %v1073, 0.11111111
        %vm2098 = vcmp.le.f32.partialorder %v1074, 0.11111111
        %vm2099 = vcmp.le.f32.partialorder %v1075, 0.11111111
        %vm2100 = vcmp.le.f32.partialorder %v1076, 0.11111111
        %vm2101 = vcmp.le.f32.partialorder %v1077, 0.11111111
        %vm2102 = vcmp.le.f32.partialorder %v1078, 0.11111111
        %vm2103 = vcmp.le.f32.partialorder %v1079, 0.11111111
        %vm2104 = vcmp.le.f32.partialorder %v1080, 0.11111111
        %vm2105 = vcmp.le.f32.partialorder %v1081, 0.11111111
        %vm2106 = vcmp.le.f32.partialorder %v1082, 0.11111111
        %vm2107 = vcmp.le.f32.partialorder %v1083, 0.11111111
        %vm2108 = vcmp.le.f32.partialorder %v1084, 0.11111111
        %vm2109 = vcmp.le.f32.partialorder %v1085, 0.11111111
        %vm2110 = vcmp.le.f32.partialorder %v1086, 0.11111111
        %vm2111 = vcmp.le.f32.partialorder %v1087, 0.11111111
        %vm2112 = vcmp.le.f32.partialorder %v1088, 0.11111111
        %vm2113 = vcmp.le.f32.partialorder %v1089, 0.11111111
        %vm2114 = vcmp.le.f32.partialorder %v1090, 0.11111111
        %vm2115 = vcmp.le.f32.partialorder %v1091, 0.11111111
        %vm2116 = vcmp.le.f32.partialorder %v1092, 0.11111111
        %vm2117 = vcmp.le.f32.partialorder %v1093, 0.11111111
        %vm2118 = vcmp.le.f32.partialorder %v1094, 0.11111111
        %vm2119 = vcmp.le.f32.partialorder %v1095, 0.11111111
        %vm2120 = vcmp.le.f32.partialorder %v1096, 0.11111111
        %vm2121 = vcmp.le.f32.partialorder %v1097, 0.11111111
        %vm2122 = vcmp.le.f32.partialorder %v1098, 0.11111111
        %vm2123 = vcmp.le.f32.partialorder %v1099, 0.11111111
        %vm2124 = vcmp.le.f32.partialorder %v1100, 0.11111111
        %vm2125 = vcmp.le.f32.partialorder %v1101, 0.11111111
        %vm2126 = vcmp.le.f32.partialorder %v1102, 0.11111111
        %vm2127 = vcmp.le.f32.partialorder %v1103, 0.11111111
        %vm2128 = vcmp.le.f32.partialorder %v1104, 0.11111111
        %vm2129 = vcmp.le.f32.partialorder %v1105, 0.11111111
        %vm2130 = vcmp.le.f32.partialorder %v1106, 0.11111111
        %vm2131 = vcmp.le.f32.partialorder %v1107, 0.11111111
        %vm2132 = vcmp.le.f32.partialorder %v1108, 0.11111111
        %vm2133 = vcmp.le.f32.partialorder %v1109, 0.11111111
        %vm2134 = vcmp.le.f32.partialorder %v1110, 0.11111111
        %vm2135 = vcmp.le.f32.partialorder %v1111, 0.11111111
        %vm2136 = vcmp.le.f32.partialorder %v1112, 0.11111111
        %vm2137 = vcmp.le.f32.partialorder %v1113, 0.11111111
        %vm2138 = vcmp.le.f32.partialorder %v1114, 0.11111111
        %vm2139 = vcmp.le.f32.partialorder %v1115, 0.11111111
        %vm2140 = vcmp.le.f32.partialorder %v1116, 0.11111111
        %vm2141 = vcmp.le.f32.partialorder %v1117, 0.11111111
        %vm2142 = vcmp.le.f32.partialorder %v1118, 0.11111111
        %vm2143 = vcmp.le.f32.partialorder %v1119, 0.11111111
        %vm2144 = vcmp.le.f32.partialorder %v1120, 0.11111111
        %vm2145 = vcmp.le.f32.partialorder %v1121, 0.11111111
        %vm2146 = vcmp.le.f32.partialorder %v1122, 0.11111111
        %vm2147 = vcmp.le.f32.partialorder %v1123, 0.11111111
        %vm2148 = vcmp.le.f32.partialorder %v1124, 0.11111111
        %vm2149 = vcmp.le.f32.partialorder %v1125, 0.11111111
        %vm2150 = vcmp.le.f32.partialorder %v1126, 0.11111111
        %vm2151 = vcmp.le.f32.partialorder %v1127, 0.11111111
        %vm2152 = vcmp.le.f32.partialorder %v1128, 0.11111111
        %vm2153 = vcmp.le.f32.partialorder %v1129, 0.11111111
        %vm2154 = vcmp.le.f32.partialorder %v1130, 0.11111111
        %vm2155 = vcmp.le.f32.partialorder %v1131, 0.11111111
        %vm2156 = vcmp.le.f32.partialorder %v1132, 0.11111111
        %vm2157 = vcmp.le.f32.partialorder %v1133, 0.11111111
        %vm2158 = vcmp.le.f32.partialorder %v1134, 0.11111111
        %vm2159 = vcmp.le.f32.partialorder %v1135, 0.11111111
        %vm2160 = vcmp.le.f32.partialorder %v1136, 0.11111111
        %vm2161 = vcmp.le.f32.partialorder %v1137, 0.11111111
        %vm2162 = vcmp.le.f32.partialorder %v1138, 0.11111111
        %vm2163 = vcmp.le.f32.partialorder %v1139, 0.11111111
        %vm2164 = vcmp.le.f32.partialorder %v1140, 0.11111111
        %vm2165 = vcmp.le.f32.partialorder %v1141, 0.11111111
        %vm2166 = vcmp.le.f32.partialorder %v1142, 0.11111111
        %vm2167 = vcmp.le.f32.partialorder %v1143, 0.11111111
        %vm2168 = vcmp.le.f32.partialorder %v1144, 0.11111111
        %vm2169 = vcmp.le.f32.partialorder %v1145, 0.11111111
        %vm2170 = vcmp.le.f32.partialorder %v1146, 0.11111111
        %vm2171 = vcmp.le.f32.partialorder %v1147, 0.11111111
        %vm2172 = vcmp.le.f32.partialorder %v1148, 0.11111111
        %vm2173 = vcmp.le.f32.partialorder %v1149, 0.11111111
        %vm2174 = vcmp.le.f32.partialorder %v1150, 0.11111111
        %vm2175 = vcmp.le.f32.partialorder %v1151, 0.11111111
        %vm2176 = vcmp.le.f32.partialorder %v1152, 0.11111111
        %vm2177 = vcmp.le.f32.partialorder %v1153, 0.11111111
        %vm2178 = vcmp.le.f32.partialorder %v1154, 0.11111111
        %vm2179 = vcmp.le.f32.partialorder %v1155, 0.11111111
        %vm2180 = vcmp.le.f32.partialorder %v1156, 0.11111111
        %vm2181 = vcmp.le.f32.partialorder %v1157, 0.11111111
        %vm2182 = vcmp.le.f32.partialorder %v1158, 0.11111111
        %vm2183 = vcmp.le.f32.partialorder %v1159, 0.11111111
        %vm2184 = vcmp.le.f32.partialorder %v1160, 0.11111111
        %vm2185 = vcmp.le.f32.partialorder %v1161, 0.11111111
        %vm2186 = vcmp.le.f32.partialorder %v1162, 0.11111111
        %vm2187 = vcmp.le.f32.partialorder %v1163, 0.11111111
        %vm2188 = vcmp.le.f32.partialorder %v1164, 0.11111111
        %vm2189 = vcmp.le.f32.partialorder %v1165, 0.11111111
        %vm2190 = vcmp.le.f32.partialorder %v1166, 0.11111111
        %vm2191 = vcmp.le.f32.partialorder %v1167, 0.11111111
        %vm2192 = vcmp.le.f32.partialorder %v1168, 0.11111111
        %vm2193 = vcmp.le.f32.partialorder %v1169, 0.11111111
        %vm2194 = vcmp.le.f32.partialorder %v1170, 0.11111111
        %vm2195 = vcmp.le.f32.partialorder %v1171, 0.11111111
        %vm2196 = vcmp.le.f32.partialorder %v1172, 0.11111111
        %vm2197 = vcmp.le.f32.partialorder %v1173, 0.11111111
        %vm2198 = vcmp.le.f32.partialorder %v1174, 0.11111111
        %vm2199 = vcmp.le.f32.partialorder %v1175, 0.11111111
        %vm2200 = vcmp.le.f32.partialorder %v1176, 0.11111111
        %vm2201 = vcmp.le.f32.partialorder %v1177, 0.11111111
        %vm2202 = vcmp.le.f32.partialorder %v1178, 0.11111111
        %vm2203 = vcmp.le.f32.partialorder %v1179, 0.11111111
        %vm2204 = vcmp.le.f32.partialorder %v1180, 0.11111111
        %vm2205 = vcmp.le.f32.partialorder %v1181, 0.11111111
        %vm2206 = vcmp.le.f32.partialorder %v1182, 0.11111111
        %vm2207 = vcmp.le.f32.partialorder %v1183, 0.11111111
        %vm2208 = vcmp.le.f32.partialorder %v1184, 0.11111111
        %vm2209 = vcmp.le.f32.partialorder %v1185, 0.11111111
        %vm2210 = vcmp.le.f32.partialorder %v1186, 0.11111111
        %vm2211 = vcmp.le.f32.partialorder %v1187, 0.11111111
        %vm2212 = vcmp.le.f32.partialorder %v1188, 0.11111111
        %vm2213 = vcmp.le.f32.partialorder %v1189, 0.11111111
        %vm2214 = vcmp.le.f32.partialorder %v1190, 0.11111111
        %vm2215 = vcmp.le.f32.partialorder %v1191, 0.11111111
        %vm2216 = vcmp.le.f32.partialorder %v1192, 0.11111111
        %vm2217 = vcmp.le.f32.partialorder %v1193, 0.11111111
        %vm2218 = vcmp.le.f32.partialorder %v1194, 0.11111111
        %vm2219 = vcmp.le.f32.partialorder %v1195, 0.11111111
        %vm2220 = vcmp.le.f32.partialorder %v1196, 0.11111111
        %vm2221 = vcmp.le.f32.partialorder %v1197, 0.11111111
        %vm2222 = vcmp.le.f32.partialorder %v1198, 0.11111111
        %vm2223 = vcmp.le.f32.partialorder %v1199, 0.11111111
        %vm2224 = vcmp.le.f32.partialorder %v1200, 0.11111111
        %vm2225 = vcmp.le.f32.partialorder %v1201, 0.11111111
        %vm2226 = vcmp.le.f32.partialorder %v1202, 0.11111111
        %vm2227 = vcmp.le.f32.partialorder %v1203, 0.11111111
        %vm2228 = vcmp.le.f32.partialorder %v1204, 0.11111111
        %vm2229 = vcmp.le.f32.partialorder %v1205, 0.11111111
        %vm2230 = vcmp.le.f32.partialorder %v1206, 0.11111111
        %vm2231 = vcmp.le.f32.partialorder %v1207, 0.11111111
        %vm2232 = vcmp.le.f32.partialorder %v1208, 0.11111111
        %vm2233 = vcmp.le.f32.partialorder %v1209, 0.11111111
        %vm2234 = vcmp.le.f32.partialorder %v1210, 0.11111111
        %vm2235 = vcmp.le.f32.partialorder %v1211, 0.11111111
        %vm2236 = vcmp.le.f32.partialorder %v1212, 0.11111111
        %vm2237 = vcmp.le.f32.partialorder %v1213, 0.11111111
        %vm2238 = vcmp.le.f32.partialorder %v1214, 0.11111111
        %vm2239 = vcmp.le.f32.partialorder %v1215, 0.11111111
        %vm2240 = vcmp.le.f32.partialorder %v1216, 0.11111111
        %vm2241 = vcmp.le.f32.partialorder %v1217, 0.11111111
        %vm2242 = vcmp.le.f32.partialorder %v1218, 0.11111111
        %vm2243 = vcmp.le.f32.partialorder %v1219, 0.11111111
        %vm2244 = vcmp.le.f32.partialorder %v1220, 0.11111111
        %vm2245 = vcmp.le.f32.partialorder %v1221, 0.11111111
        %vm2246 = vcmp.le.f32.partialorder %v1222, 0.11111111
        %vm2247 = vcmp.le.f32.partialorder %v1223, 0.11111111
        %vm2248 = vcmp.le.f32.partialorder %v1224, 0.11111111
        %vm2249 = vcmp.le.f32.partialorder %v1225, 0.11111111
        %vm2250 = vcmp.le.f32.partialorder %v1226, 0.11111111
        %vm2251 = vcmp.le.f32.partialorder %v1227, 0.11111111
        %vm2252 = vcmp.le.f32.partialorder %v1228, 0.11111111
        %vm2253 = vcmp.le.f32.partialorder %v1229, 0.11111111
        %vm2254 = vcmp.le.f32.partialorder %v1230, 0.11111111
        %v2255 = vsel %vm1999, %v1487, %v1743
        %v2256 = vsel %vm2000, %v1488, %v1744
        %v2257 = vsel %vm2001, %v1489, %v1745
        %v2258 = vsel %vm2002, %v1490, %v1746
        %v2259 = vsel %vm2003, %v1491, %v1747
        %v2260 = vsel %vm2004, %v1492, %v1748
        %v2261 = vsel %vm2005, %v1493, %v1749
        %v2262 = vsel %vm2006, %v1494, %v1750
        %v2263 = vsel %vm2007, %v1495, %v1751
        %v2264 = vsel %vm2008, %v1496, %v1752
        %v2265 = vsel %vm2009, %v1497, %v1753
        %v2266 = vsel %vm2010, %v1498, %v1754
        %v2267 = vsel %vm2011, %v1499, %v1755
        %v2268 = vsel %vm2012, %v1500, %v1756
        %v2269 = vsel %vm2013, %v1501, %v1757
        %v2270 = vsel %vm2014, %v1502, %v1758
        %v2271 = vsel %vm2015, %v1503, %v1759
        %v2272 = vsel %vm2016, %v1504, %v1760
        %v2273 = vsel %vm2017, %v1505, %v1761
        %v2274 = vsel %vm2018, %v1506, %v1762
        %v2275 = vsel %vm2019, %v1507, %v1763
        %v2276 = vsel %vm2020, %v1508, %v1764
        %v2277 = vsel %vm2021, %v1509, %v1765
        %v2278 = vsel %vm2022, %v1510, %v1766
        %v2279 = vsel %vm2023, %v1511, %v1767
        %v2280 = vsel %vm2024, %v1512, %v1768
        %v2281 = vsel %vm2025, %v1513, %v1769
        %v2282 = vsel %vm2026, %v1514, %v1770
        %v2283 = vsel %vm2027, %v1515, %v1771
        %v2284 = vsel %vm2028, %v1516, %v1772
        %v2285 = vsel %vm2029, %v1517, %v1773
        %v2286 = vsel %vm2030, %v1518, %v1774
        %v2287 = vsel %vm2031, %v1519, %v1775
        %v2288 = vsel %vm2032, %v1520, %v1776
        %v2289 = vsel %vm2033, %v1521, %v1777
        %v2290 = vsel %vm2034, %v1522, %v1778
        %v2291 = vsel %vm2035, %v1523, %v1779
        %v2292 = vsel %vm2036, %v1524, %v1780
        %v2293 = vsel %vm2037, %v1525, %v1781
        %v2294 = vsel %vm2038, %v1526, %v1782
        %v2295 = vsel %vm2039, %v1527, %v1783
        %v2296 = vsel %vm2040, %v1528, %v1784
        %v2297 = vsel %vm2041, %v1529, %v1785
        %v2298 = vsel %vm2042, %v1530, %v1786
        %v2299 = vsel %vm2043, %v1531, %v1787
        %v2300 = vsel %vm2044, %v1532, %v1788
        %v2301 = vsel %vm2045, %v1533, %v1789
        %v2302 = vsel %vm2046, %v1534, %v1790
        %v2303 = vsel %vm2047, %v1535, %v1791
        %v2304 = vsel %vm2048, %v1536, %v1792
        %v2305 = vsel %vm2049, %v1537, %v1793
        %v2306 = vsel %vm2050, %v1538, %v1794
        %v2307 = vsel %vm2051, %v1539, %v1795
        %v2308 = vsel %vm2052, %v1540, %v1796
        %v2309 = vsel %vm2053, %v1541, %v1797
        %v2310 = vsel %vm2054, %v1542, %v1798
        %v2311 = vsel %vm2055, %v1543, %v1799
        %v2312 = vsel %vm2056, %v1544, %v1800
        %v2313 = vsel %vm2057, %v1545, %v1801
        %v2314 = vsel %vm2058, %v1546, %v1802
        %v2315 = vsel %vm2059, %v1547, %v1803
        %v2316 = vsel %vm2060, %v1548, %v1804
        %v2317 = vsel %vm2061, %v1549, %v1805
        %v2318 = vsel %vm2062, %v1550, %v1806
        %v2319 = vsel %vm2063, %v1551, %v1807
        %v2320 = vsel %vm2064, %v1552, %v1808
        %v2321 = vsel %vm2065, %v1553, %v1809
        %v2322 = vsel %vm2066, %v1554, %v1810
        %v2323 = vsel %vm2067, %v1555, %v1811
        %v2324 = vsel %vm2068, %v1556, %v1812
        %v2325 = vsel %vm2069, %v1557, %v1813
        %v2326 = vsel %vm2070, %v1558, %v1814
        %v2327 = vsel %vm2071, %v1559, %v1815
        %v2328 = vsel %vm2072, %v1560, %v1816
        %v2329 = vsel %vm2073, %v1561, %v1817
        %v2330 = vsel %vm2074, %v1562, %v1818
        %v2331 = vsel %vm2075, %v1563, %v1819
        %v2332 = vsel %vm2076, %v1564, %v1820
        %v2333 = vsel %vm2077, %v1565, %v1821
        %v2334 = vsel %vm2078, %v1566, %v1822
        %v2335 = vsel %vm2079, %v1567, %v1823
        %v2336 = vsel %vm2080, %v1568, %v1824
        %v2337 = vsel %vm2081, %v1569, %v1825
        %v2338 = vsel %vm2082, %v1570, %v1826
        %v2339 = vsel %vm2083, %v1571, %v1827
        %v2340 = vsel %vm2084, %v1572, %v1828
        %v2341 = vsel %vm2085, %v1573, %v1829
        %v2342 = vsel %vm2086, %v1574, %v1830
        %v2343 = vsel %vm2087, %v1575, %v1831
        %v2344 = vsel %vm2088, %v1576, %v1832
        %v2345 = vsel %vm2089, %v1577, %v1833
        %v2346 = vsel %vm2090, %v1578, %v1834
        %v2347 = vsel %vm2091, %v1579, %v1835
        %v2348 = vsel %vm2092, %v1580, %v1836
        %v2349 = vsel %vm2093, %v1581, %v1837
        %v2350 = vsel %vm2094, %v1582, %v1838
        %v2351 = vsel %vm2095, %v1583, %v1839
        %v2352 = vsel %vm2096, %v1584, %v1840
        %v2353 = vsel %vm2097, %v1585, %v1841
        %v2354 = vsel %vm2098, %v1586, %v1842
        %v2355 = vsel %vm2099, %v1587, %v1843
        %v2356 = vsel %vm2100, %v1588, %v1844
        %v2357 = vsel %vm2101, %v1589, %v1845
        %v2358 = vsel %vm2102, %v1590, %v1846
        %v2359 = vsel %vm2103, %v1591, %v1847
        %v2360 = vsel %vm2104, %v1592, %v1848
        %v2361 = vsel %vm2105, %v1593, %v1849
        %v2362 = vsel %vm2106, %v1594, %v1850
        %v2363 = vsel %vm2107, %v1595, %v1851
        %v2364 = vsel %vm2108, %v1596, %v1852
        %v2365 = vsel %vm2109, %v1597, %v1853
        %v2366 = vsel %vm2110, %v1598, %v1854
        %v2367 = vsel %vm2111, %v1599, %v1855
        %v2368 = vsel %vm2112, %v1600, %v1856
        %v2369 = vsel %vm2113, %v1601, %v1857
        %v2370 = vsel %vm2114, %v1602, %v1858
        %v2371 = vsel %vm2115, %v1603, %v1859
        %v2372 = vsel %vm2116, %v1604, %v1860
        %v2373 = vsel %vm2117, %v1605, %v1861
        %v2374 = vsel %vm2118, %v1606, %v1862
        %v2375 = vsel %vm2119, %v1607, %v1863
        %v2376 = vsel %vm2120, %v1608, %v1864
        %v2377 = vsel %vm2121, %v1609, %v1865
        %v2378 = vsel %vm2122, %v1610, %v1866
        %v2379 = vsel %vm2123, %v1611, %v1867
        %v2380 = vsel %vm2124, %v1612, %v1868
        %v2381 = vsel %vm2125, %v1613, %v1869
        %v2382 = vsel %vm2126, %v1614, %v1870
        %v2383 = vsel %vm2127, %v1615, %v1871
        %v2384 = vsel %vm2128, %v1616, %v1872
        %v2385 = vsel %vm2129, %v1617, %v1873
        %v2386 = vsel %vm2130, %v1618, %v1874
        %v2387 = vsel %vm2131, %v1619, %v1875
        %v2388 = vsel %vm2132, %v1620, %v1876
        %v2389 = vsel %vm2133, %v1621, %v1877
        %v2390 = vsel %vm2134, %v1622, %v1878
        %v2391 = vsel %vm2135, %v1623, %v1879
        %v2392 = vsel %vm2136, %v1624, %v1880
        %v2393 = vsel %vm2137, %v1625, %v1881
        %v2394 = vsel %vm2138, %v1626, %v1882
        %v2395 = vsel %vm2139, %v1627, %v1883
        %v2396 = vsel %vm2140, %v1628, %v1884
        %v2397 = vsel %vm2141, %v1629, %v1885
        %v2398 = vsel %vm2142, %v1630, %v1886
        %v2399 = vsel %vm2143, %v1631, %v1887
        %v2400 = vsel %vm2144, %v1632, %v1888
        %v2401 = vsel %vm2145, %v1633, %v1889
        %v2402 = vsel %vm2146, %v1634, %v1890
        %v2403 = vsel %vm2147, %v1635, %v1891
        %v2404 = vsel %vm2148, %v1636, %v1892
        %v2405 = vsel %vm2149, %v1637, %v1893
        %v2406 = vsel %vm2150, %v1638, %v1894
        %v2407 = vsel %vm2151, %v1639, %v1895
        %v2408 = vsel %vm2152, %v1640, %v1896
        %v2409 = vsel %vm2153, %v1641, %v1897
        %v2410 = vsel %vm2154, %v1642, %v1898
        %v2411 = vsel %vm2155, %v1643, %v1899
        %v2412 = vsel %vm2156, %v1644, %v1900
        %v2413 = vsel %vm2157, %v1645, %v1901
        %v2414 = vsel %vm2158, %v1646, %v1902
        %v2415 = vsel %vm2159, %v1647, %v1903
        %v2416 = vsel %vm2160, %v1648, %v1904
        %v2417 = vsel %vm2161, %v1649, %v1905
        %v2418 = vsel %vm2162, %v1650, %v1906
        %v2419 = vsel %vm2163, %v1651, %v1907
        %v2420 = vsel %vm2164, %v1652, %v1908
        %v2421 = vsel %vm2165, %v1653, %v1909
        %v2422 = vsel %vm2166, %v1654, %v1910
        %v2423 = vsel %vm2167, %v1655, %v1911
        %v2424 = vsel %vm2168, %v1656, %v1912
        %v2425 = vsel %vm2169, %v1657, %v1913
        %v2426 = vsel %vm2170, %v1658, %v1914
        %v2427 = vsel %vm2171, %v1659, %v1915
        %v2428 = vsel %vm2172, %v1660, %v1916
        %v2429 = vsel %vm2173, %v1661, %v1917
        %v2430 = vsel %vm2174, %v1662, %v1918
        %v2431 = vsel %vm2175, %v1663, %v1919
        %v2432 = vsel %vm2176, %v1664, %v1920
        %v2433 = vsel %vm2177, %v1665, %v1921
        %v2434 = vsel %vm2178, %v1666, %v1922
        %v2435 = vsel %vm2179, %v1667, %v1923
        %v2436 = vsel %vm2180, %v1668, %v1924
        %v2437 = vsel %vm2181, %v1669, %v1925
        %v2438 = vsel %vm2182, %v1670, %v1926
        %v2439 = vsel %vm2183, %v1671, %v1927
        %v2440 = vsel %vm2184, %v1672, %v1928
        %v2441 = vsel %vm2185, %v1673, %v1929
        %v2442 = vsel %vm2186, %v1674, %v1930
        %v2443 = vsel %vm2187, %v1675, %v1931
        %v2444 = vsel %vm2188, %v1676, %v1932
        %v2445 = vsel %vm2189, %v1677, %v1933
        %v2446 = vsel %vm2190, %v1678, %v1934
        %v2447 = vsel %vm2191, %v1679, %v1935
        %v2448 = vsel %vm2192, %v1680, %v1936
        %v2449 = vsel %vm2193, %v1681, %v1937
        %v2450 = vsel %vm2194, %v1682, %v1938
        %v2451 = vsel %vm2195, %v1683, %v1939
        %v2452 = vsel %vm2196, %v1684, %v1940
        %v2453 = vsel %vm2197, %v1685, %v1941
        %v2454 = vsel %vm2198, %v1686, %v1942
        %v2455 = vsel %vm2199, %v1687, %v1943
        %v2456 = vsel %vm2200, %v1688, %v1944
        %v2457 = vsel %vm2201, %v1689, %v1945
        %v2458 = vsel %vm2202, %v1690, %v1946
        %v2459 = vsel %vm2203, %v1691, %v1947
        %v2460 = vsel %vm2204, %v1692, %v1948
        %v2461 = vsel %vm2205, %v1693, %v1949
        %v2462 = vsel %vm2206, %v1694, %v1950
        %v2463 = vsel %vm2207, %v1695, %v1951
        %v2464 = vsel %vm2208, %v1696, %v1952
        %v2465 = vsel %vm2209, %v1697, %v1953
        %v2466 = vsel %vm2210, %v1698, %v1954
        %v2467 = vsel %vm2211, %v1699, %v1955
        %v2468 = vsel %vm2212, %v1700, %v1956
        %v2469 = vsel %vm2213, %v1701, %v1957
        %v2470 = vsel %vm2214, %v1702, %v1958
        %v2471 = vsel %vm2215, %v1703, %v1959
        %v2472 = vsel %vm2216, %v1704, %v1960
        %v2473 = vsel %vm2217, %v1705, %v1961
        %v2474 = vsel %vm2218, %v1706, %v1962
        %v2475 = vsel %vm2219, %v1707, %v1963
        %v2476 = vsel %vm2220, %v1708, %v1964
        %v2477 = vsel %vm2221, %v1709, %v1965
        %v2478 = vsel %vm2222, %v1710, %v1966
        %v2479 = vsel %vm2223, %v1711, %v1967
        %v2480 = vsel %vm2224, %v1712, %v1968
        %v2481 = vsel %vm2225, %v1713, %v1969
        %v2482 = vsel %vm2226, %v1714, %v1970
        %v2483 = vsel %vm2227, %v1715, %v1971
        %v2484 = vsel %vm2228, %v1716, %v1972
        %v2485 = vsel %vm2229, %v1717, %v1973
        %v2486 = vsel %vm2230, %v1718, %v1974
        %v2487 = vsel %vm2231, %v1719, %v1975
        %v2488 = vsel %vm2232, %v1720, %v1976
        %v2489 = vsel %vm2233, %v1721, %v1977
        %v2490 = vsel %vm2234, %v1722, %v1978
        %v2491 = vsel %vm2235, %v1723, %v1979
        %v2492 = vsel %vm2236, %v1724, %v1980
        %v2493 = vsel %vm2237, %v1725, %v1981
        %v2494 = vsel %vm2238, %v1726, %v1982
        %v2495 = vsel %vm2239, %v1727, %v1983
        %v2496 = vsel %vm2240, %v1728, %v1984
        %v2497 = vsel %vm2241, %v1729, %v1985
        %v2498 = vsel %vm2242, %v1730, %v1986
        %v2499 = vsel %vm2243, %v1731, %v1987
        %v2500 = vsel %vm2244, %v1732, %v1988
        %v2501 = vsel %vm2245, %v1733, %v1989
        %v2502 = vsel %vm2246, %v1734, %v1990
        %v2503 = vsel %vm2247, %v1735, %v1991
        %v2504 = vsel %vm2248, %v1736, %v1992
        %v2505 = vsel %vm2249, %v1737, %v1993
        %v2506 = vsel %vm2250, %v1738, %v1994
        %v2507 = vsel %vm2251, %v1739, %v1995
        %v2508 = vsel %vm2252, %v1740, %v1996
        %v2509 = vsel %vm2253, %v1741, %v1997
        %v2510 = vsel %vm2254, %v1742, %v1998
        %vm2511 = vcmp.le.f32.partialorder %v975, 0.01
        %vm2512 = vcmp.le.f32.partialorder %v976, 0.01
        %vm2513 = vcmp.le.f32.partialorder %v977, 0.01
        %vm2514 = vcmp.le.f32.partialorder %v978, 0.01
        %vm2515 = vcmp.le.f32.partialorder %v979, 0.01
        %vm2516 = vcmp.le.f32.partialorder %v980, 0.01
        %vm2517 = vcmp.le.f32.partialorder %v981, 0.01
        %vm2518 = vcmp.le.f32.partialorder %v982, 0.01
        %vm2519 = vcmp.le.f32.partialorder %v983, 0.01
        %vm2520 = vcmp.le.f32.partialorder %v984, 0.01
        %vm2521 = vcmp.le.f32.partialorder %v985, 0.01
        %vm2522 = vcmp.le.f32.partialorder %v986, 0.01
        %vm2523 = vcmp.le.f32.partialorder %v987, 0.01
        %vm2524 = vcmp.le.f32.partialorder %v988, 0.01
        %vm2525 = vcmp.le.f32.partialorder %v989, 0.01
        %vm2526 = vcmp.le.f32.partialorder %v990, 0.01
        %vm2527 = vcmp.le.f32.partialorder %v991, 0.01
        %vm2528 = vcmp.le.f32.partialorder %v992, 0.01
        %vm2529 = vcmp.le.f32.partialorder %v993, 0.01
        %vm2530 = vcmp.le.f32.partialorder %v994, 0.01
        %vm2531 = vcmp.le.f32.partialorder %v995, 0.01
        %vm2532 = vcmp.le.f32.partialorder %v996, 0.01
        %vm2533 = vcmp.le.f32.partialorder %v997, 0.01
        %vm2534 = vcmp.le.f32.partialorder %v998, 0.01
        %vm2535 = vcmp.le.f32.partialorder %v999, 0.01
        %vm2536 = vcmp.le.f32.partialorder %v1000, 0.01
        %vm2537 = vcmp.le.f32.partialorder %v1001, 0.01
        %vm2538 = vcmp.le.f32.partialorder %v1002, 0.01
        %vm2539 = vcmp.le.f32.partialorder %v1003, 0.01
        %vm2540 = vcmp.le.f32.partialorder %v1004, 0.01
        %vm2541 = vcmp.le.f32.partialorder %v1005, 0.01
        %vm2542 = vcmp.le.f32.partialorder %v1006, 0.01
        %vm2543 = vcmp.le.f32.partialorder %v1007, 0.01
        %vm2544 = vcmp.le.f32.partialorder %v1008, 0.01
        %vm2545 = vcmp.le.f32.partialorder %v1009, 0.01
        %vm2546 = vcmp.le.f32.partialorder %v1010, 0.01
        %vm2547 = vcmp.le.f32.partialorder %v1011, 0.01
        %vm2548 = vcmp.le.f32.partialorder %v1012, 0.01
        %vm2549 = vcmp.le.f32.partialorder %v1013, 0.01
        %vm2550 = vcmp.le.f32.partialorder %v1014, 0.01
        %vm2551 = vcmp.le.f32.partialorder %v1015, 0.01
        %vm2552 = vcmp.le.f32.partialorder %v1016, 0.01
        %vm2553 = vcmp.le.f32.partialorder %v1017, 0.01
        %vm2554 = vcmp.le.f32.partialorder %v1018, 0.01
        %vm2555 = vcmp.le.f32.partialorder %v1019, 0.01
        %vm2556 = vcmp.le.f32.partialorder %v1020, 0.01
        %vm2557 = vcmp.le.f32.partialorder %v1021, 0.01
        %vm2558 = vcmp.le.f32.partialorder %v1022, 0.01
        %vm2559 = vcmp.le.f32.partialorder %v1023, 0.01
        %vm2560 = vcmp.le.f32.partialorder %v1024, 0.01
        %vm2561 = vcmp.le.f32.partialorder %v1025, 0.01
        %vm2562 = vcmp.le.f32.partialorder %v1026, 0.01
        %vm2563 = vcmp.le.f32.partialorder %v1027, 0.01
        %vm2564 = vcmp.le.f32.partialorder %v1028, 0.01
        %vm2565 = vcmp.le.f32.partialorder %v1029, 0.01
        %vm2566 = vcmp.le.f32.partialorder %v1030, 0.01
        %vm2567 = vcmp.le.f32.partialorder %v1031, 0.01
        %vm2568 = vcmp.le.f32.partialorder %v1032, 0.01
        %vm2569 = vcmp.le.f32.partialorder %v1033, 0.01
        %vm2570 = vcmp.le.f32.partialorder %v1034, 0.01
        %vm2571 = vcmp.le.f32.partialorder %v1035, 0.01
        %vm2572 = vcmp.le.f32.partialorder %v1036, 0.01
        %vm2573 = vcmp.le.f32.partialorder %v1037, 0.01
        %vm2574 = vcmp.le.f32.partialorder %v1038, 0.01
        %vm2575 = vcmp.le.f32.partialorder %v1039, 0.01
        %vm2576 = vcmp.le.f32.partialorder %v1040, 0.01
        %vm2577 = vcmp.le.f32.partialorder %v1041, 0.01
        %vm2578 = vcmp.le.f32.partialorder %v1042, 0.01
        %vm2579 = vcmp.le.f32.partialorder %v1043, 0.01
        %vm2580 = vcmp.le.f32.partialorder %v1044, 0.01
        %vm2581 = vcmp.le.f32.partialorder %v1045, 0.01
        %vm2582 = vcmp.le.f32.partialorder %v1046, 0.01
        %vm2583 = vcmp.le.f32.partialorder %v1047, 0.01
        %vm2584 = vcmp.le.f32.partialorder %v1048, 0.01
        %vm2585 = vcmp.le.f32.partialorder %v1049, 0.01
        %vm2586 = vcmp.le.f32.partialorder %v1050, 0.01
        %vm2587 = vcmp.le.f32.partialorder %v1051, 0.01
        %vm2588 = vcmp.le.f32.partialorder %v1052, 0.01
        %vm2589 = vcmp.le.f32.partialorder %v1053, 0.01
        %vm2590 = vcmp.le.f32.partialorder %v1054, 0.01
        %vm2591 = vcmp.le.f32.partialorder %v1055, 0.01
        %vm2592 = vcmp.le.f32.partialorder %v1056, 0.01
        %vm2593 = vcmp.le.f32.partialorder %v1057, 0.01
        %vm2594 = vcmp.le.f32.partialorder %v1058, 0.01
        %vm2595 = vcmp.le.f32.partialorder %v1059, 0.01
        %vm2596 = vcmp.le.f32.partialorder %v1060, 0.01
        %vm2597 = vcmp.le.f32.partialorder %v1061, 0.01
        %vm2598 = vcmp.le.f32.partialorder %v1062, 0.01
        %vm2599 = vcmp.le.f32.partialorder %v1063, 0.01
        %vm2600 = vcmp.le.f32.partialorder %v1064, 0.01
        %vm2601 = vcmp.le.f32.partialorder %v1065, 0.01
        %vm2602 = vcmp.le.f32.partialorder %v1066, 0.01
        %vm2603 = vcmp.le.f32.partialorder %v1067, 0.01
        %vm2604 = vcmp.le.f32.partialorder %v1068, 0.01
        %vm2605 = vcmp.le.f32.partialorder %v1069, 0.01
        %vm2606 = vcmp.le.f32.partialorder %v1070, 0.01
        %vm2607 = vcmp.le.f32.partialorder %v1071, 0.01
        %vm2608 = vcmp.le.f32.partialorder %v1072, 0.01
        %vm2609 = vcmp.le.f32.partialorder %v1073, 0.01
        %vm2610 = vcmp.le.f32.partialorder %v1074, 0.01
        %vm2611 = vcmp.le.f32.partialorder %v1075, 0.01
        %vm2612 = vcmp.le.f32.partialorder %v1076, 0.01
        %vm2613 = vcmp.le.f32.partialorder %v1077, 0.01
        %vm2614 = vcmp.le.f32.partialorder %v1078, 0.01
        %vm2615 = vcmp.le.f32.partialorder %v1079, 0.01
        %vm2616 = vcmp.le.f32.partialorder %v1080, 0.01
        %vm2617 = vcmp.le.f32.partialorder %v1081, 0.01
        %vm2618 = vcmp.le.f32.partialorder %v1082, 0.01
        %vm2619 = vcmp.le.f32.partialorder %v1083, 0.01
        %vm2620 = vcmp.le.f32.partialorder %v1084, 0.01
        %vm2621 = vcmp.le.f32.partialorder %v1085, 0.01
        %vm2622 = vcmp.le.f32.partialorder %v1086, 0.01
        %vm2623 = vcmp.le.f32.partialorder %v1087, 0.01
        %vm2624 = vcmp.le.f32.partialorder %v1088, 0.01
        %vm2625 = vcmp.le.f32.partialorder %v1089, 0.01
        %vm2626 = vcmp.le.f32.partialorder %v1090, 0.01
        %vm2627 = vcmp.le.f32.partialorder %v1091, 0.01
        %vm2628 = vcmp.le.f32.partialorder %v1092, 0.01
        %vm2629 = vcmp.le.f32.partialorder %v1093, 0.01
        %vm2630 = vcmp.le.f32.partialorder %v1094, 0.01
        %vm2631 = vcmp.le.f32.partialorder %v1095, 0.01
        %vm2632 = vcmp.le.f32.partialorder %v1096, 0.01
        %vm2633 = vcmp.le.f32.partialorder %v1097, 0.01
        %vm2634 = vcmp.le.f32.partialorder %v1098, 0.01
        %vm2635 = vcmp.le.f32.partialorder %v1099, 0.01
        %vm2636 = vcmp.le.f32.partialorder %v1100, 0.01
        %vm2637 = vcmp.le.f32.partialorder %v1101, 0.01
        %vm2638 = vcmp.le.f32.partialorder %v1102, 0.01
        %vm2639 = vcmp.le.f32.partialorder %v1103, 0.01
        %vm2640 = vcmp.le.f32.partialorder %v1104, 0.01
        %vm2641 = vcmp.le.f32.partialorder %v1105, 0.01
        %vm2642 = vcmp.le.f32.partialorder %v1106, 0.01
        %vm2643 = vcmp.le.f32.partialorder %v1107, 0.01
        %vm2644 = vcmp.le.f32.partialorder %v1108, 0.01
        %vm2645 = vcmp.le.f32.partialorder %v1109, 0.01
        %vm2646 = vcmp.le.f32.partialorder %v1110, 0.01
        %vm2647 = vcmp.le.f32.partialorder %v1111, 0.01
        %vm2648 = vcmp.le.f32.partialorder %v1112, 0.01
        %vm2649 = vcmp.le.f32.partialorder %v1113, 0.01
        %vm2650 = vcmp.le.f32.partialorder %v1114, 0.01
        %vm2651 = vcmp.le.f32.partialorder %v1115, 0.01
        %vm2652 = vcmp.le.f32.partialorder %v1116, 0.01
        %vm2653 = vcmp.le.f32.partialorder %v1117, 0.01
        %vm2654 = vcmp.le.f32.partialorder %v1118, 0.01
        %vm2655 = vcmp.le.f32.partialorder %v1119, 0.01
        %vm2656 = vcmp.le.f32.partialorder %v1120, 0.01
        %vm2657 = vcmp.le.f32.partialorder %v1121, 0.01
        %vm2658 = vcmp.le.f32.partialorder %v1122, 0.01
        %vm2659 = vcmp.le.f32.partialorder %v1123, 0.01
        %vm2660 = vcmp.le.f32.partialorder %v1124, 0.01
        %vm2661 = vcmp.le.f32.partialorder %v1125, 0.01
        %vm2662 = vcmp.le.f32.partialorder %v1126, 0.01
        %vm2663 = vcmp.le.f32.partialorder %v1127, 0.01
        %vm2664 = vcmp.le.f32.partialorder %v1128, 0.01
        %vm2665 = vcmp.le.f32.partialorder %v1129, 0.01
        %vm2666 = vcmp.le.f32.partialorder %v1130, 0.01
        %vm2667 = vcmp.le.f32.partialorder %v1131, 0.01
        %vm2668 = vcmp.le.f32.partialorder %v1132, 0.01
        %vm2669 = vcmp.le.f32.partialorder %v1133, 0.01
        %vm2670 = vcmp.le.f32.partialorder %v1134, 0.01
        %vm2671 = vcmp.le.f32.partialorder %v1135, 0.01
        %vm2672 = vcmp.le.f32.partialorder %v1136, 0.01
        %vm2673 = vcmp.le.f32.partialorder %v1137, 0.01
        %vm2674 = vcmp.le.f32.partialorder %v1138, 0.01
        %vm2675 = vcmp.le.f32.partialorder %v1139, 0.01
        %vm2676 = vcmp.le.f32.partialorder %v1140, 0.01
        %vm2677 = vcmp.le.f32.partialorder %v1141, 0.01
        %vm2678 = vcmp.le.f32.partialorder %v1142, 0.01
        %vm2679 = vcmp.le.f32.partialorder %v1143, 0.01
        %vm2680 = vcmp.le.f32.partialorder %v1144, 0.01
        %vm2681 = vcmp.le.f32.partialorder %v1145, 0.01
        %vm2682 = vcmp.le.f32.partialorder %v1146, 0.01
        %vm2683 = vcmp.le.f32.partialorder %v1147, 0.01
        %vm2684 = vcmp.le.f32.partialorder %v1148, 0.01
        %vm2685 = vcmp.le.f32.partialorder %v1149, 0.01
        %vm2686 = vcmp.le.f32.partialorder %v1150, 0.01
        %vm2687 = vcmp.le.f32.partialorder %v1151, 0.01
        %vm2688 = vcmp.le.f32.partialorder %v1152, 0.01
        %vm2689 = vcmp.le.f32.partialorder %v1153, 0.01
        %vm2690 = vcmp.le.f32.partialorder %v1154, 0.01
        %vm2691 = vcmp.le.f32.partialorder %v1155, 0.01
        %vm2692 = vcmp.le.f32.partialorder %v1156, 0.01
        %vm2693 = vcmp.le.f32.partialorder %v1157, 0.01
        %vm2694 = vcmp.le.f32.partialorder %v1158, 0.01
        %vm2695 = vcmp.le.f32.partialorder %v1159, 0.01
        %vm2696 = vcmp.le.f32.partialorder %v1160, 0.01
        %vm2697 = vcmp.le.f32.partialorder %v1161, 0.01
        %vm2698 = vcmp.le.f32.partialorder %v1162, 0.01
        %vm2699 = vcmp.le.f32.partialorder %v1163, 0.01
        %vm2700 = vcmp.le.f32.partialorder %v1164, 0.01
        %vm2701 = vcmp.le.f32.partialorder %v1165, 0.01
        %vm2702 = vcmp.le.f32.partialorder %v1166, 0.01
        %vm2703 = vcmp.le.f32.partialorder %v1167, 0.01
        %vm2704 = vcmp.le.f32.partialorder %v1168, 0.01
        %vm2705 = vcmp.le.f32.partialorder %v1169, 0.01
        %vm2706 = vcmp.le.f32.partialorder %v1170, 0.01
        %vm2707 = vcmp.le.f32.partialorder %v1171, 0.01
        %vm2708 = vcmp.le.f32.partialorder %v1172, 0.01
        %vm2709 = vcmp.le.f32.partialorder %v1173, 0.01
        %vm2710 = vcmp.le.f32.partialorder %v1174, 0.01
        %vm2711 = vcmp.le.f32.partialorder %v1175, 0.01
        %vm2712 = vcmp.le.f32.partialorder %v1176, 0.01
        %vm2713 = vcmp.le.f32.partialorder %v1177, 0.01
        %vm2714 = vcmp.le.f32.partialorder %v1178, 0.01
        %vm2715 = vcmp.le.f32.partialorder %v1179, 0.01
        %vm2716 = vcmp.le.f32.partialorder %v1180, 0.01
        %vm2717 = vcmp.le.f32.partialorder %v1181, 0.01
        %vm2718 = vcmp.le.f32.partialorder %v1182, 0.01
        %vm2719 = vcmp.le.f32.partialorder %v1183, 0.01
        %vm2720 = vcmp.le.f32.partialorder %v1184, 0.01
        %vm2721 = vcmp.le.f32.partialorder %v1185, 0.01
        %vm2722 = vcmp.le.f32.partialorder %v1186, 0.01
        %vm2723 = vcmp.le.f32.partialorder %v1187, 0.01
        %vm2724 = vcmp.le.f32.partialorder %v1188, 0.01
        %vm2725 = vcmp.le.f32.partialorder %v1189, 0.01
        %vm2726 = vcmp.le.f32.partialorder %v1190, 0.01
        %vm2727 = vcmp.le.f32.partialorder %v1191, 0.01
        %vm2728 = vcmp.le.f32.partialorder %v1192, 0.01
        %vm2729 = vcmp.le.f32.partialorder %v1193, 0.01
        %vm2730 = vcmp.le.f32.partialorder %v1194, 0.01
        %vm2731 = vcmp.le.f32.partialorder %v1195, 0.01
        %vm2732 = vcmp.le.f32.partialorder %v1196, 0.01
        %vm2733 = vcmp.le.f32.partialorder %v1197, 0.01
        %vm2734 = vcmp.le.f32.partialorder %v1198, 0.01
        %vm2735 = vcmp.le.f32.partialorder %v1199, 0.01
        %vm2736 = vcmp.le.f32.partialorder %v1200, 0.01
        %vm2737 = vcmp.le.f32.partialorder %v1201, 0.01
        %vm2738 = vcmp.le.f32.partialorder %v1202, 0.01
        %vm2739 = vcmp.le.f32.partialorder %v1203, 0.01
        %vm2740 = vcmp.le.f32.partialorder %v1204, 0.01
        %vm2741 = vcmp.le.f32.partialorder %v1205, 0.01
        %vm2742 = vcmp.le.f32.partialorder %v1206, 0.01
        %vm2743 = vcmp.le.f32.partialorder %v1207, 0.01
        %vm2744 = vcmp.le.f32.partialorder %v1208, 0.01
        %vm2745 = vcmp.le.f32.partialorder %v1209, 0.01
        %vm2746 = vcmp.le.f32.partialorder %v1210, 0.01
        %vm2747 = vcmp.le.f32.partialorder %v1211, 0.01
        %vm2748 = vcmp.le.f32.partialorder %v1212, 0.01
        %vm2749 = vcmp.le.f32.partialorder %v1213, 0.01
        %vm2750 = vcmp.le.f32.partialorder %v1214, 0.01
        %vm2751 = vcmp.le.f32.partialorder %v1215, 0.01
        %vm2752 = vcmp.le.f32.partialorder %v1216, 0.01
        %vm2753 = vcmp.le.f32.partialorder %v1217, 0.01
        %vm2754 = vcmp.le.f32.partialorder %v1218, 0.01
        %vm2755 = vcmp.le.f32.partialorder %v1219, 0.01
        %vm2756 = vcmp.le.f32.partialorder %v1220, 0.01
        %vm2757 = vcmp.le.f32.partialorder %v1221, 0.01
        %vm2758 = vcmp.le.f32.partialorder %v1222, 0.01
        %vm2759 = vcmp.le.f32.partialorder %v1223, 0.01
        %vm2760 = vcmp.le.f32.partialorder %v1224, 0.01
        %vm2761 = vcmp.le.f32.partialorder %v1225, 0.01
        %vm2762 = vcmp.le.f32.partialorder %v1226, 0.01
        %vm2763 = vcmp.le.f32.partialorder %v1227, 0.01
        %vm2764 = vcmp.le.f32.partialorder %v1228, 0.01
        %vm2765 = vcmp.le.f32.partialorder %v1229, 0.01
        %vm2766 = vcmp.le.f32.partialorder %v1230, 0.01
        %v2767 = vsel %vm2511, 0.0, %v2255
        %v2768 = vsel %vm2512, 0.0, %v2256
        %v2769 = vsel %vm2513, 0.0, %v2257
        %v2770 = vsel %vm2514, 0.0, %v2258
        %v2771 = vsel %vm2515, 0.0, %v2259
        %v2772 = vsel %vm2516, 0.0, %v2260
        %v2773 = vsel %vm2517, 0.0, %v2261
        %v2774 = vsel %vm2518, 0.0, %v2262
        %v2775 = vsel %vm2519, 0.0, %v2263
        %v2776 = vsel %vm2520, 0.0, %v2264
        %v2777 = vsel %vm2521, 0.0, %v2265
        %v2778 = vsel %vm2522, 0.0, %v2266
        %v2779 = vsel %vm2523, 0.0, %v2267
        %v2780 = vsel %vm2524, 0.0, %v2268
        %v2781 = vsel %vm2525, 0.0, %v2269
        %v2782 = vsel %vm2526, 0.0, %v2270
        %v2783 = vsel %vm2527, 0.0, %v2271
        %v2784 = vsel %vm2528, 0.0, %v2272
        %v2785 = vsel %vm2529, 0.0, %v2273
        %v2786 = vsel %vm2530, 0.0, %v2274
        %v2787 = vsel %vm2531, 0.0, %v2275
        %v2788 = vsel %vm2532, 0.0, %v2276
        %v2789 = vsel %vm2533, 0.0, %v2277
        %v2790 = vsel %vm2534, 0.0, %v2278
        %v2791 = vsel %vm2535, 0.0, %v2279
        %v2792 = vsel %vm2536, 0.0, %v2280
        %v2793 = vsel %vm2537, 0.0, %v2281
        %v2794 = vsel %vm2538, 0.0, %v2282
        %v2795 = vsel %vm2539, 0.0, %v2283
        %v2796 = vsel %vm2540, 0.0, %v2284
        %v2797 = vsel %vm2541, 0.0, %v2285
        %v2798 = vsel %vm2542, 0.0, %v2286
        %v2799 = vsel %vm2543, 0.0, %v2287
        %v2800 = vsel %vm2544, 0.0, %v2288
        %v2801 = vsel %vm2545, 0.0, %v2289
        %v2802 = vsel %vm2546, 0.0, %v2290
        %v2803 = vsel %vm2547, 0.0, %v2291
        %v2804 = vsel %vm2548, 0.0, %v2292
        %v2805 = vsel %vm2549, 0.0, %v2293
        %v2806 = vsel %vm2550, 0.0, %v2294
        %v2807 = vsel %vm2551, 0.0, %v2295
        %v2808 = vsel %vm2552, 0.0, %v2296
        %v2809 = vsel %vm2553, 0.0, %v2297
        %v2810 = vsel %vm2554, 0.0, %v2298
        %v2811 = vsel %vm2555, 0.0, %v2299
        %v2812 = vsel %vm2556, 0.0, %v2300
        %v2813 = vsel %vm2557, 0.0, %v2301
        %v2814 = vsel %vm2558, 0.0, %v2302
        %v2815 = vsel %vm2559, 0.0, %v2303
        %v2816 = vsel %vm2560, 0.0, %v2304
        %v2817 = vsel %vm2561, 0.0, %v2305
        %v2818 = vsel %vm2562, 0.0, %v2306
        %v2819 = vsel %vm2563, 0.0, %v2307
        %v2820 = vsel %vm2564, 0.0, %v2308
        %v2821 = vsel %vm2565, 0.0, %v2309
        %v2822 = vsel %vm2566, 0.0, %v2310
        %v2823 = vsel %vm2567, 0.0, %v2311
        %v2824 = vsel %vm2568, 0.0, %v2312
        %v2825 = vsel %vm2569, 0.0, %v2313
        %v2826 = vsel %vm2570, 0.0, %v2314
        %v2827 = vsel %vm2571, 0.0, %v2315
        %v2828 = vsel %vm2572, 0.0, %v2316
        %v2829 = vsel %vm2573, 0.0, %v2317
        %v2830 = vsel %vm2574, 0.0, %v2318
        %v2831 = vsel %vm2575, 0.0, %v2319
        %v2832 = vsel %vm2576, 0.0, %v2320
        %v2833 = vsel %vm2577, 0.0, %v2321
        %v2834 = vsel %vm2578, 0.0, %v2322
        %v2835 = vsel %vm2579, 0.0, %v2323
        %v2836 = vsel %vm2580, 0.0, %v2324
        %v2837 = vsel %vm2581, 0.0, %v2325
        %v2838 = vsel %vm2582, 0.0, %v2326
        %v2839 = vsel %vm2583, 0.0, %v2327
        %v2840 = vsel %vm2584, 0.0, %v2328
        %v2841 = vsel %vm2585, 0.0, %v2329
        %v2842 = vsel %vm2586, 0.0, %v2330
        %v2843 = vsel %vm2587, 0.0, %v2331
        %v2844 = vsel %vm2588, 0.0, %v2332
        %v2845 = vsel %vm2589, 0.0, %v2333
        %v2846 = vsel %vm2590, 0.0, %v2334
        %v2847 = vsel %vm2591, 0.0, %v2335
        %v2848 = vsel %vm2592, 0.0, %v2336
        %v2849 = vsel %vm2593, 0.0, %v2337
        %v2850 = vsel %vm2594, 0.0, %v2338
        %v2851 = vsel %vm2595, 0.0, %v2339
        %v2852 = vsel %vm2596, 0.0, %v2340
        %v2853 = vsel %vm2597, 0.0, %v2341
        %v2854 = vsel %vm2598, 0.0, %v2342
        %v2855 = vsel %vm2599, 0.0, %v2343
        %v2856 = vsel %vm2600, 0.0, %v2344
        %v2857 = vsel %vm2601, 0.0, %v2345
        %v2858 = vsel %vm2602, 0.0, %v2346
        %v2859 = vsel %vm2603, 0.0, %v2347
        %v2860 = vsel %vm2604, 0.0, %v2348
        %v2861 = vsel %vm2605, 0.0, %v2349
        %v2862 = vsel %vm2606, 0.0, %v2350
        %v2863 = vsel %vm2607, 0.0, %v2351
        %v2864 = vsel %vm2608, 0.0, %v2352
        %v2865 = vsel %vm2609, 0.0, %v2353
        %v2866 = vsel %vm2610, 0.0, %v2354
        %v2867 = vsel %vm2611, 0.0, %v2355
        %v2868 = vsel %vm2612, 0.0, %v2356
        %v2869 = vsel %vm2613, 0.0, %v2357
        %v2870 = vsel %vm2614, 0.0, %v2358
        %v2871 = vsel %vm2615, 0.0, %v2359
        %v2872 = vsel %vm2616, 0.0, %v2360
        %v2873 = vsel %vm2617, 0.0, %v2361
        %v2874 = vsel %vm2618, 0.0, %v2362
        %v2875 = vsel %vm2619, 0.0, %v2363
        %v2876 = vsel %vm2620, 0.0, %v2364
        %v2877 = vsel %vm2621, 0.0, %v2365
        %v2878 = vsel %vm2622, 0.0, %v2366
        %v2879 = vsel %vm2623, 0.0, %v2367
        %v2880 = vsel %vm2624, 0.0, %v2368
        %v2881 = vsel %vm2625, 0.0, %v2369
        %v2882 = vsel %vm2626, 0.0, %v2370
        %v2883 = vsel %vm2627, 0.0, %v2371
        %v2884 = vsel %vm2628, 0.0, %v2372
        %v2885 = vsel %vm2629, 0.0, %v2373
        %v2886 = vsel %vm2630, 0.0, %v2374
        %v2887 = vsel %vm2631, 0.0, %v2375
        %v2888 = vsel %vm2632, 0.0, %v2376
        %v2889 = vsel %vm2633, 0.0, %v2377
        %v2890 = vsel %vm2634, 0.0, %v2378
        %v2891 = vsel %vm2635, 0.0, %v2379
        %v2892 = vsel %vm2636, 0.0, %v2380
        %v2893 = vsel %vm2637, 0.0, %v2381
        %v2894 = vsel %vm2638, 0.0, %v2382
        %v2895 = vsel %vm2639, 0.0, %v2383
        %v2896 = vsel %vm2640, 0.0, %v2384
        %v2897 = vsel %vm2641, 0.0, %v2385
        %v2898 = vsel %vm2642, 0.0, %v2386
        %v2899 = vsel %vm2643, 0.0, %v2387
        %v2900 = vsel %vm2644, 0.0, %v2388
        %v2901 = vsel %vm2645, 0.0, %v2389
        %v2902 = vsel %vm2646, 0.0, %v2390
        %v2903 = vsel %vm2647, 0.0, %v2391
        %v2904 = vsel %vm2648, 0.0, %v2392
        %v2905 = vsel %vm2649, 0.0, %v2393
        %v2906 = vsel %vm2650, 0.0, %v2394
        %v2907 = vsel %vm2651, 0.0, %v2395
        %v2908 = vsel %vm2652, 0.0, %v2396
        %v2909 = vsel %vm2653, 0.0, %v2397
        %v2910 = vsel %vm2654, 0.0, %v2398
        %v2911 = vsel %vm2655, 0.0, %v2399
        %v2912 = vsel %vm2656, 0.0, %v2400
        %v2913 = vsel %vm2657, 0.0, %v2401
        %v2914 = vsel %vm2658, 0.0, %v2402
        %v2915 = vsel %vm2659, 0.0, %v2403
        %v2916 = vsel %vm2660, 0.0, %v2404
        %v2917 = vsel %vm2661, 0.0, %v2405
        %v2918 = vsel %vm2662, 0.0, %v2406
        %v2919 = vsel %vm2663, 0.0, %v2407
        %v2920 = vsel %vm2664, 0.0, %v2408
        %v2921 = vsel %vm2665, 0.0, %v2409
        %v2922 = vsel %vm2666, 0.0, %v2410
        %v2923 = vsel %vm2667, 0.0, %v2411
        %v2924 = vsel %vm2668, 0.0, %v2412
        %v2925 = vsel %vm2669, 0.0, %v2413
        %v2926 = vsel %vm2670, 0.0, %v2414
        %v2927 = vsel %vm2671, 0.0, %v2415
        %v2928 = vsel %vm2672, 0.0, %v2416
        %v2929 = vsel %vm2673, 0.0, %v2417
        %v2930 = vsel %vm2674, 0.0, %v2418
        %v2931 = vsel %vm2675, 0.0, %v2419
        %v2932 = vsel %vm2676, 0.0, %v2420
        %v2933 = vsel %vm2677, 0.0, %v2421
        %v2934 = vsel %vm2678, 0.0, %v2422
        %v2935 = vsel %vm2679, 0.0, %v2423
        %v2936 = vsel %vm2680, 0.0, %v2424
        %v2937 = vsel %vm2681, 0.0, %v2425
        %v2938 = vsel %vm2682, 0.0, %v2426
        %v2939 = vsel %vm2683, 0.0, %v2427
        %v2940 = vsel %vm2684, 0.0, %v2428
        %v2941 = vsel %vm2685, 0.0, %v2429
        %v2942 = vsel %vm2686, 0.0, %v2430
        %v2943 = vsel %vm2687, 0.0, %v2431
        %v2944 = vsel %vm2688, 0.0, %v2432
        %v2945 = vsel %vm2689, 0.0, %v2433
        %v2946 = vsel %vm2690, 0.0, %v2434
        %v2947 = vsel %vm2691, 0.0, %v2435
        %v2948 = vsel %vm2692, 0.0, %v2436
        %v2949 = vsel %vm2693, 0.0, %v2437
        %v2950 = vsel %vm2694, 0.0, %v2438
        %v2951 = vsel %vm2695, 0.0, %v2439
        %v2952 = vsel %vm2696, 0.0, %v2440
        %v2953 = vsel %vm2697, 0.0, %v2441
        %v2954 = vsel %vm2698, 0.0, %v2442
        %v2955 = vsel %vm2699, 0.0, %v2443
        %v2956 = vsel %vm2700, 0.0, %v2444
        %v2957 = vsel %vm2701, 0.0, %v2445
        %v2958 = vsel %vm2702, 0.0, %v2446
        %v2959 = vsel %vm2703, 0.0, %v2447
        %v2960 = vsel %vm2704, 0.0, %v2448
        %v2961 = vsel %vm2705, 0.0, %v2449
        %v2962 = vsel %vm2706, 0.0, %v2450
        %v2963 = vsel %vm2707, 0.0, %v2451
        %v2964 = vsel %vm2708, 0.0, %v2452
        %v2965 = vsel %vm2709, 0.0, %v2453
        %v2966 = vsel %vm2710, 0.0, %v2454
        %v2967 = vsel %vm2711, 0.0, %v2455
        %v2968 = vsel %vm2712, 0.0, %v2456
        %v2969 = vsel %vm2713, 0.0, %v2457
        %v2970 = vsel %vm2714, 0.0, %v2458
        %v2971 = vsel %vm2715, 0.0, %v2459
        %v2972 = vsel %vm2716, 0.0, %v2460
        %v2973 = vsel %vm2717, 0.0, %v2461
        %v2974 = vsel %vm2718, 0.0, %v2462
        %v2975 = vsel %vm2719, 0.0, %v2463
        %v2976 = vsel %vm2720, 0.0, %v2464
        %v2977 = vsel %vm2721, 0.0, %v2465
        %v2978 = vsel %vm2722, 0.0, %v2466
        %v2979 = vsel %vm2723, 0.0, %v2467
        %v2980 = vsel %vm2724, 0.0, %v2468
        %v2981 = vsel %vm2725, 0.0, %v2469
        %v2982 = vsel %vm2726, 0.0, %v2470
        %v2983 = vsel %vm2727, 0.0, %v2471
        %v2984 = vsel %vm2728, 0.0, %v2472
        %v2985 = vsel %vm2729, 0.0, %v2473
        %v2986 = vsel %vm2730, 0.0, %v2474
        %v2987 = vsel %vm2731, 0.0, %v2475
        %v2988 = vsel %vm2732, 0.0, %v2476
        %v2989 = vsel %vm2733, 0.0, %v2477
        %v2990 = vsel %vm2734, 0.0, %v2478
        %v2991 = vsel %vm2735, 0.0, %v2479
        %v2992 = vsel %vm2736, 0.0, %v2480
        %v2993 = vsel %vm2737, 0.0, %v2481
        %v2994 = vsel %vm2738, 0.0, %v2482
        %v2995 = vsel %vm2739, 0.0, %v2483
        %v2996 = vsel %vm2740, 0.0, %v2484
        %v2997 = vsel %vm2741, 0.0, %v2485
        %v2998 = vsel %vm2742, 0.0, %v2486
        %v2999 = vsel %vm2743, 0.0, %v2487
        %v3000 = vsel %vm2744, 0.0, %v2488
        %v3001 = vsel %vm2745, 0.0, %v2489
        %v3002 = vsel %vm2746, 0.0, %v2490
        %v3003 = vsel %vm2747, 0.0, %v2491
        %v3004 = vsel %vm2748, 0.0, %v2492
        %v3005 = vsel %vm2749, 0.0, %v2493
        %v3006 = vsel %vm2750, 0.0, %v2494
        %v3007 = vsel %vm2751, 0.0, %v2495
        %v3008 = vsel %vm2752, 0.0, %v2496
        %v3009 = vsel %vm2753, 0.0, %v2497
        %v3010 = vsel %vm2754, 0.0, %v2498
        %v3011 = vsel %vm2755, 0.0, %v2499
        %v3012 = vsel %vm2756, 0.0, %v2500
        %v3013 = vsel %vm2757, 0.0, %v2501
        %v3014 = vsel %vm2758, 0.0, %v2502
        %v3015 = vsel %vm2759, 0.0, %v2503
        %v3016 = vsel %vm2760, 0.0, %v2504
        %v3017 = vsel %vm2761, 0.0, %v2505
        %v3018 = vsel %vm2762, 0.0, %v2506
        %v3019 = vsel %vm2763, 0.0, %v2507
        %v3020 = vsel %vm2764, 0.0, %v2508
        %v3021 = vsel %vm2765, 0.0, %v2509
        %v3022 = vsel %vm2766, 0.0, %v2510
        %3023 = vst [vmem:[%s203] sm:$0xff] %v2767
        %3024 = vst [vmem:[%s203 + $0x8] sm:$0xff] %v2768
        %3025 = vst [vmem:[%s203 + $0x10] sm:$0xff] %v2769
        %3026 = vst [vmem:[%s203 + $0x18] sm:$0xff] %v2770
        %3027 = vst [vmem:[%s203 + $0x20] sm:$0xff] %v2771
        %3028 = vst [vmem:[%s203 + $0x28] sm:$0xff] %v2772
        %3029 = vst [vmem:[%s203 + $0x30] sm:$0xff] %v2773
        %3030 = vst [vmem:[%s203 + $0x38] sm:$0xff] %v2774
        %3031 = vst [vmem:[%s203 + $0x40] sm:$0xff] %v2775
        %3032 = vst [vmem:[%s203 + $0x48] sm:$0xff] %v2776
        %3033 = vst [vmem:[%s203 + $0x50] sm:$0xff] %v2777
        %3034 = vst [vmem:[%s203 + $0x58] sm:$0xff] %v2778
        %3035 = vst [vmem:[%s203 + $0x60] sm:$0xff] %v2779
        %3036 = vst [vmem:[%s203 + $0x68] sm:$0xff] %v2780
        %3037 = vst [vmem:[%s203 + $0x70] sm:$0xff] %v2781
        %3038 = vst [vmem:[%s203 + $0x78] sm:$0xff] %v2782
        %3039 = vst [vmem:[%s203 + $0x80] sm:$0xff] %v2783
        %3040 = vst [vmem:[%s203 + $0x88] sm:$0xff] %v2784
        %3041 = vst [vmem:[%s203 + $0x90] sm:$0xff] %v2785
        %3042 = vst [vmem:[%s203 + $0x98] sm:$0xff] %v2786
        %3043 = vst [vmem:[%s203 + $0xa0] sm:$0xff] %v2787
        %3044 = vst [vmem:[%s203 + $0xa8] sm:$0xff] %v2788
        %3045 = vst [vmem:[%s203 + $0xb0] sm:$0xff] %v2789
        %3046 = vst [vmem:[%s203 + $0xb8] sm:$0xff] %v2790
        %3047 = vst [vmem:[%s203 + $0xc0] sm:$0xff] %v2791
        %3048 = vst [vmem:[%s203 + $0xc8] sm:$0xff] %v2792
        %3049 = vst [vmem:[%s203 + $0xd0] sm:$0xff] %v2793
        %3050 = vst [vmem:[%s203 + $0xd8] sm:$0xff] %v2794
        %3051 = vst [vmem:[%s203 + $0xe0] sm:$0xff] %v2795
        %3052 = vst [vmem:[%s203 + $0xe8] sm:$0xff] %v2796
        %3053 = vst [vmem:[%s203 + $0xf0] sm:$0xff] %v2797
        %3054 = vst [vmem:[%s203 + $0xf8] sm:$0xff] %v2798
        %3055 = vst [vmem:[%s203 + $0x100] sm:$0xff] %v2799
        %3056 = vst [vmem:[%s203 + $0x108] sm:$0xff] %v2800
        %3057 = vst [vmem:[%s203 + $0x110] sm:$0xff] %v2801
        %3058 = vst [vmem:[%s203 + $0x118] sm:$0xff] %v2802
        %3059 = vst [vmem:[%s203 + $0x120] sm:$0xff] %v2803
        %3060 = vst [vmem:[%s203 + $0x128] sm:$0xff] %v2804
        %3061 = vst [vmem:[%s203 + $0x130] sm:$0xff] %v2805
        %3062 = vst [vmem:[%s203 + $0x138] sm:$0xff] %v2806
        %3063 = vst [vmem:[%s203 + $0x140] sm:$0xff] %v2807
        %3064 = vst [vmem:[%s203 + $0x148] sm:$0xff] %v2808
        %3065 = vst [vmem:[%s203 + $0x150] sm:$0xff] %v2809
        %3066 = vst [vmem:[%s203 + $0x158] sm:$0xff] %v2810
        %3067 = vst [vmem:[%s203 + $0x160] sm:$0xff] %v2811
        %3068 = vst [vmem:[%s203 + $0x168] sm:$0xff] %v2812
        %3069 = vst [vmem:[%s203 + $0x170] sm:$0xff] %v2813
        %3070 = vst [vmem:[%s203 + $0x178] sm:$0xff] %v2814
        %3071 = vst [vmem:[%s203 + $0x180] sm:$0xff] %v2815
        %3072 = vst [vmem:[%s203 + $0x188] sm:$0xff] %v2816
        %3073 = vst [vmem:[%s203 + $0x190] sm:$0xff] %v2817
        %3074 = vst [vmem:[%s203 + $0x198] sm:$0xff] %v2818
        %3075 = vst [vmem:[%s203 + $0x1a0] sm:$0xff] %v2819
        %3076 = vst [vmem:[%s203 + $0x1a8] sm:$0xff] %v2820
        %3077 = vst [vmem:[%s203 + $0x1b0] sm:$0xff] %v2821
        %3078 = vst [vmem:[%s203 + $0x1b8] sm:$0xff] %v2822
        %3079 = vst [vmem:[%s203 + $0x1c0] sm:$0xff] %v2823
        %3080 = vst [vmem:[%s203 + $0x1c8] sm:$0xff] %v2824
        %3081 = vst [vmem:[%s203 + $0x1d0] sm:$0xff] %v2825
        %3082 = vst [vmem:[%s203 + $0x1d8] sm:$0xff] %v2826
        %3083 = vst [vmem:[%s203 + $0x1e0] sm:$0xff] %v2827
        %3084 = vst [vmem:[%s203 + $0x1e8] sm:$0xff] %v2828
        %3085 = vst [vmem:[%s203 + $0x1f0] sm:$0xff] %v2829
        %3086 = vst [vmem:[%s203 + $0x1f8] sm:$0xff] %v2830
        %3087 = vst [vmem:[%s203 + $0x200] sm:$0xff] %v2831
        %3088 = vst [vmem:[%s203 + $0x208] sm:$0xff] %v2832
        %3089 = vst [vmem:[%s203 + $0x210] sm:$0xff] %v2833
        %3090 = vst [vmem:[%s203 + $0x218] sm:$0xff] %v2834
        %3091 = vst [vmem:[%s203 + $0x220] sm:$0xff] %v2835
        %3092 = vst [vmem:[%s203 + $0x228] sm:$0xff] %v2836
        %3093 = vst [vmem:[%s203 + $0x230] sm:$0xff] %v2837
        %3094 = vst [vmem:[%s203 + $0x238] sm:$0xff] %v2838
        %3095 = vst [vmem:[%s203 + $0x240] sm:$0xff] %v2839
        %3096 = vst [vmem:[%s203 + $0x248] sm:$0xff] %v2840
        %3097 = vst [vmem:[%s203 + $0x250] sm:$0xff] %v2841
        %3098 = vst [vmem:[%s203 + $0x258] sm:$0xff] %v2842
        %3099 = vst [vmem:[%s203 + $0x260] sm:$0xff] %v2843
        %3100 = vst [vmem:[%s203 + $0x268] sm:$0xff] %v2844
        %3101 = vst [vmem:[%s203 + $0x270] sm:$0xff] %v2845
        %3102 = vst [vmem:[%s203 + $0x278] sm:$0xff] %v2846
        %3103 = vst [vmem:[%s203 + $0x280] sm:$0xff] %v2847
        %3104 = vst [vmem:[%s203 + $0x288] sm:$0xff] %v2848
        %3105 = vst [vmem:[%s203 + $0x290] sm:$0xff] %v2849
        %3106 = vst [vmem:[%s203 + $0x298] sm:$0xff] %v2850
        %3107 = vst [vmem:[%s203 + $0x2a0] sm:$0xff] %v2851
        %3108 = vst [vmem:[%s203 + $0x2a8] sm:$0xff] %v2852
        %3109 = vst [vmem:[%s203 + $0x2b0] sm:$0xff] %v2853
        %3110 = vst [vmem:[%s203 + $0x2b8] sm:$0xff] %v2854
        %3111 = vst [vmem:[%s203 + $0x2c0] sm:$0xff] %v2855
        %3112 = vst [vmem:[%s203 + $0x2c8] sm:$0xff] %v2856
        %3113 = vst [vmem:[%s203 + $0x2d0] sm:$0xff] %v2857
        %3114 = vst [vmem:[%s203 + $0x2d8] sm:$0xff] %v2858
        %3115 = vst [vmem:[%s203 + $0x2e0] sm:$0xff] %v2859
        %3116 = vst [vmem:[%s203 + $0x2e8] sm:$0xff] %v2860
        %3117 = vst [vmem:[%s203 + $0x2f0] sm:$0xff] %v2861
        %3118 = vst [vmem:[%s203 + $0x2f8] sm:$0xff] %v2862
        %3119 = vst [vmem:[%s203 + $0x300] sm:$0xff] %v2863
        %3120 = vst [vmem:[%s203 + $0x308] sm:$0xff] %v2864
        %3121 = vst [vmem:[%s203 + $0x310] sm:$0xff] %v2865
        %3122 = vst [vmem:[%s203 + $0x318] sm:$0xff] %v2866
        %3123 = vst [vmem:[%s203 + $0x320] sm:$0xff] %v2867
        %3124 = vst [vmem:[%s203 + $0x328] sm:$0xff] %v2868
        %3125 = vst [vmem:[%s203 + $0x330] sm:$0xff] %v2869
        %3126 = vst [vmem:[%s203 + $0x338] sm:$0xff] %v2870
        %3127 = vst [vmem:[%s203 + $0x340] sm:$0xff] %v2871
        %3128 = vst [vmem:[%s203 + $0x348] sm:$0xff] %v2872
        %3129 = vst [vmem:[%s203 + $0x350] sm:$0xff] %v2873
        %3130 = vst [vmem:[%s203 + $0x358] sm:$0xff] %v2874
        %3131 = vst [vmem:[%s203 + $0x360] sm:$0xff] %v2875
        %3132 = vst [vmem:[%s203 + $0x368] sm:$0xff] %v2876
        %3133 = vst [vmem:[%s203 + $0x370] sm:$0xff] %v2877
        %3134 = vst [vmem:[%s203 + $0x378] sm:$0xff] %v2878
        %3135 = vst [vmem:[%s203 + $0x380] sm:$0xff] %v2879
        %3136 = vst [vmem:[%s203 + $0x388] sm:$0xff] %v2880
        %3137 = vst [vmem:[%s203 + $0x390] sm:$0xff] %v2881
        %3138 = vst [vmem:[%s203 + $0x398] sm:$0xff] %v2882
        %3139 = vst [vmem:[%s203 + $0x3a0] sm:$0xff] %v2883
        %3140 = vst [vmem:[%s203 + $0x3a8] sm:$0xff] %v2884
        %3141 = vst [vmem:[%s203 + $0x3b0] sm:$0xff] %v2885
        %3142 = vst [vmem:[%s203 + $0x3b8] sm:$0xff] %v2886
        %3143 = vst [vmem:[%s203 + $0x3c0] sm:$0xff] %v2887
        %3144 = vst [vmem:[%s203 + $0x3c8] sm:$0xff] %v2888
        %3145 = vst [vmem:[%s203 + $0x3d0] sm:$0xff] %v2889
        %3146 = vst [vmem:[%s203 + $0x3d8] sm:$0xff] %v2890
        %3147 = vst [vmem:[%s203 + $0x3e0] sm:$0xff] %v2891
        %3148 = vst [vmem:[%s203 + $0x3e8] sm:$0xff] %v2892
        %3149 = vst [vmem:[%s203 + $0x3f0] sm:$0xff] %v2893
        %3150 = vst [vmem:[%s203 + $0x3f8] sm:$0xff] %v2894
        %3151 = vst [vmem:[%s203 + $0x400] sm:$0xff] %v2895
        %3152 = vst [vmem:[%s203 + $0x408] sm:$0xff] %v2896
        %3153 = vst [vmem:[%s203 + $0x410] sm:$0xff] %v2897
        %3154 = vst [vmem:[%s203 + $0x418] sm:$0xff] %v2898
        %3155 = vst [vmem:[%s203 + $0x420] sm:$0xff] %v2899
        %3156 = vst [vmem:[%s203 + $0x428] sm:$0xff] %v2900
        %3157 = vst [vmem:[%s203 + $0x430] sm:$0xff] %v2901
        %3158 = vst [vmem:[%s203 + $0x438] sm:$0xff] %v2902
        %3159 = vst [vmem:[%s203 + $0x440] sm:$0xff] %v2903
        %3160 = vst [vmem:[%s203 + $0x448] sm:$0xff] %v2904
        %3161 = vst [vmem:[%s203 + $0x450] sm:$0xff] %v2905
        %3162 = vst [vmem:[%s203 + $0x458] sm:$0xff] %v2906
        %3163 = vst [vmem:[%s203 + $0x460] sm:$0xff] %v2907
        %3164 = vst [vmem:[%s203 + $0x468] sm:$0xff] %v2908
        %3165 = vst [vmem:[%s203 + $0x470] sm:$0xff] %v2909
        %3166 = vst [vmem:[%s203 + $0x478] sm:$0xff] %v2910
        %3167 = vst [vmem:[%s203 + $0x480] sm:$0xff] %v2911
        %3168 = vst [vmem:[%s203 + $0x488] sm:$0xff] %v2912
        %3169 = vst [vmem:[%s203 + $0x490] sm:$0xff] %v2913
        %3170 = vst [vmem:[%s203 + $0x498] sm:$0xff] %v2914
        %3171 = vst [vmem:[%s203 + $0x4a0] sm:$0xff] %v2915
        %3172 = vst [vmem:[%s203 + $0x4a8] sm:$0xff] %v2916
        %3173 = vst [vmem:[%s203 + $0x4b0] sm:$0xff] %v2917
        %3174 = vst [vmem:[%s203 + $0x4b8] sm:$0xff] %v2918
        %3175 = vst [vmem:[%s203 + $0x4c0] sm:$0xff] %v2919
        %3176 = vst [vmem:[%s203 + $0x4c8] sm:$0xff] %v2920
        %3177 = vst [vmem:[%s203 + $0x4d0] sm:$0xff] %v2921
        %3178 = vst [vmem:[%s203 + $0x4d8] sm:$0xff] %v2922
        %3179 = vst [vmem:[%s203 + $0x4e0] sm:$0xff] %v2923
        %3180 = vst [vmem:[%s203 + $0x4e8] sm:$0xff] %v2924
        %3181 = vst [vmem:[%s203 + $0x4f0] sm:$0xff] %v2925
        %3182 = vst [vmem:[%s203 + $0x4f8] sm:$0xff] %v2926
        %3183 = vst [vmem:[%s203 + $0x500] sm:$0xff] %v2927
        %3184 = vst [vmem:[%s203 + $0x508] sm:$0xff] %v2928
        %3185 = vst [vmem:[%s203 + $0x510] sm:$0xff] %v2929
        %3186 = vst [vmem:[%s203 + $0x518] sm:$0xff] %v2930
        %3187 = vst [vmem:[%s203 + $0x520] sm:$0xff] %v2931
        %3188 = vst [vmem:[%s203 + $0x528] sm:$0xff] %v2932
        %3189 = vst [vmem:[%s203 + $0x530] sm:$0xff] %v2933
        %3190 = vst [vmem:[%s203 + $0x538] sm:$0xff] %v2934
        %3191 = vst [vmem:[%s203 + $0x540] sm:$0xff] %v2935
        %3192 = vst [vmem:[%s203 + $0x548] sm:$0xff] %v2936
        %3193 = vst [vmem:[%s203 + $0x550] sm:$0xff] %v2937
        %3194 = vst [vmem:[%s203 + $0x558] sm:$0xff] %v2938
        %3195 = vst [vmem:[%s203 + $0x560] sm:$0xff] %v2939
        %3196 = vst [vmem:[%s203 + $0x568] sm:$0xff] %v2940
        %3197 = vst [vmem:[%s203 + $0x570] sm:$0xff] %v2941
        %3198 = vst [vmem:[%s203 + $0x578] sm:$0xff] %v2942
        %3199 = vst [vmem:[%s203 + $0x580] sm:$0xff] %v2943
        %3200 = vst [vmem:[%s203 + $0x588] sm:$0xff] %v2944
        %3201 = vst [vmem:[%s203 + $0x590] sm:$0xff] %v2945
        %3202 = vst [vmem:[%s203 + $0x598] sm:$0xff] %v2946
        %3203 = vst [vmem:[%s203 + $0x5a0] sm:$0xff] %v2947
        %3204 = vst [vmem:[%s203 + $0x5a8] sm:$0xff] %v2948
        %3205 = vst [vmem:[%s203 + $0x5b0] sm:$0xff] %v2949
        %3206 = vst [vmem:[%s203 + $0x5b8] sm:$0xff] %v2950
        %3207 = vst [vmem:[%s203 + $0x5c0] sm:$0xff] %v2951
        %3208 = vst [vmem:[%s203 + $0x5c8] sm:$0xff] %v2952
        %3209 = vst [vmem:[%s203 + $0x5d0] sm:$0xff] %v2953
        %3210 = vst [vmem:[%s203 + $0x5d8] sm:$0xff] %v2954
        %3211 = vst [vmem:[%s203 + $0x5e0] sm:$0xff] %v2955
        %3212 = vst [vmem:[%s203 + $0x5e8] sm:$0xff] %v2956
        %3213 = vst [vmem:[%s203 + $0x5f0] sm:$0xff] %v2957
        %3214 = vst [vmem:[%s203 + $0x5f8] sm:$0xff] %v2958
        %3215 = vst [vmem:[%s203 + $0x600] sm:$0xff] %v2959
        %3216 = vst [vmem:[%s203 + $0x608] sm:$0xff] %v2960
        %3217 = vst [vmem:[%s203 + $0x610] sm:$0xff] %v2961
        %3218 = vst [vmem:[%s203 + $0x618] sm:$0xff] %v2962
        %3219 = vst [vmem:[%s203 + $0x620] sm:$0xff] %v2963
        %3220 = vst [vmem:[%s203 + $0x628] sm:$0xff] %v2964
        %3221 = vst [vmem:[%s203 + $0x630] sm:$0xff] %v2965
        %3222 = vst [vmem:[%s203 + $0x638] sm:$0xff] %v2966
        %3223 = vst [vmem:[%s203 + $0x640] sm:$0xff] %v2967
        %3224 = vst [vmem:[%s203 + $0x648] sm:$0xff] %v2968
        %3225 = vst [vmem:[%s203 + $0x650] sm:$0xff] %v2969
        %3226 = vst [vmem:[%s203 + $0x658] sm:$0xff] %v2970
        %3227 = vst [vmem:[%s203 + $0x660] sm:$0xff] %v2971
        %3228 = vst [vmem:[%s203 + $0x668] sm:$0xff] %v2972
        %3229 = vst [vmem:[%s203 + $0x670] sm:$0xff] %v2973
        %3230 = vst [vmem:[%s203 + $0x678] sm:$0xff] %v2974
        %3231 = vst [vmem:[%s203 + $0x680] sm:$0xff] %v2975
        %3232 = vst [vmem:[%s203 + $0x688] sm:$0xff] %v2976
        %3233 = vst [vmem:[%s203 + $0x690] sm:$0xff] %v2977
        %3234 = vst [vmem:[%s203 + $0x698] sm:$0xff] %v2978
        %3235 = vst [vmem:[%s203 + $0x6a0] sm:$0xff] %v2979
        %3236 = vst [vmem:[%s203 + $0x6a8] sm:$0xff] %v2980
        %3237 = vst [vmem:[%s203 + $0x6b0] sm:$0xff] %v2981
        %3238 = vst [vmem:[%s203 + $0x6b8] sm:$0xff] %v2982
        %3239 = vst [vmem:[%s203 + $0x6c0] sm:$0xff] %v2983
        %3240 = vst [vmem:[%s203 + $0x6c8] sm:$0xff] %v2984
        %3241 = vst [vmem:[%s203 + $0x6d0] sm:$0xff] %v2985
        %3242 = vst [vmem:[%s203 + $0x6d8] sm:$0xff] %v2986
        %3243 = vst [vmem:[%s203 + $0x6e0] sm:$0xff] %v2987
        %3244 = vst [vmem:[%s203 + $0x6e8] sm:$0xff] %v2988
        %3245 = vst [vmem:[%s203 + $0x6f0] sm:$0xff] %v2989
        %3246 = vst [vmem:[%s203 + $0x6f8] sm:$0xff] %v2990
        %3247 = vst [vmem:[%s203 + $0x700] sm:$0xff] %v2991
        %3248 = vst [vmem:[%s203 + $0x708] sm:$0xff] %v2992
        %3249 = vst [vmem:[%s203 + $0x710] sm:$0xff] %v2993
        %3250 = vst [vmem:[%s203 + $0x718] sm:$0xff] %v2994
        %3251 = vst [vmem:[%s203 + $0x720] sm:$0xff] %v2995
        %3252 = vst [vmem:[%s203 + $0x728] sm:$0xff] %v2996
        %3253 = vst [vmem:[%s203 + $0x730] sm:$0xff] %v2997
        %3254 = vst [vmem:[%s203 + $0x738] sm:$0xff] %v2998
        %3255 = vst [vmem:[%s203 + $0x740] sm:$0xff] %v2999
        %3256 = vst [vmem:[%s203 + $0x748] sm:$0xff] %v3000
        %3257 = vst [vmem:[%s203 + $0x750] sm:$0xff] %v3001
        %3258 = vst [vmem:[%s203 + $0x758] sm:$0xff] %v3002
        %3259 = vst [vmem:[%s203 + $0x760] sm:$0xff] %v3003
        %3260 = vst [vmem:[%s203 + $0x768] sm:$0xff] %v3004
        %3261 = vst [vmem:[%s203 + $0x770] sm:$0xff] %v3005
        %3262 = vst [vmem:[%s203 + $0x778] sm:$0xff] %v3006
        %3263 = vst [vmem:[%s203 + $0x780] sm:$0xff] %v3007
        %3264 = vst [vmem:[%s203 + $0x788] sm:$0xff] %v3008
        %3265 = vst [vmem:[%s203 + $0x790] sm:$0xff] %v3009
        %3266 = vst [vmem:[%s203 + $0x798] sm:$0xff] %v3010
        %3267 = vst [vmem:[%s203 + $0x7a0] sm:$0xff] %v3011
        %3268 = vst [vmem:[%s203 + $0x7a8] sm:$0xff] %v3012
        %3269 = vst [vmem:[%s203 + $0x7b0] sm:$0xff] %v3013
        %3270 = vst [vmem:[%s203 + $0x7b8] sm:$0xff] %v3014
        %3271 = vst [vmem:[%s203 + $0x7c0] sm:$0xff] %v3015
        %3272 = vst [vmem:[%s203 + $0x7c8] sm:$0xff] %v3016
        %3273 = vst [vmem:[%s203 + $0x7d0] sm:$0xff] %v3017
        %3274 = vst [vmem:[%s203 + $0x7d8] sm:$0xff] %v3018
        %3275 = vst [vmem:[%s203 + $0x7e0] sm:$0xff] %v3019
        %3276 = vst [vmem:[%s203 + $0x7e8] sm:$0xff] %v3020
        %3277 = vst [vmem:[%s203 + $0x7f0] sm:$0xff] %v3021
        %3278 = vst [vmem:[%s203 + $0x7f8] sm:$0xff] %v3022
        %s3279 = sand.u32 %s82, 1
        %s3280 = scalar_lea.sflag [#allocation4], %s3279
        %s3281 = sand.u32 %s82, 1
        %s3282 = smul.addr %s3281, 2048
        %s3283 = scalar_lea.vmem [#allocation7], %s3282
        // Predicated region
        $region37: #{tpu_custom_call.1} parent=27 // pred_check
          %p3284 = pneg %p92
        $region38: #{tpu_custom_call.1} parent=27 // pred_check_branch
          %3286 = sbr.rel (%p3284) target = $region40
        $region39: #{tpu_custom_call.1} parent=27 // pred_region
          %s3287 = smul.u32 32, %s22
          %s3289 = ssub.s32 32768, 32768
          %3290 = vsyncadd %s3280, %s3289
          %s3291 = smul.addr %s3287, 8
          %s3292 = smul.addr %s3291, 128
          %s3293 = scalar_lea.hbm %s2, %s3292
          %s3294 = sshll.u32 %s3283, 4
          %s3295 = int_to_ptr.vmem [resolvable:$true] %s3294
          %3300 = dma.vmem_to_hbm [thread:$0]  %s3295, 32768, %s3293, %s3280, 1024, 1024, 64
        $region40: #{tpu_custom_call.1} parent=27 // pred_fallthru
          _
      $region28: #{tpu_custom_call.1} parent=5 // pred_fallthru
        _
      %p3301 = scmp.le.s32.totalorder 2, %s17
      // Predicated region
      $region41: #{tpu_custom_call.1} parent=5 // pred_check
        %p3302 = pneg %p3301
      $region42: #{tpu_custom_call.1} parent=5 // pred_check_branch
        %3304 = sbr.rel (%p3302) target = $region44
      $region43: #{tpu_custom_call.1} parent=5 // pred_region
        %s3305 = ssub.s32 %s17, 2
        // Predicated region
        $region45: #{tpu_custom_call.1} parent=43 // pred_check
          %p3306 = pneg %p98
        $region46: #{tpu_custom_call.1} parent=43 // pred_check_branch
          %3308 = sbr.rel (%p3306) target = $region48
        $region47: #{tpu_custom_call.1} parent=43 // pred_region
          %s3309 = sand.u32 %s83, 1
          %s3310 = scalar_lea.sflag [#allocation4], %s3309
          %s3311 = sand.u32 %s83, 1
          %s3312 = smul.addr %s3311, 2048
          %s3313 = scalar_lea.vmem [#allocation7], %s3312
          %3314 = dma.done %s3310, 32768
        $region48: #{tpu_custom_call.1} parent=43 // pred_fallthru
          _
      $region44: #{tpu_custom_call.1} parent=5 // pred_fallthru
        _
    $region6: #{tpu_custom_call.1} parent=1 // loop_footer
      %s21 = sadd.s32 1, %s17
    $region7: #{tpu_custom_call.1} parent=1 // loop_footer_branch
      %16 = sbr.rel target = $region3
    $region8: #{tpu_custom_call.1} parent=1 // loop_exit
      _
    %3315 = vsyncpa [#allocation3], 1
    %s3316 = scalar_lea.sflag [#allocation3], 1
    %3317 = vsyncpa %s3316, 1
    %3318 = vsyncpa [#allocation6], 1
    %s3319 = scalar_lea.sflag [#allocation6], 1
    %3320 = vsyncpa %s3319, 1
    %3321 = vsyncpa [#allocation4], 1
    %s3322 = scalar_lea.sflag [#allocation4], 1
    %3323 = vsyncpa %s3322, 1

</llo_original>
